<compile_context>
chip_gen: v5e
topology: v5e:2x2
jax: 0.10.0
libtpu: 0.0.40
codegen_flags: <defaults>
</compile_context>

<pallas_src>
import functools

import jax
import jax.numpy as jnp
from jax.experimental import pallas as pl
from jax.experimental.pallas import tpu as pltpu


def clam_mb_kernel(h_ref, w1_ref, b1_ref, wab_ref, bab_ref, wct_ref, bct_ref,
                   a_raw_ref, m_ref, l_ref, macc_ref,
                   *, n_total, tile_n, tiles_per_core, d):
    p = pl.program_id(0)                       # core-split index ("parallel")
    i = pl.program_id(1)                       # instance-tile index ("arbitrary")
    tile_idx = p * tiles_per_core + i          # global (unclamped) tile index

    # (Re-)initialize this core's resident partial-output blocks.
    @pl.when(i == 0)
    def _init():
        m_ref[0] = jnp.full(m_ref.shape[1:], -jnp.inf, jnp.float32)
        l_ref[0] = jnp.zeros(l_ref.shape[1:], jnp.float32)
        macc_ref[0] = jnp.zeros(macc_ref.shape[1:], jnp.float32)

    # Row validity for this tile (handles the ragged tail and fully-padded tiles).
    row = jax.lax.broadcasted_iota(jnp.int32, (tile_n, 1), 0)
    row_valid = (tile_idx * tile_n + row) < n_total            # [TN, 1]

    # --- fc: Linear(L_in, H) + ReLU (bf16 MXU operands, f32 accumulate) ---------
    h_bf = h_ref[...].astype(jnp.bfloat16)                     # cast in-kernel
    h1 = jnp.dot(h_bf, w1_ref[...],
                 preferred_element_type=jnp.float32) + b1_ref[...]
    # Zero padded rows so stale / garbage VMEM cannot poison later matmuls.
    h1 = jnp.where(row_valid, jnp.maximum(h1, 0.0), 0.0)       # [TN, H] f32
    h1_bf = h1.astype(jnp.bfloat16)

    # --- Attn_Net_Gated, fused: one [TN, 2D] matmul, halves -> tanh / sigmoid ---
    g = jnp.dot(h1_bf, wab_ref[...],
                preferred_element_type=jnp.float32) + bab_ref[...]   # [TN, 2D]
    a = jnp.tanh(g[:, :d])
    b = jax.nn.sigmoid(g[:, d:])
    gate_bf = (a * b).astype(jnp.bfloat16)                     # [TN, D]

    # A^T directly in [C, TN]: contract D of wct [C, D] with D of (a*b) [TN, D];
    # the A_raw store stays lane-dense and no transpose is needed.
    A_t = jax.lax.dot_general(
        wct_ref[...], gate_bf,
        dimension_numbers=(((1,), (1,)), ((), ())),
        preferred_element_type=jnp.float32) + bct_ref[...]     # [C, TN] f32
    a_raw_ref[...] = A_t

    # --- online softmax over instances (dim=1 of A^T) ---------------------------
    col = tile_idx * tile_n + jax.lax.broadcasted_iota(jnp.int32, A_t.shape, 1)
    valid = col < n_total

    m_prev = m_ref[0]                                          # [C, 1]
    tile_max = jnp.max(jnp.where(valid, A_t, -jnp.inf), axis=1, keepdims=True)
    m_new = jnp.maximum(m_prev, tile_max)
    # Guard: a tile with no valid column keeps m == -inf; avoid exp(-inf+inf)=nan.
    alpha = jnp.where(m_new > -jnp.inf, jnp.exp(m_prev - m_new), 0.0)
    pexp = jnp.where(valid, jnp.exp(A_t - m_new), 0.0)         # [C, TN] f32

    l_ref[0] = alpha * l_ref[0] + jnp.sum(pexp, axis=1, keepdims=True)
    # Keep the tiny [C, TN] @ [TN, H] accumulation in f32 for accuracy.
    macc_ref[0] = alpha * macc_ref[0] + jnp.dot(
        pexp, h1, preferred_element_type=jnp.float32)
    m_ref[0] = m_new


def _vmem_limit_bytes(tile_n, lin, hid, d, c, h_itemsize):
    bf, f32 = 2, 4
    weights = (lin * hid + hid * 2 * d + c * d) * bf + (hid + 2 * d + c) * f32
    h_stream = 2 * tile_n * lin * h_itemsize          # double-buffered h tile
    a_out = 2 * c * tile_n * f32                      # double-buffered A^T tile
    partials = 2 * (2 * c + c * hid) * f32            # resident m/l/macc blocks
    temps = tile_n * (hid * (f32 + bf) + 2 * d * (f32 + bf) + d * (f32 + bf)) \
            + 3 * c * tile_n * f32                    # h1/g/gate/A_t/pexp temporaries
    est = int(1.4 * (weights + h_stream + a_out + partials + temps)) + (1 << 20)
    try:
        cap = pltpu.get_tpu_info().vmem_capacity_bytes
    except Exception:
        cap = 64 * 1024 * 1024                        # conservative (v7x per-TC)
    return int(min(max(est, 32 * 1024 * 1024), int(0.6 * cap)))


def clam_mb_forward(h, params, *, tile_n=512, core_splits=2):
    """Returns (logits, Y_prob, Y_hat, A_raw, results_dict) like CLAM_MB.forward.

    tile_n must be a multiple of 128; 512 is a good default (use 1024 on
    v5e/v6e with 128 MiB VMEM).  core_splits=2 enables both TensorCores on v7x.
    """
    N, lin = h.shape
    hid = params["w1"].shape[1]
    d = params["wa"].shape[1]
    c = params["wc"].shape[1]

    n_tiles = max(pl.cdiv(N, tile_n), 1)
    tiles_per_core = pl.cdiv(n_tiles, core_splits)
    padded_cols = core_splits * tiles_per_core * tile_n
    last_tile = n_tiles - 1

    # Weight prep (done once per call; trivially small vs. the h stream):
    #   wa|wb fused into one [H, 2D] gating weight; attention_c pre-transposed.
    w1 = params["w1"].astype(jnp.bfloat16)
    b1 = params["b1"].astype(jnp.float32)
    wab = jnp.concatenate([params["wa"], params["wb"]], axis=1).astype(jnp.bfloat16)
    bab = jnp.concatenate([params["ba"], params["bb"]], axis=1).astype(jnp.float32)
    wct = params["wc"].T.astype(jnp.bfloat16)                 # [C, D]
    bct = params["bc"].reshape(c, 1).astype(jnp.float32)      # [C, 1]

    def h_map(p, i):
        # Clamp so a fully-padded tile just re-reads the last real block
        # (its contribution is masked out in-kernel) — keeps every DMA in bounds.
        return (jnp.minimum(p * tiles_per_core + i, last_tile), 0)

    resident = lambda p, i: (0, 0)   # weights: fetched once, stay VMEM-resident

    grid_spec = pltpu.PrefetchScalarGridSpec(
        num_scalar_prefetch=0,
        grid=(core_splits, tiles_per_core),
        in_specs=[
            pl.BlockSpec((tile_n, lin), h_map),               # h streams, native dtype
            pl.BlockSpec((lin, hid), resident),
            pl.BlockSpec((1, hid), resident),
            pl.BlockSpec((hid, 2 * d), resident),
            pl.BlockSpec((1, 2 * d), resident),
            pl.BlockSpec((c, d), resident),
            pl.BlockSpec((c, 1), resident),
        ],
        out_specs=[
            pl.BlockSpec((c, tile_n), lambda p, i: (0, p * tiles_per_core + i)),
            pl.BlockSpec((1, c, 1), lambda p, i: (p, 0, 0)),      # running max
            pl.BlockSpec((1, c, 1), lambda p, i: (p, 0, 0)),      # running sum
            pl.BlockSpec((1, c, hid), lambda p, i: (p, 0, 0)),    # running accum
        ],
    )

    a_raw_pad, m_part, l_part, macc_part = pl.pallas_call(
        functools.partial(clam_mb_kernel, n_total=N, tile_n=tile_n,
                          tiles_per_core=tiles_per_core, d=d),
        out_shape=(
            jax.ShapeDtypeStruct((c, padded_cols), jnp.float32),
            jax.ShapeDtypeStruct((core_splits, c, 1), jnp.float32),
            jax.ShapeDtypeStruct((core_splits, c, 1), jnp.float32),
            jax.ShapeDtypeStruct((core_splits, c, hid), jnp.float32),
        ),
        grid_spec=grid_spec,
        compiler_params=pltpu.CompilerParams(
            dimension_semantics=("parallel", "arbitrary"),
            vmem_limit_bytes=_vmem_limit_bytes(
                tile_n, lin, hid, d, c, jnp.dtype(h.dtype).itemsize)),
    )(h, w1, b1, wab, bab, wct, bct)

    a_raw = a_raw_pad[:, :N]

    # Merge the per-core online-softmax partials (cheap, [C]-sized math).
    m_g = jnp.max(m_part, axis=0)                     # [C, 1]
    w = jnp.exp(m_part - m_g[None])                   # [S, C, 1]; empty core -> 0
    l = jnp.sum(w * l_part, axis=0)                   # [C, 1]
    macc = jnp.sum(w * macc_part, axis=0)             # [C, H]
    M = macc / l                                      # softmax(A^T) @ h1

    # Tiny epilogue: per-class bag classifiers + class softmax.
    logits = jnp.sum(M * params["wcls"], axis=1)[None, :] + params["bcls"]   # [1, C]
    y_prob = jax.nn.softmax(logits, axis=1)
    # TODO(synk): jnp.argmax tie-breaking may differ from torch.topk on exact ties.
    y_hat = jnp.argmax(logits, axis=1, keepdims=True)
    return logits, y_prob, y_hat, a_raw, {}


def init_params(key, lin, hidden, d, n_classes):
    ks = jax.random.split(key, 10)
    s = 0.05
    return {
        "w1":   s * jax.random.normal(ks[0], (lin, hidden), jnp.float32),
        "b1":   s * jax.random.normal(ks[1], (1, hidden), jnp.float32),
        "wa":   s * jax.random.normal(ks[2], (hidden, d), jnp.float32),
        "ba":   s * jax.random.normal(ks[3], (1, d), jnp.float32),
        "wb":   s * jax.random.normal(ks[4], (hidden, d), jnp.float32),
        "bb":   s * jax.random.normal(ks[5], (1, d), jnp.float32),
        "wc":   s * jax.random.normal(ks[6], (d, n_classes), jnp.float32),
        "bc":   s * jax.random.normal(ks[7], (1, n_classes), jnp.float32),
        "wcls": s * jax.random.normal(ks[8], (n_classes, hidden), jnp.float32),
        "bcls": s * jax.random.normal(ks[9], (1, n_classes), jnp.float32),
    }


def clam_mb_ref(h, p):
    """Pure-JAX f32 reference of the same forward math."""
    h1 = jnp.maximum(h @ p["w1"] + p["b1"], 0.0)
    a = jnp.tanh(h1 @ p["wa"] + p["ba"])
    b = jax.nn.sigmoid(h1 @ p["wb"] + p["bb"])
    A_t = ((a * b) @ p["wc"] + p["bc"]).T            # [C, N]
    A_soft = jax.nn.softmax(A_t, axis=1)
    M = A_soft @ h1
    logits = jnp.sum(M * p["wcls"], axis=1)[None, :] + p["bcls"]
    return logits, jax.nn.softmax(logits, axis=1), A_t


if __name__ == "__main__":
    # Scaled-down CLAM_MB "small" shapes [1024, 512, 256] -> [256, 128, 64],
    # n_classes=2, bag of N=300 instances (exercises ragged-tail masking, the
    # 2-way core split merge, and the online softmax).
    N, L_IN, HID, D, C = 300, 256, 128, 64, 2

    key = jax.random.PRNGKey(0)
    k_h, k_p = jax.random.split(key)
    h = jax.random.normal(k_h, (N, L_IN), jnp.float32)
    params = init_params(k_p, L_IN, HID, D, C)

    logits, y_prob, y_hat, a_raw, _ = clam_mb_forward(h, params)
    jax.block_until_ready((logits, y_prob, y_hat, a_raw))

    # sanity check against the f32 reference (kernel uses bf16 MXU operands)
    logits_r, y_prob_r, a_raw_r = clam_mb_ref(h, params)
    assert a_raw.shape == (C, N)
    assert jnp.allclose(a_raw, a_raw_r, atol=3e-2, rtol=3e-2), "A_raw mismatch"
    assert jnp.allclose(logits, logits_r, atol=3e-2, rtol=3e-2), "logits mismatch"
    assert jnp.allclose(y_prob, y_prob_r, atol=3e-2, rtol=3e-2), "Y_prob mismatch"

    print("KERNEL_OK")
</pallas_src>

<mosaic_0001>
module attributes {stable_mosaic.version = 11 : i64} {
  func.func @clam_mb_kernel(%arg0: i32, %arg1: i32, %arg2: memref<512x256xf32, #tpu.memory_space<vmem>>, %arg3: memref<256x128xbf16, #tpu.memory_space<vmem>>, %arg4: memref<1x128xf32, #tpu.memory_space<vmem>>, %arg5: memref<128x128xbf16, #tpu.memory_space<vmem>>, %arg6: memref<1x128xf32, #tpu.memory_space<vmem>>, %arg7: memref<2x64xbf16, #tpu.memory_space<vmem>>, %arg8: memref<2x1xf32, #tpu.memory_space<vmem>>, %arg9: memref<2x512xf32, #tpu.memory_space<vmem>>, %arg10: memref<1x2x1xf32, #tpu.memory_space<vmem>>, %arg11: memref<1x2x1xf32, #tpu.memory_space<vmem>>, %arg12: memref<1x2x128xf32, #tpu.memory_space<vmem>>) attributes {dimension_semantics = [#tpu.dimension_semantics<parallel>, #tpu.dimension_semantics<arbitrary>], iteration_bounds = array<i64: 2, 1>, scalar_prefetch = 0 : i64, scratch_operands = 0 : i64, tpu.core_type = #tpu.core_type<tc>, window_params = [{transform_indices = @transform_0, window_bounds = array<i64: 512, 256>}, {pipeline_mode = #tpu.pipeline_mode<synchronous>, transform_indices = @transform_1, window_bounds = array<i64: 256, 128>}, {pipeline_mode = #tpu.pipeline_mode<synchronous>, transform_indices = @transform_2, window_bounds = array<i64: 1, 128>}, {pipeline_mode = #tpu.pipeline_mode<synchronous>, transform_indices = @transform_3, window_bounds = array<i64: 128, 128>}, {pipeline_mode = #tpu.pipeline_mode<synchronous>, transform_indices = @transform_4, window_bounds = array<i64: 1, 128>}, {pipeline_mode = #tpu.pipeline_mode<synchronous>, transform_indices = @transform_5, window_bounds = array<i64: 2, 64>}, {pipeline_mode = #tpu.pipeline_mode<synchronous>, transform_indices = @transform_6, window_bounds = array<i64: 2, 1>}, {transform_indices = @transform_7, window_bounds = array<i64: 2, 512>}, {transform_indices = @transform_8, window_bounds = array<i64: 1, 2, 1>}, {transform_indices = @transform_9, window_bounds = array<i64: 1, 2, 1>}, {transform_indices = @transform_10, window_bounds = array<i64: 1, 2, 128>}]} {
    %c1_i32 = arith.constant 1 : i32
    %0 = arith.muli %arg0, %c1_i32 : i32
    %1 = arith.addi %0, %arg1 : i32
    %c0_i32 = arith.constant 0 : i32
    %2 = arith.cmpi eq, %arg1, %c0_i32 : i32
    %3 = arith.extui %2 : i1 to i32
    %c0_i32_0 = arith.constant 0 : i32
    %4 = arith.cmpi ne, %3, %c0_i32_0 : i32
    scf.if %4 {
      %cst_48 = arith.constant 0xFF800000 : f32
      %91 = vector.broadcast %cst_48 : f32 to vector<2x1xf32>
      %c0_49 = arith.constant 0 : index
      %c0_50 = arith.constant 0 : index
      %c0_51 = arith.constant 0 : index
      %92 = vector.load %arg10[%c0_49, %c0_50, %c0_51] : memref<1x2x1xf32, #tpu.memory_space<vmem>>, vector<1x2x1xf32>
      %93 = vector.shape_cast %92 : vector<1x2x1xf32> to vector<2x1xf32>
      %94 = vector.shape_cast %91 : vector<2x1xf32> to vector<1x2x1xf32>
      tpu.vector_store %arg10[%c0_49, %c0_50, %c0_51], %94 {strides = array<i32>} : memref<1x2x1xf32, #tpu.memory_space<vmem>>, vector<1x2x1xf32>,
      %cst_52 = arith.constant 0.000000e+00 : f32
      %95 = vector.broadcast %cst_52 : f32 to vector<2x1xf32>
      %c0_53 = arith.constant 0 : index
      %c0_54 = arith.constant 0 : index
      %c0_55 = arith.constant 0 : index
      %96 = vector.load %arg11[%c0_53, %c0_54, %c0_55] : memref<1x2x1xf32, #tpu.memory_space<vmem>>, vector<1x2x1xf32>
      %97 = vector.shape_cast %96 : vector<1x2x1xf32> to vector<2x1xf32>
      %98 = vector.shape_cast %95 : vector<2x1xf32> to vector<1x2x1xf32>
      tpu.vector_store %arg11[%c0_53, %c0_54, %c0_55], %98 {strides = array<i32>} : memref<1x2x1xf32, #tpu.memory_space<vmem>>, vector<1x2x1xf32>,
      %cst_56 = arith.constant 0.000000e+00 : f32
      %99 = vector.broadcast %cst_56 : f32 to vector<2x128xf32>
      %c0_57 = arith.constant 0 : index
      %c0_58 = arith.constant 0 : index
      %c0_59 = arith.constant 0 : index
      %100 = vector.load %arg12[%c0_57, %c0_58, %c0_59] : memref<1x2x128xf32, #tpu.memory_space<vmem>>, vector<1x2x128xf32>
      %101 = vector.shape_cast %100 : vector<1x2x128xf32> to vector<2x128xf32>
      %102 = vector.shape_cast %99 : vector<2x128xf32> to vector<1x2x128xf32>
      tpu.vector_store %arg12[%c0_57, %c0_58, %c0_59], %102 {strides = array<i32>} : memref<1x2x128xf32, #tpu.memory_space<vmem>>, vector<1x2x128xf32>,
    } else {
    }
    %5 = tpu.iota {dimensions = array<i32: 0>} : vector<512x1xi32>
    %c512_i32 = arith.constant 512 : i32
    %6 = arith.muli %1, %c512_i32 : i32
    %7 = vector.broadcast %6 : i32 to vector<512x1xi32>
    %8 = arith.addi %7, %5 : vector<512x1xi32>
    %c300_i32 = arith.constant 300 : i32
    %9 = vector.broadcast %c300_i32 : i32 to vector<512x1xi32>
    %10 = arith.cmpi slt, %8, %9 : vector<512x1xi32>
    %c0 = arith.constant 0 : index
    %c0_1 = arith.constant 0 : index
    %11 = vector.load %arg2[%c0, %c0_1] : memref<512x256xf32, #tpu.memory_space<vmem>>, vector<512x256xf32>
    %12 = arith.truncf %11 : vector<512x256xf32> to vector<512x256xbf16>
    %c0_2 = arith.constant 0 : index
    %c0_3 = arith.constant 0 : index
    %13 = vector.load %arg3[%c0_2, %c0_3] : memref<256x128xbf16, #tpu.memory_space<vmem>>, vector<256x128xbf16>
    %cst = arith.constant dense<0.000000e+00> : vector<512x128xf32>
    %14 = tpu.matmul %12, %13, %cst {dimension_numbers = #tpu.dot_dimension_numbers<[1], [0], [0], [1], [0, 0, 1, 1], [], []>} : vector<512x256xbf16>, vector<256x128xbf16>, vector<512x128xf32> -> vector<512x128xf32>
    %c0_4 = arith.constant 0 : index
    %c0_5 = arith.constant 0 : index
    %15 = vector.load %arg4[%c0_4, %c0_5] : memref<1x128xf32, #tpu.memory_space<vmem>>, vector<1x128xf32>
    %16 = vector.broadcast %15 : vector<1x128xf32> to vector<512x128xf32>
    %17 = arith.addf %14, %16 : vector<512x128xf32>
    %cst_6 = arith.constant 0.000000e+00 : f32
    %18 = vector.broadcast %cst_6 : f32 to vector<512x128xf32>
    %19 = arith.maximumf %17, %18 : vector<512x128xf32>
    %cst_7 = arith.constant 0.000000e+00 : f32
    %20 = vector.shape_cast %10 : vector<512x1xi1> to vector<512x1xi1>
    %21 = vector.broadcast %20 : vector<512x1xi1> to vector<512x128xi1>
    %22 = vector.broadcast %cst_7 : f32 to vector<512x128xf32>
    %23 = arith.select %21, %19, %22 : vector<512x128xi1>, vector<512x128xf32>
    %24 = arith.truncf %23 : vector<512x128xf32> to vector<512x128xbf16>
    %c0_8 = arith.constant 0 : index
    %c0_9 = arith.constant 0 : index
    %25 = vector.load %arg5[%c0_8, %c0_9] : memref<128x128xbf16, #tpu.memory_space<vmem>>, vector<128x128xbf16>
    %cst_10 = arith.constant dense<0.000000e+00> : vector<512x128xf32>
    %26 = tpu.matmul %24, %25, %cst_10 {dimension_numbers = #tpu.dot_dimension_numbers<[1], [0], [0], [1], [0, 0, 1, 1], [], []>} : vector<512x128xbf16>, vector<128x128xbf16>, vector<512x128xf32> -> vector<512x128xf32>
    %c0_11 = arith.constant 0 : index
    %c0_12 = arith.constant 0 : index
    %27 = vector.load %arg6[%c0_11, %c0_12] : memref<1x128xf32, #tpu.memory_space<vmem>>, vector<1x128xf32>
    %28 = vector.broadcast %27 : vector<1x128xf32> to vector<512x128xf32>
    %29 = arith.addf %26, %28 : vector<512x128xf32>
    %30 = vector.extract_strided_slice %29 {offsets = [0, 0], sizes = [512, 64], strides = [1, 1]} : vector<512x128xf32> to vector<512x64xf32>
    %31 = math.tanh %30 : vector<512x64xf32>
    %32 = vector.extract_strided_slice %29 {offsets = [0, 64], sizes = [512, 64], strides = [1, 1]} : vector<512x128xf32> to vector<512x64xf32>
    %33 = arith.negf %32 : vector<512x64xf32>
    %34 = math.exp %33 : vector<512x64xf32>
    %cst_13 = arith.constant 1.000000e+00 : f32
    %35 = vector.broadcast %cst_13 : f32 to vector<512x64xf32>
    %36 = arith.addf %35, %34 : vector<512x64xf32>
    %37 = arith.divf %35, %36 : vector<512x64xf32>
    %38 = arith.mulf %31, %37 : vector<512x64xf32>
    %39 = arith.truncf %38 : vector<512x64xf32> to vector<512x64xbf16>
    %c0_14 = arith.constant 0 : index
    %c0_15 = arith.constant 0 : index
    %40 = vector.load %arg7[%c0_14, %c0_15] : memref<2x64xbf16, #tpu.memory_space<vmem>>, vector<2x64xbf16>
    %cst_16 = arith.constant dense<0.000000e+00> : vector<2x512xf32>
    %41 = tpu.matmul %40, %39, %cst_16 {dimension_numbers = #tpu.dot_dimension_numbers<[1], [1], [0], [0], [0, 0, 1, 0], [], []>} : vector<2x64xbf16>, vector<512x64xbf16>, vector<2x512xf32> -> vector<2x512xf32>
    %c0_17 = arith.constant 0 : index
    %c0_18 = arith.constant 0 : index
    %42 = vector.load %arg8[%c0_17, %c0_18] : memref<2x1xf32, #tpu.memory_space<vmem>>, vector<2x1xf32>
    %43 = vector.broadcast %42 : vector<2x1xf32> to vector<2x512xf32>
    %44 = arith.addf %41, %43 : vector<2x512xf32>
    %c0_19 = arith.constant 0 : index
    %c0_20 = arith.constant 0 : index
    %45 = vector.load %arg9[%c0_19, %c0_20] : memref<2x512xf32, #tpu.memory_space<vmem>>, vector<2x512xf32>
    tpu.vector_store %arg9[%c0_19, %c0_20], %44 {strides = array<i32>} : memref<2x512xf32, #tpu.memory_space<vmem>>, vector<2x512xf32>,
    %c512_i32_21 = arith.constant 512 : i32
    %46 = arith.muli %1, %c512_i32_21 : i32
    %47 = tpu.iota {dimensions = array<i32: 1>} : vector<2x512xi32>
    %48 = vector.broadcast %46 : i32 to vector<2x512xi32>
    %49 = arith.addi %48, %47 : vector<2x512xi32>
    %c300_i32_22 = arith.constant 300 : i32
    %50 = vector.broadcast %c300_i32_22 : i32 to vector<2x512xi32>
    %51 = arith.cmpi slt, %49, %50 : vector<2x512xi32>
    %c0_23 = arith.constant 0 : index
    %c0_24 = arith.constant 0 : index
    %c0_25 = arith.constant 0 : index
    %52 = vector.load %arg10[%c0_23, %c0_24, %c0_25] : memref<1x2x1xf32, #tpu.memory_space<vmem>>, vector<1x2x1xf32>
    %53 = vector.shape_cast %52 : vector<1x2x1xf32> to vector<2x1xf32>
    %cst_26 = arith.constant 0xFF800000 : f32
    %54 = vector.broadcast %cst_26 : f32 to vector<2x512xf32>
    %55 = arith.select %51, %44, %54 : vector<2x512xi1>, vector<2x512xf32>
    %cst_27 = arith.constant dense<0xFF800000> : vector<2xf32>
    %56 = vector.multi_reduction <maximumf>, %55, %cst_27 [1] : vector<2x512xf32> to vector<2xf32>
    %57 = vector.shape_cast %56 : vector<2xf32> to vector<2x1xf32>
    %58 = arith.maximumf %53, %57 : vector<2x1xf32>
    %cst_28 = arith.constant 0xFF800000 : f32
    %59 = vector.broadcast %cst_28 : f32 to vector<2x1xf32>
    %60 = arith.cmpf ogt, %58, %59 : vector<2x1xf32>
    %61 = arith.subf %53, %58 : vector<2x1xf32>
    %62 = math.exp %61 : vector<2x1xf32>
    %cst_29 = arith.constant 0.000000e+00 : f32
    %63 = vector.broadcast %cst_29 : f32 to vector<2x1xf32>
    %64 = arith.select %60, %62, %63 : vector<2x1xi1>, vector<2x1xf32>
    %65 = vector.broadcast %58 : vector<2x1xf32> to vector<2x512xf32>
    %66 = arith.subf %44, %65 : vector<2x512xf32>
    %67 = math.exp %66 : vector<2x512xf32>
    %cst_30 = arith.constant 0.000000e+00 : f32
    %68 = vector.broadcast %cst_30 : f32 to vector<2x512xf32>
    %69 = arith.select %51, %67, %68 : vector<2x512xi1>, vector<2x512xf32>
    %c0_31 = arith.constant 0 : index
    %c0_32 = arith.constant 0 : index
    %c0_33 = arith.constant 0 : index
    %70 = vector.load %arg11[%c0_31, %c0_32, %c0_33] : memref<1x2x1xf32, #tpu.memory_space<vmem>>, vector<1x2x1xf32>
    %71 = vector.shape_cast %70 : vector<1x2x1xf32> to vector<2x1xf32>
    %72 = arith.mulf %64, %71 : vector<2x1xf32>
    %cst_34 = arith.constant dense<0.000000e+00> : vector<2xf32>
    %73 = vector.multi_reduction <add>, %69, %cst_34 [1] : vector<2x512xf32> to vector<2xf32>
    %74 = vector.shape_cast %73 : vector<2xf32> to vector<2x1xf32>
    %75 = arith.addf %72, %74 : vector<2x1xf32>
    %c0_35 = arith.constant 0 : index
    %c0_36 = arith.constant 0 : index
    %c0_37 = arith.constant 0 : index
    %76 = vector.load %arg11[%c0_35, %c0_36, %c0_37] : memref<1x2x1xf32, #tpu.memory_space<vmem>>, vector<1x2x1xf32>
    %77 = vector.shape_cast %76 : vector<1x2x1xf32> to vector<2x1xf32>
    %78 = vector.shape_cast %75 : vector<2x1xf32> to vector<1x2x1xf32>
    tpu.vector_store %arg11[%c0_35, %c0_36, %c0_37], %78 {strides = array<i32>} : memref<1x2x1xf32, #tpu.memory_space<vmem>>, vector<1x2x1xf32>,
    %c0_38 = arith.constant 0 : index
    %c0_39 = arith.constant 0 : index
    %c0_40 = arith.constant 0 : index
    %79 = vector.load %arg12[%c0_38, %c0_39, %c0_40] : memref<1x2x128xf32, #tpu.memory_space<vmem>>, vector<1x2x128xf32>
    %80 = vector.shape_cast %79 : vector<1x2x128xf32> to vector<2x128xf32>
    %81 = vector.broadcast %64 : vector<2x1xf32> to vector<2x128xf32>
    %82 = arith.mulf %81, %80 : vector<2x128xf32>
    %cst_41 = arith.constant dense<0.000000e+00> : vector<2x128xf32>
    %83 = tpu.matmul %69, %23, %cst_41 {dimension_numbers = #tpu.dot_dimension_numbers<[1], [0], [0], [1], [0, 0, 1, 1], [], []>} : vector<2x512xf32>, vector<512x128xf32>, vector<2x128xf32> -> vector<2x128xf32>
    %84 = arith.addf %82, %83 : vector<2x128xf32>
    %c0_42 = arith.constant 0 : index
    %c0_43 = arith.constant 0 : index
    %c0_44 = arith.constant 0 : index
    %85 = vector.load %arg12[%c0_42, %c0_43, %c0_44] : memref<1x2x128xf32, #tpu.memory_space<vmem>>, vector<1x2x128xf32>
    %86 = vector.shape_cast %85 : vector<1x2x128xf32> to vector<2x128xf32>
    %87 = vector.shape_cast %84 : vector<2x128xf32> to vector<1x2x128xf32>
    tpu.vector_store %arg12[%c0_42, %c0_43, %c0_44], %87 {strides = array<i32>} : memref<1x2x128xf32, #tpu.memory_space<vmem>>, vector<1x2x128xf32>,
    %c0_45 = arith.constant 0 : index
    %c0_46 = arith.constant 0 : index
    %c0_47 = arith.constant 0 : index
    %88 = vector.load %arg10[%c0_45, %c0_46, %c0_47] : memref<1x2x1xf32, #tpu.memory_space<vmem>>, vector<1x2x1xf32>
    %89 = vector.shape_cast %88 : vector<1x2x1xf32> to vector<2x1xf32>
    %90 = vector.shape_cast %58 : vector<2x1xf32> to vector<1x2x1xf32>
    tpu.vector_store %arg10[%c0_45, %c0_46, %c0_47], %90 {strides = array<i32>} : memref<1x2x1xf32, #tpu.memory_space<vmem>>, vector<1x2x1xf32>,
    return
  }
  func.func @transform_0(%arg0: i32, %arg1: i32) -> (i32, i32) {
    %c1_i32 = arith.constant 1 : i32
    %0 = arith.muli %arg0, %c1_i32 : i32
    %1 = arith.addi %0, %arg1 : i32
    %c0_i32 = arith.constant 0 : i32
    %2 = arith.minsi %1, %c0_i32 : i32
    %c0_i32_0 = arith.constant 0 : i32
    %c0_i32_1 = arith.constant 0 : i32
    return %2, %c0_i32_0 : i32, i32
  }
  func.func @transform_1(%arg0: i32, %arg1: i32) -> (i32, i32) {
    %c0_i32 = arith.constant 0 : i32
    %c0_i32_0 = arith.constant 0 : i32
    %c0_i32_1 = arith.constant 0 : i32
    return %c0_i32, %c0_i32_0 : i32, i32
  }
  func.func @transform_2(%arg0: i32, %arg1: i32) -> (i32, i32) {
    %c0_i32 = arith.constant 0 : i32
    %c0_i32_0 = arith.constant 0 : i32
    %c0_i32_1 = arith.constant 0 : i32
    return %c0_i32, %c0_i32_0 : i32, i32
  }
  func.func @transform_3(%arg0: i32, %arg1: i32) -> (i32, i32) {
    %c0_i32 = arith.constant 0 : i32
    %c0_i32_0 = arith.constant 0 : i32
    %c0_i32_1 = arith.constant 0 : i32
    return %c0_i32, %c0_i32_0 : i32, i32
  }
  func.func @transform_4(%arg0: i32, %arg1: i32) -> (i32, i32) {
    %c0_i32 = arith.constant 0 : i32
    %c0_i32_0 = arith.constant 0 : i32
    %c0_i32_1 = arith.constant 0 : i32
    return %c0_i32, %c0_i32_0 : i32, i32
  }
  func.func @transform_5(%arg0: i32, %arg1: i32) -> (i32, i32) {
    %c0_i32 = arith.constant 0 : i32
    %c0_i32_0 = arith.constant 0 : i32
    %c0_i32_1 = arith.constant 0 : i32
    return %c0_i32, %c0_i32_0 : i32, i32
  }
  func.func @transform_6(%arg0: i32, %arg1: i32) -> (i32, i32) {
    %c0_i32 = arith.constant 0 : i32
    %c0_i32_0 = arith.constant 0 : i32
    %c0_i32_1 = arith.constant 0 : i32
    return %c0_i32, %c0_i32_0 : i32, i32
  }
  func.func @transform_7(%arg0: i32, %arg1: i32) -> (i32, i32) {
    %c1_i32 = arith.constant 1 : i32
    %0 = arith.muli %arg0, %c1_i32 : i32
    %1 = arith.addi %0, %arg1 : i32
    %c0_i32 = arith.constant 0 : i32
    %c0_i32_0 = arith.constant 0 : i32
    return %c0_i32, %1 : i32, i32
  }
  func.func @transform_8(%arg0: i32, %arg1: i32) -> (i32, i32, i32) {
    %c0_i32 = arith.constant 0 : i32
    %c0_i32_0 = arith.constant 0 : i32
    %c0_i32_1 = arith.constant 0 : i32
    return %arg0, %c0_i32, %c0_i32_0 : i32, i32, i32
  }
  func.func @transform_9(%arg0: i32, %arg1: i32) -> (i32, i32, i32) {
    %c0_i32 = arith.constant 0 : i32
    %c0_i32_0 = arith.constant 0 : i32
    %c0_i32_1 = arith.constant 0 : i32
    return %arg0, %c0_i32, %c0_i32_0 : i32, i32, i32
  }
  func.func @transform_10(%arg0: i32, %arg1: i32) -> (i32, i32, i32) {
    %c0_i32 = arith.constant 0 : i32
    %c0_i32_0 = arith.constant 0 : i32
    %c0_i32_1 = arith.constant 0 : i32
    return %arg0, %c0_i32, %c0_i32_0 : i32, i32, i32
  }
}

</mosaic_0001>

<llo_original>
// kernel: tpu_custom_call.1
$region0: #{tpu_custom_call.1}
  #allocation0 [shape = 'u32[]', space=smem, size = 0x4, offset = 0x4, fixed_abs, tag = 'smem constant byte address 0x4 - core index']
  #allocation1 [shape = 'u32[72,128]{1,0:T(1,128)}', space=vmem, size = 0x9000, scoped, tag = 'internal scratch']
  %s0 = inlined_call_operand.hbm [shape: f32[300,256], index: 0, kind: input, shape index: {}]
  %s1 = inlined_call_operand.hbm [shape: bf16[256,128], index: 1, kind: input, shape index: {}]
  %s2 = inlined_call_operand.vmem [shape: f32[1,128], index: 2, kind: input, shape index: {}]
  %s3 = inlined_call_operand.hbm [shape: bf16[128,128], index: 3, kind: input, shape index: {}]
  %s4 = inlined_call_operand.vmem [shape: f32[1,128], index: 4, kind: input, shape index: {}]
  %s5 = inlined_call_operand.vmem [shape: bf16[2,64], index: 5, kind: input, shape index: {}]
  %s6 = inlined_call_operand.vmem [shape: f32[2,1], index: 6, kind: input, shape index: {}]
  %s7 = inlined_call_operand.hbm [shape: f32[2,1024], index: 7, kind: output, shape index: {0}]
  %s8 = inlined_call_operand.vmem [shape: f32[2,2,1], index: 8, kind: output, shape index: {1}]
  %s9 = inlined_call_operand.vmem [shape: f32[2,2,1], index: 9, kind: output, shape index: {2}]
  %s10 = inlined_call_operand.hbm [shape: f32[2,2,128], index: 10, kind: output, shape index: {3}]
  %11 = xla_tuple %s7, %s8, %s9, %s10
  %s12 = sld [smem:[#allocation0]]
  $region101: #{tpu_custom_call.1} parent=0
    _
  %s14 = ssub.s32 1, %s12
  %s15 = scalar_select 0, %s14, %s12
  $region1: #{tpu_custom_call.1} parent=0
    #allocation2 [shape = 'u8[1048576]{0}', space=vmem, size = 0x100000, scoped, tag = 'input window, operand 0']
    #allocation3 [shape = 's32[2]{0}', space=sflag, size = 0x8, scoped, tag = 'scoped memory for tpu_custom_call.1']
    #allocation4 [shape = 's32[2]{0}', space=sflag, size = 0x8, scoped, tag = 'scoped memory for tpu_custom_call.1']
    #allocation5 [shape = 'u8[65536]{0}', space=vmem, size = 0x10000, scoped, tag = 'input window, operand 1, single buffered']
    #allocation6 [shape = 's32[1]{0}', space=sflag, size = 0x4, scoped, tag = 'scoped memory for tpu_custom_call.1']
    #allocation7 [shape = 'u8[32768]{0}', space=vmem, size = 0x8000, scoped, tag = 'input window, operand 3, single buffered']
    #allocation8 [shape = 'u8[8192]{0}', space=vmem, size = 0x2000, scoped, tag = 'output window, operand 0']
    #allocation9 [shape = 'u8[2048]{0}', space=vmem, size = 0x800, scoped, tag = 'output window, operand 3']
    #allocation10 [shape = 's32[2]{0}', space=sflag, size = 0x8, scoped, tag = 'scoped memory for tpu_custom_call.1']
    %16 = vsyncpa [#allocation3], 0
    %s17 = scalar_lea.sflag [#allocation3], 1
    %18 = vsyncpa %s17, 0
    %19 = vsyncpa [#allocation6], 0
    %20 = vsyncpa [#allocation4], 0
    %s21 = scalar_lea.sflag [#allocation4], 1
    %22 = vsyncpa %s21, 0
    %23 = vsyncpa [#allocation10], 0
    %s24 = scalar_lea.sflag [#allocation10], 1
    %25 = vsyncpa %s24, 0
    loop: start=0, step=1, limit=4
    $region2: #{tpu_custom_call.1} parent=1 // loop_pre_header
      _
    $region3: #{tpu_custom_call.1} parent=1 // loop_header
      %s27 = sphi 0, %s31
      %p28 = scmp.ge.s32.totalorder %s27, 4
      %s34 = sphi 0, %s46
      %s35 = sphi 0, %s42
      %s36 = sphi 0, %s34
      %s37 = sphi 0, %s35
      %s38 = sphi 0, %s36
      %s39 = sphi 0, %s37
      %s55 = sphi 0, %s57
      %s58 = sphi 0, %s55
      %s59 = sphi 0, %s58
      %s75 = sphi 0, %s59
      %s79 = sphi 0, %s79
      %s81 = sphi 0, %s79
      %s82 = sphi 0, %s81
      %s96 = sphi 0, %s82
      %s100 = sphi 0, %s100
      %s102 = sphi 0, %s100
      %s103 = sphi 0, %s102
      %s117 = sphi 0, %s103
      %s121 = sphi 0, %s121
      %s123 = sphi 0, %s121
      %s124 = sphi 0, %s123
      %s138 = sphi 0, %s124
      %s142 = sphi 0, %s142
      %s144 = sphi 0, %s142
      %s145 = sphi 0, %s144
      %s159 = sphi 0, %s145
      %s163 = sphi 0, %s163
      %s165 = sphi 0, %s163
      %s166 = sphi 0, %s165
      %s180 = sphi 0, %s166
      %s184 = sphi 0, %s184
      %s186 = sphi 0, %s184
      %s187 = sphi 0, %s186
      %s201 = sphi 0, %s187
      %s209 = sphi 0, %s211
      %s212 = sphi 0, %s209
      %s213 = sphi 0, %s212
      %s229 = sphi 0, %s213
      %s235 = sphi 0, %s237
      %s238 = sphi 0, %s235
      %s239 = sphi 0, %s238
      %s255 = sphi 0, %s239
      %s261 = sphi 0, %s263
      %s264 = sphi 0, %s261
      %s265 = sphi 0, %s264
      %s281 = sphi 0, %s265
      %s287 = sphi 0, %s289
      %s290 = sphi 0, %s287
      %s291 = sphi 0, %s290
      %s307 = sphi 0, %s291
    $region4: #{tpu_custom_call.1} parent=1 // loop_header_branch
      %30 = sbr.rel (%p28) target = $region8
    $region5: #{tpu_custom_call.1} parent=1 // loop_body
      %s32 = ssub.s32 %s27, 1
      %s33 = ssub.s32 %s27, 2
      %s40 = sadd.s32 1, %s35
      %p41 = scmp.ge.s32.totalorder %s40, 1
      %s42 = scalar_select %p41, 0, %s40
      %s43 = sadd.s32 1, %s34
      %s44 = scalar_select %p41, %s43, %s34
      %p45 = scmp.ge.s32.totalorder %s44, 2
      %s46 = scalar_select %p45, 0, %s44
      %s47 = sadd.s32 %s34, %s35
      %p48 = scmp.lt.s32.totalorder %s47, 0
      %s49 = scalar_select %p48, %s47, 0
      %s50 = sadd.s32 %s46, %s42
      %p51 = scmp.lt.s32.totalorder %s50, 0
      %s52 = scalar_select %p51, %s50, 0
      %s53 = ssub.s32 %s49, %s52
      %p54 = scmp.eq.s32.totalorder %s53, 0
      %s56 = sadd.s32 %s55, 1
      %s57 = scalar_select %p54, %s55, %s56
      %p60 = pneg %p54
      %p61 = scmp.eq.s32.totalorder %s27, 1
      %p62 = por %p60, %p61
      %p63 = scmp.ne.s32.totalorder %s55, %s58
      %p64 = scmp.eq.s32.totalorder %s27, 0
      %p65 = por %p63, %p64
      %p66 = scmp.ne.s32.totalorder %s55, %s58
      %p67 = scmp.eq.s32.totalorder %s32, 1
      %p68 = por %p66, %p67
      %p69 = scmp.ne.s32.totalorder %s58, %s59
      %p70 = scmp.eq.s32.totalorder %s32, 0
      %p71 = por %p69, %p70
      %p72 = scmp.ne.s32.totalorder %s58, %s59
      %p73 = scmp.eq.s32.totalorder %s33, 1
      %p74 = por %p72, %p73
      %p76 = scmp.ne.s32.totalorder %s59, %s75
      %p77 = scmp.eq.s32.totalorder %s33, 0
      %p78 = por %p76, %p77
      %s80 = sadd.s32 %s79, 1
      %p83 = scmp.eq.s32.totalorder %s27, 1
      %p84 = scmp.ne.s32.totalorder %s79, %s81
      %p85 = scmp.eq.s32.totalorder %s27, 0
      %p86 = por %p84, %p85
      %p87 = scmp.ne.s32.totalorder %s79, %s81
      %p88 = scmp.eq.s32.totalorder %s32, 1
      %p89 = por %p87, %p88
      %p90 = scmp.ne.s32.totalorder %s81, %s82
      %p91 = scmp.eq.s32.totalorder %s32, 0
      %p92 = por %p90, %p91
      %p93 = scmp.ne.s32.totalorder %s81, %s82
      %p94 = scmp.eq.s32.totalorder %s33, 1
      %p95 = por %p93, %p94
      %p97 = scmp.ne.s32.totalorder %s82, %s96
      %p98 = scmp.eq.s32.totalorder %s33, 0
      %p99 = por %p97, %p98
      %s101 = sadd.s32 %s100, 1
      %p104 = scmp.eq.s32.totalorder %s27, 1
      %p105 = scmp.ne.s32.totalorder %s100, %s102
      %p106 = scmp.eq.s32.totalorder %s27, 0
      %p107 = por %p105, %p106
      %p108 = scmp.ne.s32.totalorder %s100, %s102
      %p109 = scmp.eq.s32.totalorder %s32, 1
      %p110 = por %p108, %p109
      %p111 = scmp.ne.s32.totalorder %s102, %s103
      %p112 = scmp.eq.s32.totalorder %s32, 0
      %p113 = por %p111, %p112
      %p114 = scmp.ne.s32.totalorder %s102, %s103
      %p115 = scmp.eq.s32.totalorder %s33, 1
      %p116 = por %p114, %p115
      %p118 = scmp.ne.s32.totalorder %s103, %s117
      %p119 = scmp.eq.s32.totalorder %s33, 0
      %p120 = por %p118, %p119
      %s122 = sadd.s32 %s121, 1
      %p125 = scmp.eq.s32.totalorder %s27, 1
      %p126 = scmp.ne.s32.totalorder %s121, %s123
      %p127 = scmp.eq.s32.totalorder %s27, 0
      %p128 = por %p126, %p127
      %p129 = scmp.ne.s32.totalorder %s121, %s123
      %p130 = scmp.eq.s32.totalorder %s32, 1
      %p131 = por %p129, %p130
      %p132 = scmp.ne.s32.totalorder %s123, %s124
      %p133 = scmp.eq.s32.totalorder %s32, 0
      %p134 = por %p132, %p133
      %p135 = scmp.ne.s32.totalorder %s123, %s124
      %p136 = scmp.eq.s32.totalorder %s33, 1
      %p137 = por %p135, %p136
      %p139 = scmp.ne.s32.totalorder %s124, %s138
      %p140 = scmp.eq.s32.totalorder %s33, 0
      %p141 = por %p139, %p140
      %s143 = sadd.s32 %s142, 1
      %p146 = scmp.eq.s32.totalorder %s27, 1
      %p147 = scmp.ne.s32.totalorder %s142, %s144
      %p148 = scmp.eq.s32.totalorder %s27, 0
      %p149 = por %p147, %p148
      %p150 = scmp.ne.s32.totalorder %s142, %s144
      %p151 = scmp.eq.s32.totalorder %s32, 1
      %p152 = por %p150, %p151
      %p153 = scmp.ne.s32.totalorder %s144, %s145
      %p154 = scmp.eq.s32.totalorder %s32, 0
      %p155 = por %p153, %p154
      %p156 = scmp.ne.s32.totalorder %s144, %s145
      %p157 = scmp.eq.s32.totalorder %s33, 1
      %p158 = por %p156, %p157
      %p160 = scmp.ne.s32.totalorder %s145, %s159
      %p161 = scmp.eq.s32.totalorder %s33, 0
      %p162 = por %p160, %p161
      %s164 = sadd.s32 %s163, 1
      %p167 = scmp.eq.s32.totalorder %s27, 1
      %p168 = scmp.ne.s32.totalorder %s163, %s165
      %p169 = scmp.eq.s32.totalorder %s27, 0
      %p170 = por %p168, %p169
      %p171 = scmp.ne.s32.totalorder %s163, %s165
      %p172 = scmp.eq.s32.totalorder %s32, 1
      %p173 = por %p171, %p172
      %p174 = scmp.ne.s32.totalorder %s165, %s166
      %p175 = scmp.eq.s32.totalorder %s32, 0
      %p176 = por %p174, %p175
      %p177 = scmp.ne.s32.totalorder %s165, %s166
      %p178 = scmp.eq.s32.totalorder %s33, 1
      %p179 = por %p177, %p178
      %p181 = scmp.ne.s32.totalorder %s166, %s180
      %p182 = scmp.eq.s32.totalorder %s33, 0
      %p183 = por %p181, %p182
      %s185 = sadd.s32 %s184, 1
      %p188 = scmp.eq.s32.totalorder %s27, 1
      %p189 = scmp.ne.s32.totalorder %s184, %s186
      %p190 = scmp.eq.s32.totalorder %s27, 0
      %p191 = por %p189, %p190
      %p192 = scmp.ne.s32.totalorder %s184, %s186
      %p193 = scmp.eq.s32.totalorder %s32, 1
      %p194 = por %p192, %p193
      %p195 = scmp.ne.s32.totalorder %s186, %s187
      %p196 = scmp.eq.s32.totalorder %s32, 0
      %p197 = por %p195, %p196
      %p198 = scmp.ne.s32.totalorder %s186, %s187
      %p199 = scmp.eq.s32.totalorder %s33, 1
      %p200 = por %p198, %p199
      %p202 = scmp.ne.s32.totalorder %s187, %s201
      %p203 = scmp.eq.s32.totalorder %s33, 0
      %p204 = por %p202, %p203
      %s205 = sadd.s32 %s34, %s35
      %s206 = sadd.s32 %s46, %s42
      %s207 = ssub.s32 %s205, %s206
      %p208 = scmp.eq.s32.totalorder %s207, 0
      %s210 = sadd.s32 %s209, 1
      %s211 = scalar_select %p208, %s209, %s210
      %p214 = pneg %p208
      %p215 = scmp.eq.s32.totalorder %s27, 1
      %p216 = por %p214, %p215
      %p217 = scmp.ne.s32.totalorder %s209, %s212
      %p218 = scmp.eq.s32.totalorder %s27, 0
      %p219 = por %p217, %p218
      %p220 = scmp.ne.s32.totalorder %s209, %s212
      %p221 = scmp.eq.s32.totalorder %s32, 1
      %p222 = por %p220, %p221
      %p223 = scmp.ne.s32.totalorder %s212, %s213
      %p224 = scmp.eq.s32.totalorder %s32, 0
      %p225 = por %p223, %p224
      %p226 = scmp.ne.s32.totalorder %s212, %s213
      %p227 = scmp.eq.s32.totalorder %s33, 1
      %p228 = por %p226, %p227
      %p230 = scmp.ne.s32.totalorder %s213, %s229
      %p231 = scmp.eq.s32.totalorder %s33, 0
      %p232 = por %p230, %p231
      %s233 = ssub.s32 %s34, %s46
      %p234 = scmp.eq.s32.totalorder %s233, 0
      %s236 = sadd.s32 %s235, 1
      %s237 = scalar_select %p234, %s235, %s236
      %p240 = pneg %p234
      %p241 = scmp.eq.s32.totalorder %s27, 1
      %p242 = por %p240, %p241
      %p243 = scmp.ne.s32.totalorder %s235, %s238
      %p244 = scmp.eq.s32.totalorder %s27, 0
      %p245 = por %p243, %p244
      %p246 = scmp.ne.s32.totalorder %s235, %s238
      %p247 = scmp.eq.s32.totalorder %s32, 1
      %p248 = por %p246, %p247
      %p249 = scmp.ne.s32.totalorder %s238, %s239
      %p250 = scmp.eq.s32.totalorder %s32, 0
      %p251 = por %p249, %p250
      %p252 = scmp.ne.s32.totalorder %s238, %s239
      %p253 = scmp.eq.s32.totalorder %s33, 1
      %p254 = por %p252, %p253
      %p256 = scmp.ne.s32.totalorder %s239, %s255
      %p257 = scmp.eq.s32.totalorder %s33, 0
      %p258 = por %p256, %p257
      %s259 = ssub.s32 %s34, %s46
      %p260 = scmp.eq.s32.totalorder %s259, 0
      %s262 = sadd.s32 %s261, 1
      %s263 = scalar_select %p260, %s261, %s262
      %p266 = pneg %p260
      %p267 = scmp.eq.s32.totalorder %s27, 1
      %p268 = por %p266, %p267
      %p269 = scmp.ne.s32.totalorder %s261, %s264
      %p270 = scmp.eq.s32.totalorder %s27, 0
      %p271 = por %p269, %p270
      %p272 = scmp.ne.s32.totalorder %s261, %s264
      %p273 = scmp.eq.s32.totalorder %s32, 1
      %p274 = por %p272, %p273
      %p275 = scmp.ne.s32.totalorder %s264, %s265
      %p276 = scmp.eq.s32.totalorder %s32, 0
      %p277 = por %p275, %p276
      %p278 = scmp.ne.s32.totalorder %s264, %s265
      %p279 = scmp.eq.s32.totalorder %s33, 1
      %p280 = por %p278, %p279
      %p282 = scmp.ne.s32.totalorder %s265, %s281
      %p283 = scmp.eq.s32.totalorder %s33, 0
      %p284 = por %p282, %p283
      %s285 = ssub.s32 %s34, %s46
      %p286 = scmp.eq.s32.totalorder %s285, 0
      %s288 = sadd.s32 %s287, 1
      %s289 = scalar_select %p286, %s287, %s288
      %p292 = pneg %p286
      %p293 = scmp.eq.s32.totalorder %s27, 1
      %p294 = por %p292, %p293
      %p295 = scmp.ne.s32.totalorder %s287, %s290
      %p296 = scmp.eq.s32.totalorder %s27, 0
      %p297 = por %p295, %p296
      %p298 = scmp.ne.s32.totalorder %s287, %s290
      %p299 = scmp.eq.s32.totalorder %s32, 1
      %p300 = por %p298, %p299
      %p301 = scmp.ne.s32.totalorder %s290, %s291
      %p302 = scmp.eq.s32.totalorder %s32, 0
      %p303 = por %p301, %p302
      %p304 = scmp.ne.s32.totalorder %s290, %s291
      %p305 = scmp.eq.s32.totalorder %s33, 1
      %p306 = por %p304, %p305
      %p308 = scmp.ne.s32.totalorder %s291, %s307
      %p309 = scmp.eq.s32.totalorder %s33, 0
      %p310 = por %p308, %p309
      %p311 = scmp.le.s32.totalorder 1, %s27
      %p312 = scmp.lt.s32.totalorder %s27, 3
      %p313 = pnand %p311, %p312
      %p314 = pneg %p313
      // Predicated region
      $region9: #{tpu_custom_call.1} parent=5 // pred_check
        _
      $region10: #{tpu_custom_call.1} parent=5 // pred_check_branch
        %316 = sbr.rel (%p313) target = $region12
      $region11: #{tpu_custom_call.1} parent=5 // pred_region
        %s317 = ssub.s32 %s27, 1
        // Predicated region
        $region13: #{tpu_custom_call.1} parent=11 // pred_check
          %p318 = pneg %p92
        $region14: #{tpu_custom_call.1} parent=11 // pred_check_branch
          %320 = sbr.rel (%p318) target = $region16
        $region15: #{tpu_custom_call.1} parent=11 // pred_region
          %322 = vsyncadd [#allocation6], 0
          %s323 = sshll.u32 %s1, 4
          %s324 = int_to_ptr.hbm [resolvable:$true] %s323
          %s325 = sshll.u32 [#allocation5], 4
          %s326 = int_to_ptr.vmem [resolvable:$true] %s325
          %331 = dma.hbm_to_vmem [thread:$0]  %s324, 2048, %s326, [#allocation6], 64, 64, 4
        $region16: #{tpu_custom_call.1} parent=11 // pred_fallthru
          _
        // Predicated region
        $region17: #{tpu_custom_call.1} parent=11 // pred_check
          %p332 = pneg %p113
        $region18: #{tpu_custom_call.1} parent=11 // pred_check_branch
          %334 = sbr.rel (%p332) target = $region20
        $region19: #{tpu_custom_call.1} parent=11 // pred_region
          _
        $region20: #{tpu_custom_call.1} parent=11 // pred_fallthru
          _
        // Predicated region
        $region21: #{tpu_custom_call.1} parent=11 // pred_check
          %p335 = pneg %p134
        $region22: #{tpu_custom_call.1} parent=11 // pred_check_branch
          %337 = sbr.rel (%p335) target = $region24
        $region23: #{tpu_custom_call.1} parent=11 // pred_region
          %339 = vsyncadd [#allocation6], 0
          %s340 = sshll.u32 %s3, 4
          %s341 = int_to_ptr.hbm [resolvable:$true] %s340
          %s342 = sshll.u32 [#allocation7], 4
          %s343 = int_to_ptr.vmem [resolvable:$true] %s342
          %348 = dma.hbm_to_vmem [thread:$0]  %s341, 1024, %s343, [#allocation6], 64, 64, 4
        $region24: #{tpu_custom_call.1} parent=11 // pred_fallthru
          _
        // Predicated region
        $region25: #{tpu_custom_call.1} parent=11 // pred_check
          %p349 = pneg %p155
        $region26: #{tpu_custom_call.1} parent=11 // pred_check_branch
          %351 = sbr.rel (%p349) target = $region28
        $region27: #{tpu_custom_call.1} parent=11 // pred_region
          _
        $region28: #{tpu_custom_call.1} parent=11 // pred_fallthru
          _
        // Predicated region
        $region29: #{tpu_custom_call.1} parent=11 // pred_check
          %p352 = pneg %p176
        $region30: #{tpu_custom_call.1} parent=11 // pred_check_branch
          %354 = sbr.rel (%p352) target = $region32
        $region31: #{tpu_custom_call.1} parent=11 // pred_region
          _
        $region32: #{tpu_custom_call.1} parent=11 // pred_fallthru
          _
        // Predicated region
        $region33: #{tpu_custom_call.1} parent=11 // pred_check
          %p355 = pneg %p197
        $region34: #{tpu_custom_call.1} parent=11 // pred_check_branch
          %357 = sbr.rel (%p355) target = $region36
        $region35: #{tpu_custom_call.1} parent=11 // pred_region
          _
        $region36: #{tpu_custom_call.1} parent=11 // pred_fallthru
          _
      $region12: #{tpu_custom_call.1} parent=5 // pred_fallthru
        _
      %p358 = scmp.lt.s32.totalorder %s27, 2
      // Predicated region
      $region37: #{tpu_custom_call.1} parent=5 // pred_check
        %p359 = pneg %p358
      $region38: #{tpu_custom_call.1} parent=5 // pred_check_branch
        %361 = sbr.rel (%p359) target = $region40
      $region39: #{tpu_custom_call.1} parent=5 // pred_region
        // Predicated region
        $region41: #{tpu_custom_call.1} parent=39 // pred_check
          %p362 = pneg %p65
        $region42: #{tpu_custom_call.1} parent=39 // pred_check_branch
          %364 = sbr.rel (%p362) target = $region44
        $region43: #{tpu_custom_call.1} parent=39 // pred_region
          %s365 = sand.u32 %s55, 1
          %s366 = scalar_lea.sflag [#allocation3], %s365
          %s367 = sand.u32 %s55, 1
          %s368 = smul.addr %s367, 1024
          %s369 = scalar_lea.vmem [#allocation2], %s368
          %s370 = sadd.s32 %s34, %s35
          %p371 = scmp.lt.s32.totalorder %s370, 0
          %s372 = scalar_select %p371, %s370, 0
          %s373 = smul.u32 64, %s372
          %s374 = ssub.s32 38, %s373
          %s375 = smul.u32 8, %s374
          %s376 = smul.u32 %s375, 2
          %s377 = ssub.s32 1024, %s376
          %s378 = sshll.u32 %s377, 4
          %379 = vsyncadd %s366, %s378
          %p380 = scmp.ne.s32.totalorder 0, %s376
          %s381 = smul.addr %s373, 2
          %s382 = smul.addr %s381, 8
          %s383 = scalar_lea.hbm %s0, %s382
          %s384 = smul.u32 16, %s374
          %s385 = sshll.u32 %s383, 4
          %s386 = int_to_ptr.hbm [resolvable:$true] %s385
          %s387 = sshll.u32 %s369, 4
          %s388 = int_to_ptr.vmem [resolvable:$true] %s387
          %s389 = sshll.u32 %s384, 4
          %393 = dma.hbm_to_vmem [thread:$0]  (%p380), %s386, %s389, %s388, %s366, 256, 256, 16
        $region44: #{tpu_custom_call.1} parent=39 // pred_fallthru
          _
      $region40: #{tpu_custom_call.1} parent=5 // pred_fallthru
        _
      %p394 = scmp.le.s32.totalorder 1, %s27
      %p395 = scmp.lt.s32.totalorder %s27, 3
      %p396 = pnand %p394, %p395
      %p397 = pneg %p396
      // Predicated region
      $region45: #{tpu_custom_call.1} parent=5 // pred_check
        _
      $region46: #{tpu_custom_call.1} parent=5 // pred_check_branch
        %399 = sbr.rel (%p396) target = $region48
      $region47: #{tpu_custom_call.1} parent=5 // pred_region
        %s400 = ssub.s32 %s27, 1
        %s401 = sand.u32 %s58, 1
        %s402 = scalar_lea.sflag [#allocation3], %s401
        %s403 = sand.u32 %s58, 1
        %s404 = smul.addr %s403, 1024
        %s405 = scalar_lea.vmem [#allocation2], %s404
        // Predicated region
        $region49: #{tpu_custom_call.1} parent=47 // pred_check
          %p406 = pneg %p71
        $region50: #{tpu_custom_call.1} parent=47 // pred_check_branch
          %408 = sbr.rel (%p406) target = $region52
        $region51: #{tpu_custom_call.1} parent=47 // pred_region
          %410 = dma.done %s402, 16384
        $region52: #{tpu_custom_call.1} parent=47 // pred_fallthru
          _
        // Predicated region
        $region53: #{tpu_custom_call.1} parent=47 // pred_check
          %p411 = pneg %p92
        $region54: #{tpu_custom_call.1} parent=47 // pred_check_branch
          %413 = sbr.rel (%p411) target = $region56
        $region55: #{tpu_custom_call.1} parent=47 // pred_region
          %415 = dma.done [#allocation6], 2048
        $region56: #{tpu_custom_call.1} parent=47 // pred_fallthru
          _
        // Predicated region
        $region57: #{tpu_custom_call.1} parent=47 // pred_check
          %p416 = pneg %p134
        $region58: #{tpu_custom_call.1} parent=47 // pred_check_branch
          %418 = sbr.rel (%p416) target = $region60
        $region59: #{tpu_custom_call.1} parent=47 // pred_region
          %420 = dma.done [#allocation6], 1024
        $region60: #{tpu_custom_call.1} parent=47 // pred_fallthru
          _
        %s421 = sand.u32 %s58, 1
        %s422 = scalar_lea.sflag [#allocation3], %s421
        %s423 = sand.u32 %s58, 1
        %s424 = smul.addr %s423, 1024
        %s425 = scalar_lea.vmem [#allocation2], %s424
        %p426 = pneg %p71
        %p427 = pneg %p68
        %p428 = pneg %p92
        %p429 = pneg %p89
        %p430 = pneg %p113
        %p431 = pneg %p110
        %p432 = pneg %p134
        %p433 = pneg %p131
        %p434 = pneg %p155
        %p435 = pneg %p152
        %p436 = pneg %p176
        %p437 = pneg %p173
        %p438 = pneg %p197
        %p439 = pneg %p194
        %p440 = pneg %p225
        %p441 = pneg %p222
        %s442 = sand.u32 %s212, 1
        %s443 = scalar_lea.sflag [#allocation4], %s442
        %s444 = sand.u32 %s212, 1
        %s445 = smul.addr %s444, 8
        %s446 = scalar_lea.vmem [#allocation8], %s445
        %p447 = pneg %p251
        %p448 = pneg %p248
        %p449 = scmp.lt.s32.totalorder %s36, 1
        %s450 = scalar_select %p449, %s36, 1
        %s451 = smul.addr %s450, 2
        %s452 = scalar_lea.vmem %s8, %s451
        %p453 = pneg %p277
        %p454 = pneg %p274
        %p455 = scmp.lt.s32.totalorder %s36, 1
        %s456 = scalar_select %p455, %s36, 1
        %s457 = smul.addr %s456, 2
        %s458 = scalar_lea.vmem %s9, %s457
        %p459 = pneg %p303
        %p460 = pneg %p300
        %s461 = sand.u32 %s290, 1
        %s462 = scalar_lea.sflag [#allocation10], %s461
        %s463 = sand.u32 %s290, 1
        %s464 = smul.addr %s463, 2
        %s465 = scalar_lea.vmem [#allocation9], %s464
        %s466 = sadd.s32 %s36, %s37
        %p467 = scmp.lt.s32.totalorder %s466, 0
        %s468 = scalar_select %p467, %s466, 0
        %s469 = smul.u32 64, %s468
        %s470 = ssub.s32 38, %s469
        %s471 = smul.u32 8, %s470
        %s472 = smul.u32 %s471, 2
        %s473 = sadd.s32 %s36, %s37
        %s474 = smul.u32 4, %s473
        %p475 = scmp.lt.s32.totalorder %s36, 1
        %s476 = scalar_select %p475, %s36, 1
        %s477 = smul.addr %s476, 2
        %s478 = scalar_lea.vmem %s8, %s477
        %p479 = scmp.lt.s32.totalorder %s36, 1
        %s480 = scalar_select %p479, %s36, 1
        %s481 = smul.addr %s480, 2
        %s482 = scalar_lea.vmem %s9, %s481
        %s483 = sadd.s32 %s36, %s37
        %p484 = scmp.eq.s32.totalorder %s37, 0
        // Predicated region
        $region61: #{tpu_custom_call.1} parent=47 // pred_check
          %p485 = pneg %p484
        $region62: #{tpu_custom_call.1} parent=47 // pred_check_branch
          %487 = sbr.rel (%p485) target = $region64
        $region63: #{tpu_custom_call.1} parent=47 // pred_region
          %vm488 = vcmask 1024
          %489 = vst.msk [vmem:[%s478] sm:$0x3] %vm488, -inf
          %490 = vst.msk [vmem:[%s482] sm:$0x3] %vm488, 0.0
          %491 = vst [vmem:[%s465] sm:$0x3] 0.0
        $region64: #{tpu_custom_call.1} parent=47 // pred_fallthru
          _
        %v492 = vlaneseq
        %v493 = vshrl.u32 %v492, 7
        %v494 = vadd.s32 %v493, 8
        %v495 = vadd.s32 %v493, 16
        %v496 = vadd.s32 %v493, 24
        %v497 = vadd.s32 %v493, 32
        %v498 = vadd.s32 %v493, 40
        %v499 = vadd.s32 %v493, 48
        %v500 = vadd.s32 %v493, 56
        %v501 = vadd.s32 %v493, 64
        %v502 = vadd.s32 %v493, 72
        %v503 = vadd.s32 %v493, 80
        %v504 = vadd.s32 %v493, 88
        %v505 = vadd.s32 %v493, 96
        %v506 = vadd.s32 %v493, 104
        %v507 = vadd.s32 %v493, 112
        %v508 = vadd.s32 %v493, 120
        %v509 = vadd.s32 %v493, 128
        %v510 = vadd.s32 %v493, 136
        %v511 = vadd.s32 %v493, 144
        %v512 = vadd.s32 %v493, 152
        %v513 = vadd.s32 %v493, 160
        %v514 = vadd.s32 %v493, 168
        %v515 = vadd.s32 %v493, 176
        %v516 = vadd.s32 %v493, 184
        %v517 = vadd.s32 %v493, 192
        %v518 = vadd.s32 %v493, 200
        %v519 = vadd.s32 %v493, 208
        %v520 = vadd.s32 %v493, 216
        %v521 = vadd.s32 %v493, 224
        %v522 = vadd.s32 %v493, 232
        %v523 = vadd.s32 %v493, 240
        %v524 = vadd.s32 %v493, 248
        %v525 = vadd.s32 %v493, 256
        %v526 = vadd.s32 %v493, 264
        %v527 = vadd.s32 %v493, 272
        %v528 = vadd.s32 %v493, 280
        %v529 = vadd.s32 %v493, 288
        %v530 = vadd.s32 %v493, 296
        %v531 = vadd.s32 %v493, 304
        %v532 = vadd.s32 %v493, 312
        %v533 = vadd.s32 %v493, 320
        %v534 = vadd.s32 %v493, 328
        %v535 = vadd.s32 %v493, 336
        %v536 = vadd.s32 %v493, 344
        %v537 = vadd.s32 %v493, 352
        %v538 = vadd.s32 %v493, 360
        %v539 = vadd.s32 %v493, 368
        %v540 = vadd.s32 %v493, 376
        %v541 = vadd.s32 %v493, 384
        %v542 = vadd.s32 %v493, 392
        %v543 = vadd.s32 %v493, 400
        %v544 = vadd.s32 %v493, 408
        %v545 = vadd.s32 %v493, 416
        %v546 = vadd.s32 %v493, 424
        %v547 = vadd.s32 %v493, 432
        %v548 = vadd.s32 %v493, 440
        %v549 = vadd.s32 %v493, 448
        %v550 = vadd.s32 %v493, 456
        %v551 = vadd.s32 %v493, 464
        %v552 = vadd.s32 %v493, 472
        %v553 = vadd.s32 %v493, 480
        %v554 = vadd.s32 %v493, 488
        %v555 = vadd.s32 %v493, 496
        %v556 = vadd.s32 %v493, 504
        %s557 = smul.u32 %s483, 512
        %v558 = vstv %s557
        %v559 = vadd.s32 %v558, %v493
        %v560 = vadd.s32 %v558, %v494
        %v561 = vadd.s32 %v558, %v495
        %v562 = vadd.s32 %v558, %v496
        %v563 = vadd.s32 %v558, %v497
        %v564 = vadd.s32 %v558, %v498
        %v565 = vadd.s32 %v558, %v499
        %v566 = vadd.s32 %v558, %v500
        %v567 = vadd.s32 %v558, %v501
        %v568 = vadd.s32 %v558, %v502
        %v569 = vadd.s32 %v558, %v503
        %v570 = vadd.s32 %v558, %v504
        %v571 = vadd.s32 %v558, %v505
        %v572 = vadd.s32 %v558, %v506
        %v573 = vadd.s32 %v558, %v507
        %v574 = vadd.s32 %v558, %v508
        %v575 = vadd.s32 %v558, %v509
        %v576 = vadd.s32 %v558, %v510
        %v577 = vadd.s32 %v558, %v511
        %v578 = vadd.s32 %v558, %v512
        %v579 = vadd.s32 %v558, %v513
        %v580 = vadd.s32 %v558, %v514
        %v581 = vadd.s32 %v558, %v515
        %v582 = vadd.s32 %v558, %v516
        %v583 = vadd.s32 %v558, %v517
        %v584 = vadd.s32 %v558, %v518
        %v585 = vadd.s32 %v558, %v519
        %v586 = vadd.s32 %v558, %v520
        %v587 = vadd.s32 %v558, %v521
        %v588 = vadd.s32 %v558, %v522
        %v589 = vadd.s32 %v558, %v523
        %v590 = vadd.s32 %v558, %v524
        %v591 = vadd.s32 %v558, %v525
        %v592 = vadd.s32 %v558, %v526
        %v593 = vadd.s32 %v558, %v527
        %v594 = vadd.s32 %v558, %v528
        %v595 = vadd.s32 %v558, %v529
        %v596 = vadd.s32 %v558, %v530
        %v597 = vadd.s32 %v558, %v531
        %v598 = vadd.s32 %v558, %v532
        %v599 = vadd.s32 %v558, %v533
        %v600 = vadd.s32 %v558, %v534
        %v601 = vadd.s32 %v558, %v535
        %v602 = vadd.s32 %v558, %v536
        %v603 = vadd.s32 %v558, %v537
        %v604 = vadd.s32 %v558, %v538
        %v605 = vadd.s32 %v558, %v539
        %v606 = vadd.s32 %v558, %v540
        %v607 = vadd.s32 %v558, %v541
        %v608 = vadd.s32 %v558, %v542
        %v609 = vadd.s32 %v558, %v543
        %v610 = vadd.s32 %v558, %v544
        %v611 = vadd.s32 %v558, %v545
        %v612 = vadd.s32 %v558, %v546
        %v613 = vadd.s32 %v558, %v547
        %v614 = vadd.s32 %v558, %v548
        %v615 = vadd.s32 %v558, %v549
        %v616 = vadd.s32 %v558, %v550
        %v617 = vadd.s32 %v558, %v551
        %v618 = vadd.s32 %v558, %v552
        %v619 = vadd.s32 %v558, %v553
        %v620 = vadd.s32 %v558, %v554
        %v621 = vadd.s32 %v558, %v555
        %v622 = vadd.s32 %v558, %v556
        %vm623 = vcmp.lt.s32.totalorder %v559, 300
        %vm624 = vcmp.lt.s32.totalorder %v560, 300
        %vm625 = vcmp.lt.s32.totalorder %v561, 300
        %vm626 = vcmp.lt.s32.totalorder %v562, 300
        %vm627 = vcmp.lt.s32.totalorder %v563, 300
        %vm628 = vcmp.lt.s32.totalorder %v564, 300
        %vm629 = vcmp.lt.s32.totalorder %v565, 300
        %vm630 = vcmp.lt.s32.totalorder %v566, 300
        %vm631 = vcmp.lt.s32.totalorder %v567, 300
        %vm632 = vcmp.lt.s32.totalorder %v568, 300
        %vm633 = vcmp.lt.s32.totalorder %v569, 300
        %vm634 = vcmp.lt.s32.totalorder %v570, 300
        %vm635 = vcmp.lt.s32.totalorder %v571, 300
        %vm636 = vcmp.lt.s32.totalorder %v572, 300
        %vm637 = vcmp.lt.s32.totalorder %v573, 300
        %vm638 = vcmp.lt.s32.totalorder %v574, 300
        %vm639 = vcmp.lt.s32.totalorder %v575, 300
        %vm640 = vcmp.lt.s32.totalorder %v576, 300
        %vm641 = vcmp.lt.s32.totalorder %v577, 300
        %vm642 = vcmp.lt.s32.totalorder %v578, 300
        %vm643 = vcmp.lt.s32.totalorder %v579, 300
        %vm644 = vcmp.lt.s32.totalorder %v580, 300
        %vm645 = vcmp.lt.s32.totalorder %v581, 300
        %vm646 = vcmp.lt.s32.totalorder %v582, 300
        %vm647 = vcmp.lt.s32.totalorder %v583, 300
        %vm648 = vcmp.lt.s32.totalorder %v584, 300
        %vm649 = vcmp.lt.s32.totalorder %v585, 300
        %vm650 = vcmp.lt.s32.totalorder %v586, 300
        %vm651 = vcmp.lt.s32.totalorder %v587, 300
        %vm652 = vcmp.lt.s32.totalorder %v588, 300
        %vm653 = vcmp.lt.s32.totalorder %v589, 300
        %vm654 = vcmp.lt.s32.totalorder %v590, 300
        %vm655 = vcmp.lt.s32.totalorder %v591, 300
        %vm656 = vcmp.lt.s32.totalorder %v592, 300
        %vm657 = vcmp.lt.s32.totalorder %v593, 300
        %vm658 = vcmp.lt.s32.totalorder %v594, 300
        %vm659 = vcmp.lt.s32.totalorder %v595, 300
        %vm660 = vcmp.lt.s32.totalorder %v596, 300
        %vm661 = vcmp.lt.s32.totalorder %v597, 300
        %vm662 = vcmp.lt.s32.totalorder %v598, 300
        %vm663 = vcmp.lt.s32.totalorder %v599, 300
        %vm664 = vcmp.lt.s32.totalorder %v600, 300
        %vm665 = vcmp.lt.s32.totalorder %v601, 300
        %vm666 = vcmp.lt.s32.totalorder %v602, 300
        %vm667 = vcmp.lt.s32.totalorder %v603, 300
        %vm668 = vcmp.lt.s32.totalorder %v604, 300
        %vm669 = vcmp.lt.s32.totalorder %v605, 300
        %vm670 = vcmp.lt.s32.totalorder %v606, 300
        %vm671 = vcmp.lt.s32.totalorder %v607, 300
        %vm672 = vcmp.lt.s32.totalorder %v608, 300
        %vm673 = vcmp.lt.s32.totalorder %v609, 300
        %vm674 = vcmp.lt.s32.totalorder %v610, 300
        %vm675 = vcmp.lt.s32.totalorder %v611, 300
        %vm676 = vcmp.lt.s32.totalorder %v612, 300
        %vm677 = vcmp.lt.s32.totalorder %v613, 300
        %vm678 = vcmp.lt.s32.totalorder %v614, 300
        %vm679 = vcmp.lt.s32.totalorder %v615, 300
        %vm680 = vcmp.lt.s32.totalorder %v616, 300
        %vm681 = vcmp.lt.s32.totalorder %v617, 300
        %vm682 = vcmp.lt.s32.totalorder %v618, 300
        %vm683 = vcmp.lt.s32.totalorder %v619, 300
        %vm684 = vcmp.lt.s32.totalorder %v620, 300
        %vm685 = vcmp.lt.s32.totalorder %v621, 300
        %vm686 = vcmp.lt.s32.totalorder %v622, 300
        %v687 = vld [vmem:[%s405] sm:$0xff]
        %v688 = vld [vmem:[%s405 + $0x8] sm:$0xff]
        %v689 = vld [vmem:[%s405 + $0x10] sm:$0xff]
        %v690 = vld [vmem:[%s405 + $0x18] sm:$0xff]
        %v691 = vld [vmem:[%s405 + $0x20] sm:$0xff]
        %v692 = vld [vmem:[%s405 + $0x28] sm:$0xff]
        %v693 = vld [vmem:[%s405 + $0x30] sm:$0xff]
        %v694 = vld [vmem:[%s405 + $0x38] sm:$0xff]
        %v695 = vld [vmem:[%s405 + $0x40] sm:$0xff]
        %v696 = vld [vmem:[%s405 + $0x48] sm:$0xff]
        %v697 = vld [vmem:[%s405 + $0x50] sm:$0xff]
        %v698 = vld [vmem:[%s405 + $0x58] sm:$0xff]
        %v699 = vld [vmem:[%s405 + $0x60] sm:$0xff]
        %v700 = vld [vmem:[%s405 + $0x68] sm:$0xff]
        %v701 = vld [vmem:[%s405 + $0x70] sm:$0xff]
        %v702 = vld [vmem:[%s405 + $0x78] sm:$0xff]
        %v703 = vld [vmem:[%s405 + $0x80] sm:$0xff]
        %v704 = vld [vmem:[%s405 + $0x88] sm:$0xff]
        %v705 = vld [vmem:[%s405 + $0x90] sm:$0xff]
        %v706 = vld [vmem:[%s405 + $0x98] sm:$0xff]
        %v707 = vld [vmem:[%s405 + $0xa0] sm:$0xff]
        %v708 = vld [vmem:[%s405 + $0xa8] sm:$0xff]
        %v709 = vld [vmem:[%s405 + $0xb0] sm:$0xff]
        %v710 = vld [vmem:[%s405 + $0xb8] sm:$0xff]
        %v711 = vld [vmem:[%s405 + $0xc0] sm:$0xff]
        %v712 = vld [vmem:[%s405 + $0xc8] sm:$0xff]
        %v713 = vld [vmem:[%s405 + $0xd0] sm:$0xff]
        %v714 = vld [vmem:[%s405 + $0xd8] sm:$0xff]
        %v715 = vld [vmem:[%s405 + $0xe0] sm:$0xff]
        %v716 = vld [vmem:[%s405 + $0xe8] sm:$0xff]
        %v717 = vld [vmem:[%s405 + $0xf0] sm:$0xff]
        %v718 = vld [vmem:[%s405 + $0xf8] sm:$0xff]
        %v719 = vld [vmem:[%s405 + $0x100] sm:$0xff]
        %v720 = vld [vmem:[%s405 + $0x108] sm:$0xff]
        %v721 = vld [vmem:[%s405 + $0x110] sm:$0xff]
        %v722 = vld [vmem:[%s405 + $0x118] sm:$0xff]
        %v723 = vld [vmem:[%s405 + $0x120] sm:$0xff]
        %v724 = vld [vmem:[%s405 + $0x128] sm:$0xff]
        %v725 = vld [vmem:[%s405 + $0x130] sm:$0xff]
        %v726 = vld [vmem:[%s405 + $0x138] sm:$0xff]
        %v727 = vld [vmem:[%s405 + $0x140] sm:$0xff]
        %v728 = vld [vmem:[%s405 + $0x148] sm:$0xff]
        %v729 = vld [vmem:[%s405 + $0x150] sm:$0xff]
        %v730 = vld [vmem:[%s405 + $0x158] sm:$0xff]
        %v731 = vld [vmem:[%s405 + $0x160] sm:$0xff]
        %v732 = vld [vmem:[%s405 + $0x168] sm:$0xff]
        %v733 = vld [vmem:[%s405 + $0x170] sm:$0xff]
        %v734 = vld [vmem:[%s405 + $0x178] sm:$0xff]
        %v735 = vld [vmem:[%s405 + $0x180] sm:$0xff]
        %v736 = vld [vmem:[%s405 + $0x188] sm:$0xff]
        %v737 = vld [vmem:[%s405 + $0x190] sm:$0xff]
        %v738 = vld [vmem:[%s405 + $0x198] sm:$0xff]
        %v739 = vld [vmem:[%s405 + $0x1a0] sm:$0xff]
        %v740 = vld [vmem:[%s405 + $0x1a8] sm:$0xff]
        %v741 = vld [vmem:[%s405 + $0x1b0] sm:$0xff]
        %v742 = vld [vmem:[%s405 + $0x1b8] sm:$0xff]
        %v743 = vld [vmem:[%s405 + $0x1c0] sm:$0xff]
        %v744 = vld [vmem:[%s405 + $0x1c8] sm:$0xff]
        %v745 = vld [vmem:[%s405 + $0x1d0] sm:$0xff]
        %v746 = vld [vmem:[%s405 + $0x1d8] sm:$0xff]
        %v747 = vld [vmem:[%s405 + $0x1e0] sm:$0xff]
        %v748 = vld [vmem:[%s405 + $0x1e8] sm:$0xff]
        %v749 = vld [vmem:[%s405 + $0x1f0] sm:$0xff]
        %v750 = vld [vmem:[%s405 + $0x1f8] sm:$0xff]
        %v751 = vld [vmem:[%s405 + $0x200] sm:$0xff]
        %v752 = vld [vmem:[%s405 + $0x208] sm:$0xff]
        %v753 = vld [vmem:[%s405 + $0x210] sm:$0xff]
        %v754 = vld [vmem:[%s405 + $0x218] sm:$0xff]
        %v755 = vld [vmem:[%s405 + $0x220] sm:$0xff]
        %v756 = vld [vmem:[%s405 + $0x228] sm:$0xff]
        %v757 = vld [vmem:[%s405 + $0x230] sm:$0xff]
        %v758 = vld [vmem:[%s405 + $0x238] sm:$0xff]
        %v759 = vld [vmem:[%s405 + $0x240] sm:$0xff]
        %v760 = vld [vmem:[%s405 + $0x248] sm:$0xff]
        %v761 = vld [vmem:[%s405 + $0x250] sm:$0xff]
        %v762 = vld [vmem:[%s405 + $0x258] sm:$0xff]
        %v763 = vld [vmem:[%s405 + $0x260] sm:$0xff]
        %v764 = vld [vmem:[%s405 + $0x268] sm:$0xff]
        %v765 = vld [vmem:[%s405 + $0x270] sm:$0xff]
        %v766 = vld [vmem:[%s405 + $0x278] sm:$0xff]
        %v767 = vld [vmem:[%s405 + $0x280] sm:$0xff]
        %v768 = vld [vmem:[%s405 + $0x288] sm:$0xff]
        %v769 = vld [vmem:[%s405 + $0x290] sm:$0xff]
        %v770 = vld [vmem:[%s405 + $0x298] sm:$0xff]
        %v771 = vld [vmem:[%s405 + $0x2a0] sm:$0xff]
        %v772 = vld [vmem:[%s405 + $0x2a8] sm:$0xff]
        %v773 = vld [vmem:[%s405 + $0x2b0] sm:$0xff]
        %v774 = vld [vmem:[%s405 + $0x2b8] sm:$0xff]
        %v775 = vld [vmem:[%s405 + $0x2c0] sm:$0xff]
        %v776 = vld [vmem:[%s405 + $0x2c8] sm:$0xff]
        %v777 = vld [vmem:[%s405 + $0x2d0] sm:$0xff]
        %v778 = vld [vmem:[%s405 + $0x2d8] sm:$0xff]
        %v779 = vld [vmem:[%s405 + $0x2e0] sm:$0xff]
        %v780 = vld [vmem:[%s405 + $0x2e8] sm:$0xff]
        %v781 = vld [vmem:[%s405 + $0x2f0] sm:$0xff]
        %v782 = vld [vmem:[%s405 + $0x2f8] sm:$0xff]
        %v783 = vld [vmem:[%s405 + $0x300] sm:$0xff]
        %v784 = vld [vmem:[%s405 + $0x308] sm:$0xff]
        %v785 = vld [vmem:[%s405 + $0x310] sm:$0xff]
        %v786 = vld [vmem:[%s405 + $0x318] sm:$0xff]
        %v787 = vld [vmem:[%s405 + $0x320] sm:$0xff]
        %v788 = vld [vmem:[%s405 + $0x328] sm:$0xff]
        %v789 = vld [vmem:[%s405 + $0x330] sm:$0xff]
        %v790 = vld [vmem:[%s405 + $0x338] sm:$0xff]
        %v791 = vld [vmem:[%s405 + $0x340] sm:$0xff]
        %v792 = vld [vmem:[%s405 + $0x348] sm:$0xff]
        %v793 = vld [vmem:[%s405 + $0x350] sm:$0xff]
        %v794 = vld [vmem:[%s405 + $0x358] sm:$0xff]
        %v795 = vld [vmem:[%s405 + $0x360] sm:$0xff]
        %v796 = vld [vmem:[%s405 + $0x368] sm:$0xff]
        %v797 = vld [vmem:[%s405 + $0x370] sm:$0xff]
        %v798 = vld [vmem:[%s405 + $0x378] sm:$0xff]
        %v799 = vld [vmem:[%s405 + $0x380] sm:$0xff]
        %v800 = vld [vmem:[%s405 + $0x388] sm:$0xff]
        %v801 = vld [vmem:[%s405 + $0x390] sm:$0xff]
        %v802 = vld [vmem:[%s405 + $0x398] sm:$0xff]
        %v803 = vld [vmem:[%s405 + $0x3a0] sm:$0xff]
        %v804 = vld [vmem:[%s405 + $0x3a8] sm:$0xff]
        %v805 = vld [vmem:[%s405 + $0x3b0] sm:$0xff]
        %v806 = vld [vmem:[%s405 + $0x3b8] sm:$0xff]
        %v807 = vld [vmem:[%s405 + $0x3c0] sm:$0xff]
        %v808 = vld [vmem:[%s405 + $0x3c8] sm:$0xff]
        %v809 = vld [vmem:[%s405 + $0x3d0] sm:$0xff]
        %v810 = vld [vmem:[%s405 + $0x3d8] sm:$0xff]
        %v811 = vld [vmem:[%s405 + $0x3e0] sm:$0xff]
        %v812 = vld [vmem:[%s405 + $0x3e8] sm:$0xff]
        %v813 = vld [vmem:[%s405 + $0x3f0] sm:$0xff]
        %v814 = vld [vmem:[%s405 + $0x3f8] sm:$0xff]
        %v815 = vpack.c.bf16 %v689, %v687
        %v816 = vpack.c.bf16 %v690, %v688
        %v817 = vpack.c.bf16 %v693, %v691
        %v818 = vpack.c.bf16 %v694, %v692
        %v819 = vpack.c.bf16 %v697, %v695
        %v820 = vpack.c.bf16 %v698, %v696
        %v821 = vpack.c.bf16 %v701, %v699
        %v822 = vpack.c.bf16 %v702, %v700
        %v823 = vpack.c.bf16 %v705, %v703
        %v824 = vpack.c.bf16 %v706, %v704
        %v825 = vpack.c.bf16 %v709, %v707
        %v826 = vpack.c.bf16 %v710, %v708
        %v827 = vpack.c.bf16 %v713, %v711
        %v828 = vpack.c.bf16 %v714, %v712
        %v829 = vpack.c.bf16 %v717, %v715
        %v830 = vpack.c.bf16 %v718, %v716
        %v831 = vpack.c.bf16 %v721, %v719
        %v832 = vpack.c.bf16 %v722, %v720
        %v833 = vpack.c.bf16 %v725, %v723
        %v834 = vpack.c.bf16 %v726, %v724
        %v835 = vpack.c.bf16 %v729, %v727
        %v836 = vpack.c.bf16 %v730, %v728
        %v837 = vpack.c.bf16 %v733, %v731
        %v838 = vpack.c.bf16 %v734, %v732
        %v839 = vpack.c.bf16 %v737, %v735
        %v840 = vpack.c.bf16 %v738, %v736
        %v841 = vpack.c.bf16 %v741, %v739
        %v842 = vpack.c.bf16 %v742, %v740
        %v843 = vpack.c.bf16 %v745, %v743
        %v844 = vpack.c.bf16 %v746, %v744
        %v845 = vpack.c.bf16 %v749, %v747
        %v846 = vpack.c.bf16 %v750, %v748
        %v847 = vpack.c.bf16 %v753, %v751
        %v848 = vpack.c.bf16 %v754, %v752
        %v849 = vpack.c.bf16 %v757, %v755
        %v850 = vpack.c.bf16 %v758, %v756
        %v851 = vpack.c.bf16 %v761, %v759
        %v852 = vpack.c.bf16 %v762, %v760
        %v853 = vpack.c.bf16 %v765, %v763
        %v854 = vpack.c.bf16 %v766, %v764
        %v855 = vpack.c.bf16 %v769, %v767
        %v856 = vpack.c.bf16 %v770, %v768
        %v857 = vpack.c.bf16 %v773, %v771
        %v858 = vpack.c.bf16 %v774, %v772
        %v859 = vpack.c.bf16 %v777, %v775
        %v860 = vpack.c.bf16 %v778, %v776
        %v861 = vpack.c.bf16 %v781, %v779
        %v862 = vpack.c.bf16 %v782, %v780
        %v863 = vpack.c.bf16 %v785, %v783
        %v864 = vpack.c.bf16 %v786, %v784
        %v865 = vpack.c.bf16 %v789, %v787
        %v866 = vpack.c.bf16 %v790, %v788
        %v867 = vpack.c.bf16 %v793, %v791
        %v868 = vpack.c.bf16 %v794, %v792
        %v869 = vpack.c.bf16 %v797, %v795
        %v870 = vpack.c.bf16 %v798, %v796
        %v871 = vpack.c.bf16 %v801, %v799
        %v872 = vpack.c.bf16 %v802, %v800
        %v873 = vpack.c.bf16 %v805, %v803
        %v874 = vpack.c.bf16 %v806, %v804
        %v875 = vpack.c.bf16 %v809, %v807
        %v876 = vpack.c.bf16 %v810, %v808
        %v877 = vpack.c.bf16 %v813, %v811
        %v878 = vpack.c.bf16 %v814, %v812
        %v879 = vld [vmem:[#allocation5] sm:$0xf]
        %v880 = vld [vmem:[#allocation5 + $0x4] sm:$0xf]
        %v881 = vld [vmem:[#allocation5 + $0x8] sm:$0xf]
        %v882 = vld [vmem:[#allocation5 + $0xc] sm:$0xf]
        %v883 = vld [vmem:[#allocation5 + $0x10] sm:$0xf]
        %v884 = vld [vmem:[#allocation5 + $0x14] sm:$0xf]
        %v885 = vld [vmem:[#allocation5 + $0x18] sm:$0xf]
        %v886 = vld [vmem:[#allocation5 + $0x1c] sm:$0xf]
        %v887 = vld [vmem:[#allocation5 + $0x20] sm:$0xf]
        %v888 = vld [vmem:[#allocation5 + $0x24] sm:$0xf]
        %v889 = vld [vmem:[#allocation5 + $0x28] sm:$0xf]
        %v890 = vld [vmem:[#allocation5 + $0x2c] sm:$0xf]
        %v891 = vld [vmem:[#allocation5 + $0x30] sm:$0xf]
        %v892 = vld [vmem:[#allocation5 + $0x34] sm:$0xf]
        %v893 = vld [vmem:[#allocation5 + $0x38] sm:$0xf]
        %v894 = vld [vmem:[#allocation5 + $0x3c] sm:$0xf]
        %v895 = vld [vmem:[#allocation5 + $0x40] sm:$0xf]
        %v896 = vld [vmem:[#allocation5 + $0x44] sm:$0xf]
        %v897 = vld [vmem:[#allocation5 + $0x48] sm:$0xf]
        %v898 = vld [vmem:[#allocation5 + $0x4c] sm:$0xf]
        %v899 = vld [vmem:[#allocation5 + $0x50] sm:$0xf]
        %v900 = vld [vmem:[#allocation5 + $0x54] sm:$0xf]
        %v901 = vld [vmem:[#allocation5 + $0x58] sm:$0xf]
        %v902 = vld [vmem:[#allocation5 + $0x5c] sm:$0xf]
        %v903 = vld [vmem:[#allocation5 + $0x60] sm:$0xf]
        %v904 = vld [vmem:[#allocation5 + $0x64] sm:$0xf]
        %v905 = vld [vmem:[#allocation5 + $0x68] sm:$0xf]
        %v906 = vld [vmem:[#allocation5 + $0x6c] sm:$0xf]
        %v907 = vld [vmem:[#allocation5 + $0x70] sm:$0xf]
        %v908 = vld [vmem:[#allocation5 + $0x74] sm:$0xf]
        %v909 = vld [vmem:[#allocation5 + $0x78] sm:$0xf]
        %v910 = vld [vmem:[#allocation5 + $0x7c] sm:$0xf]
        %v911 = vld [vmem:[%s2] sm:$0x1]
        %v913 = vperm.slane %v911, 0
        %v947 = vunpack.c.l.b16 %v879
        %v948 = vunpack.c.l.b16 %v880
        %v949 = vunpack.c.l.b16 %v881
        %v950 = vunpack.c.l.b16 %v882
        %v951 = vunpack.c.l.b16 %v883
        %v952 = vunpack.c.l.b16 %v884
        %v953 = vunpack.c.l.b16 %v885
        %v954 = vunpack.c.l.b16 %v886
        %v955 = vunpack.c.l.b16 %v887
        %v956 = vunpack.c.l.b16 %v888
        %v957 = vunpack.c.l.b16 %v889
        %v958 = vunpack.c.l.b16 %v890
        %v959 = vunpack.c.l.b16 %v891
        %v960 = vunpack.c.l.b16 %v892
        %v961 = vunpack.c.l.b16 %v893
        %v962 = vunpack.c.l.b16 %v894
        %v963 = vunpack.c.l.b16 %v895
        %v964 = vunpack.c.l.b16 %v896
        %v965 = vunpack.c.l.b16 %v897
        %v966 = vunpack.c.l.b16 %v898
        %v967 = vunpack.c.l.b16 %v899
        %v968 = vunpack.c.l.b16 %v900
        %v969 = vunpack.c.l.b16 %v901
        %v970 = vunpack.c.l.b16 %v902
        %v971 = vunpack.c.l.b16 %v903
        %v972 = vunpack.c.l.b16 %v904
        %v973 = vunpack.c.l.b16 %v905
        %v974 = vunpack.c.l.b16 %v906
        %v975 = vunpack.c.l.b16 %v907
        %v976 = vunpack.c.l.b16 %v908
        %v977 = vunpack.c.l.b16 %v909
        %v978 = vunpack.c.l.b16 %v910
        %v979 = vpack.c.b16 %v948, %v947
        %v980 = vpack.c.b16 %v950, %v949
        %v981 = vpack.c.b16 %v952, %v951
        %v982 = vpack.c.b16 %v954, %v953
        %v983 = vpack.c.b16 %v956, %v955
        %v984 = vpack.c.b16 %v958, %v957
        %v985 = vpack.c.b16 %v960, %v959
        %v986 = vpack.c.b16 %v962, %v961
        %v987 = vpack.c.b16 %v964, %v963
        %v988 = vpack.c.b16 %v966, %v965
        %v989 = vpack.c.b16 %v968, %v967
        %v990 = vpack.c.b16 %v970, %v969
        %v991 = vpack.c.b16 %v972, %v971
        %v992 = vpack.c.b16 %v974, %v973
        %v993 = vpack.c.b16 %v976, %v975
        %v994 = vpack.c.b16 %v978, %v977
        %1011 = vmatpush.bf16.msra.mxu0 %v986
        %1012 = vmatpush.bf16.msra.mxu0 %v985
        %1013 = vmatpush.bf16.msra.mxu0 %v984
        %1014 = vmatpush.bf16.msra.mxu0 %v983
        %1015 = vmatpush.bf16.msra.mxu0 %v982
        %1016 = vmatpush.bf16.msra.mxu0 %v981
        %1017 = vmatpush.bf16.msra.mxu0 %v980
        %1018 = vmatpush.bf16.msra.mxu0 %v979
        %1019 = vmatmul.bf16.gmra.mxu0 %v815
        %v1020 = vpop.f32.mrf.mxu0
        %v1021 = vadd.f32 %v913, %v1020
        %v1022 = vpop.f32.mrf.mxu0
        %v1023 = vadd.f32 %v913, %v1022
        %1024 = vmatmul.bf16.gmra.mxu0 %v817
        %v1025 = vpop.f32.mrf.mxu0
        %v1026 = vadd.f32 %v913, %v1025
        %v1027 = vpop.f32.mrf.mxu0
        %v1028 = vadd.f32 %v913, %v1027
        %1029 = vmatmul.bf16.gmra.mxu0 %v819
        %v1030 = vpop.f32.mrf.mxu0
        %v1031 = vadd.f32 %v913, %v1030
        %v1032 = vpop.f32.mrf.mxu0
        %v1033 = vadd.f32 %v913, %v1032
        %1034 = vmatmul.bf16.gmra.mxu0 %v821
        %v1035 = vpop.f32.mrf.mxu0
        %v1036 = vadd.f32 %v913, %v1035
        %v1037 = vpop.f32.mrf.mxu0
        %v1038 = vadd.f32 %v913, %v1037
        %1039 = vmatmul.bf16.gmra.mxu0 %v823
        %v1040 = vpop.f32.mrf.mxu0
        %v1041 = vadd.f32 %v913, %v1040
        %v1042 = vpop.f32.mrf.mxu0
        %v1043 = vadd.f32 %v913, %v1042
        %1044 = vmatmul.bf16.gmra.mxu0 %v825
        %v1045 = vpop.f32.mrf.mxu0
        %v1046 = vadd.f32 %v913, %v1045
        %v1047 = vpop.f32.mrf.mxu0
        %v1048 = vadd.f32 %v913, %v1047
        %1049 = vmatmul.bf16.gmra.mxu0 %v827
        %v1050 = vpop.f32.mrf.mxu0
        %v1051 = vadd.f32 %v913, %v1050
        %v1052 = vpop.f32.mrf.mxu0
        %v1053 = vadd.f32 %v913, %v1052
        %1054 = vmatmul.bf16.gmra.mxu0 %v829
        %v1055 = vpop.f32.mrf.mxu0
        %v1056 = vadd.f32 %v913, %v1055
        %v1057 = vpop.f32.mrf.mxu0
        %v1058 = vadd.f32 %v913, %v1057
        %1059 = vmatmul.bf16.gmra.mxu0 %v831
        %v1060 = vpop.f32.mrf.mxu0
        %v1061 = vadd.f32 %v913, %v1060
        %v1062 = vpop.f32.mrf.mxu0
        %v1063 = vadd.f32 %v913, %v1062
        %1064 = vmatmul.bf16.gmra.mxu0 %v833
        %v1065 = vpop.f32.mrf.mxu0
        %v1066 = vadd.f32 %v913, %v1065
        %v1067 = vpop.f32.mrf.mxu0
        %v1068 = vadd.f32 %v913, %v1067
        %1069 = vmatmul.bf16.gmra.mxu0 %v835
        %v1070 = vpop.f32.mrf.mxu0
        %v1071 = vadd.f32 %v913, %v1070
        %v1072 = vpop.f32.mrf.mxu0
        %v1073 = vadd.f32 %v913, %v1072
        %1074 = vmatmul.bf16.gmra.mxu0 %v837
        %v1075 = vpop.f32.mrf.mxu0
        %v1076 = vadd.f32 %v913, %v1075
        %v1077 = vpop.f32.mrf.mxu0
        %v1078 = vadd.f32 %v913, %v1077
        %1079 = vmatmul.bf16.gmra.mxu0 %v839
        %v1080 = vpop.f32.mrf.mxu0
        %v1081 = vadd.f32 %v913, %v1080
        %v1082 = vpop.f32.mrf.mxu0
        %v1083 = vadd.f32 %v913, %v1082
        %1084 = vmatmul.bf16.gmra.mxu0 %v841
        %v1085 = vpop.f32.mrf.mxu0
        %v1086 = vadd.f32 %v913, %v1085
        %v1087 = vpop.f32.mrf.mxu0
        %v1088 = vadd.f32 %v913, %v1087
        %1089 = vmatmul.bf16.gmra.mxu0 %v843
        %v1090 = vpop.f32.mrf.mxu0
        %v1091 = vadd.f32 %v913, %v1090
        %v1092 = vpop.f32.mrf.mxu0
        %v1093 = vadd.f32 %v913, %v1092
        %1094 = vmatmul.bf16.gmra.mxu0 %v845
        %v1095 = vpop.f32.mrf.mxu0
        %v1096 = vadd.f32 %v913, %v1095
        %v1097 = vpop.f32.mrf.mxu0
        %v1098 = vadd.f32 %v913, %v1097
        %1099 = vmatmul.bf16.gmra.mxu0 %v847
        %v1100 = vpop.f32.mrf.mxu0
        %v1101 = vadd.f32 %v913, %v1100
        %v1102 = vpop.f32.mrf.mxu0
        %v1103 = vadd.f32 %v913, %v1102
        %1104 = vmatmul.bf16.gmra.mxu0 %v849
        %v1105 = vpop.f32.mrf.mxu0
        %v1106 = vadd.f32 %v913, %v1105
        %v1107 = vpop.f32.mrf.mxu0
        %v1108 = vadd.f32 %v913, %v1107
        %1109 = vmatmul.bf16.gmra.mxu0 %v851
        %v1110 = vpop.f32.mrf.mxu0
        %v1111 = vadd.f32 %v913, %v1110
        %v1112 = vpop.f32.mrf.mxu0
        %v1113 = vadd.f32 %v913, %v1112
        %1114 = vmatmul.bf16.gmra.mxu0 %v853
        %v1115 = vpop.f32.mrf.mxu0
        %v1116 = vadd.f32 %v913, %v1115
        %v1117 = vpop.f32.mrf.mxu0
        %v1118 = vadd.f32 %v913, %v1117
        %1119 = vmatmul.bf16.gmra.mxu0 %v855
        %v1120 = vpop.f32.mrf.mxu0
        %v1121 = vadd.f32 %v913, %v1120
        %v1122 = vpop.f32.mrf.mxu0
        %v1123 = vadd.f32 %v913, %v1122
        %1124 = vmatmul.bf16.gmra.mxu0 %v857
        %v1125 = vpop.f32.mrf.mxu0
        %v1126 = vadd.f32 %v913, %v1125
        %v1127 = vpop.f32.mrf.mxu0
        %v1128 = vadd.f32 %v913, %v1127
        %1129 = vmatmul.bf16.gmra.mxu0 %v859
        %v1130 = vpop.f32.mrf.mxu0
        %v1131 = vadd.f32 %v913, %v1130
        %v1132 = vpop.f32.mrf.mxu0
        %v1133 = vadd.f32 %v913, %v1132
        %1134 = vmatmul.bf16.gmra.mxu0 %v861
        %v1135 = vpop.f32.mrf.mxu0
        %v1136 = vadd.f32 %v913, %v1135
        %v1137 = vpop.f32.mrf.mxu0
        %v1138 = vadd.f32 %v913, %v1137
        %1139 = vmatmul.bf16.gmra.mxu0 %v863
        %v1140 = vpop.f32.mrf.mxu0
        %v1141 = vadd.f32 %v913, %v1140
        %v1142 = vpop.f32.mrf.mxu0
        %v1143 = vadd.f32 %v913, %v1142
        %1144 = vmatmul.bf16.gmra.mxu0 %v865
        %v1145 = vpop.f32.mrf.mxu0
        %v1146 = vadd.f32 %v913, %v1145
        %v1147 = vpop.f32.mrf.mxu0
        %v1148 = vadd.f32 %v913, %v1147
        %1149 = vmatmul.bf16.gmra.mxu0 %v867
        %v1150 = vpop.f32.mrf.mxu0
        %v1151 = vadd.f32 %v913, %v1150
        %v1152 = vpop.f32.mrf.mxu0
        %v1153 = vadd.f32 %v913, %v1152
        %1154 = vmatmul.bf16.gmra.mxu0 %v869
        %v1155 = vpop.f32.mrf.mxu0
        %v1156 = vadd.f32 %v913, %v1155
        %v1157 = vpop.f32.mrf.mxu0
        %v1158 = vadd.f32 %v913, %v1157
        %1159 = vmatmul.bf16.gmra.mxu0 %v871
        %v1160 = vpop.f32.mrf.mxu0
        %v1161 = vadd.f32 %v913, %v1160
        %v1162 = vpop.f32.mrf.mxu0
        %v1163 = vadd.f32 %v913, %v1162
        %1164 = vmatmul.bf16.gmra.mxu0 %v873
        %v1165 = vpop.f32.mrf.mxu0
        %v1166 = vadd.f32 %v913, %v1165
        %v1167 = vpop.f32.mrf.mxu0
        %v1168 = vadd.f32 %v913, %v1167
        %1169 = vmatmul.bf16.gmra.mxu0 %v875
        %v1170 = vpop.f32.mrf.mxu0
        %v1171 = vadd.f32 %v913, %v1170
        %v1172 = vpop.f32.mrf.mxu0
        %v1173 = vadd.f32 %v913, %v1172
        %1174 = vmatmul.bf16.gmra.mxu0 %v877
        %v1175 = vpop.f32.mrf.mxu0
        %v1176 = vadd.f32 %v913, %v1175
        %v1177 = vpop.f32.mrf.mxu0
        %v1178 = vadd.f32 %v913, %v1177
        %1179 = vdwg.mxu0
        %1180 = vmatpush.bf16.msra.mxu0 %v994
        %1181 = vmatpush.bf16.msra.mxu0 %v993
        %1182 = vmatpush.bf16.msra.mxu0 %v992
        %1183 = vmatpush.bf16.msra.mxu0 %v991
        %1184 = vmatpush.bf16.msra.mxu0 %v990
        %1185 = vmatpush.bf16.msra.mxu0 %v989
        %1186 = vmatpush.bf16.msra.mxu0 %v988
        %1187 = vmatpush.bf16.msra.mxu0 %v987
        %1188 = vmatmul.bf16.gmra.mxu0 %v816
        %v1189 = vpop.f32.mrf.mxu0
        %v1190 = vadd.f32 %v1021, %v1189
        %v1191 = vpop.f32.mrf.mxu0
        %v1192 = vadd.f32 %v1023, %v1191
        %1193 = vmatmul.bf16.gmra.mxu0 %v818
        %v1194 = vpop.f32.mrf.mxu0
        %v1195 = vadd.f32 %v1026, %v1194
        %v1196 = vpop.f32.mrf.mxu0
        %v1197 = vadd.f32 %v1028, %v1196
        %1198 = vmatmul.bf16.gmra.mxu0 %v820
        %v1199 = vpop.f32.mrf.mxu0
        %v1200 = vadd.f32 %v1031, %v1199
        %v1201 = vpop.f32.mrf.mxu0
        %v1202 = vadd.f32 %v1033, %v1201
        %1203 = vmatmul.bf16.gmra.mxu0 %v822
        %v1204 = vpop.f32.mrf.mxu0
        %v1205 = vadd.f32 %v1036, %v1204
        %v1206 = vpop.f32.mrf.mxu0
        %v1207 = vadd.f32 %v1038, %v1206
        %1208 = vmatmul.bf16.gmra.mxu0 %v824
        %v1209 = vpop.f32.mrf.mxu0
        %v1210 = vadd.f32 %v1041, %v1209
        %v1211 = vpop.f32.mrf.mxu0
        %v1212 = vadd.f32 %v1043, %v1211
        %1213 = vmatmul.bf16.gmra.mxu0 %v826
        %v1214 = vpop.f32.mrf.mxu0
        %v1215 = vadd.f32 %v1046, %v1214
        %v1216 = vpop.f32.mrf.mxu0
        %v1217 = vadd.f32 %v1048, %v1216
        %1218 = vmatmul.bf16.gmra.mxu0 %v828
        %v1219 = vpop.f32.mrf.mxu0
        %v1220 = vadd.f32 %v1051, %v1219
        %v1221 = vpop.f32.mrf.mxu0
        %v1222 = vadd.f32 %v1053, %v1221
        %1223 = vmatmul.bf16.gmra.mxu0 %v830
        %v1224 = vpop.f32.mrf.mxu0
        %v1225 = vadd.f32 %v1056, %v1224
        %v1226 = vpop.f32.mrf.mxu0
        %v1227 = vadd.f32 %v1058, %v1226
        %1228 = vmatmul.bf16.gmra.mxu0 %v832
        %v1229 = vpop.f32.mrf.mxu0
        %v1230 = vadd.f32 %v1061, %v1229
        %v1231 = vpop.f32.mrf.mxu0
        %v1232 = vadd.f32 %v1063, %v1231
        %1233 = vmatmul.bf16.gmra.mxu0 %v834
        %v1234 = vpop.f32.mrf.mxu0
        %v1235 = vadd.f32 %v1066, %v1234
        %v1236 = vpop.f32.mrf.mxu0
        %v1237 = vadd.f32 %v1068, %v1236
        %1238 = vmatmul.bf16.gmra.mxu0 %v836
        %v1239 = vpop.f32.mrf.mxu0
        %v1240 = vadd.f32 %v1071, %v1239
        %v1241 = vpop.f32.mrf.mxu0
        %v1242 = vadd.f32 %v1073, %v1241
        %1243 = vmatmul.bf16.gmra.mxu0 %v838
        %v1244 = vpop.f32.mrf.mxu0
        %v1245 = vadd.f32 %v1076, %v1244
        %v1246 = vpop.f32.mrf.mxu0
        %v1247 = vadd.f32 %v1078, %v1246
        %1248 = vmatmul.bf16.gmra.mxu0 %v840
        %v1249 = vpop.f32.mrf.mxu0
        %v1250 = vadd.f32 %v1081, %v1249
        %v1251 = vpop.f32.mrf.mxu0
        %v1252 = vadd.f32 %v1083, %v1251
        %1253 = vmatmul.bf16.gmra.mxu0 %v842
        %v1254 = vpop.f32.mrf.mxu0
        %v1255 = vadd.f32 %v1086, %v1254
        %v1256 = vpop.f32.mrf.mxu0
        %v1257 = vadd.f32 %v1088, %v1256
        %1258 = vmatmul.bf16.gmra.mxu0 %v844
        %v1259 = vpop.f32.mrf.mxu0
        %v1260 = vadd.f32 %v1091, %v1259
        %v1261 = vpop.f32.mrf.mxu0
        %v1262 = vadd.f32 %v1093, %v1261
        %1263 = vmatmul.bf16.gmra.mxu0 %v846
        %v1264 = vpop.f32.mrf.mxu0
        %v1265 = vadd.f32 %v1096, %v1264
        %v1266 = vpop.f32.mrf.mxu0
        %v1267 = vadd.f32 %v1098, %v1266
        %1268 = vmatmul.bf16.gmra.mxu0 %v848
        %v1269 = vpop.f32.mrf.mxu0
        %v1270 = vadd.f32 %v1101, %v1269
        %v1271 = vpop.f32.mrf.mxu0
        %v1272 = vadd.f32 %v1103, %v1271
        %1273 = vmatmul.bf16.gmra.mxu0 %v850
        %v1274 = vpop.f32.mrf.mxu0
        %v1275 = vadd.f32 %v1106, %v1274
        %v1276 = vpop.f32.mrf.mxu0
        %v1277 = vadd.f32 %v1108, %v1276
        %1278 = vmatmul.bf16.gmra.mxu0 %v852
        %v1279 = vpop.f32.mrf.mxu0
        %v1280 = vadd.f32 %v1111, %v1279
        %v1281 = vpop.f32.mrf.mxu0
        %v1282 = vadd.f32 %v1113, %v1281
        %1283 = vmatmul.bf16.gmra.mxu0 %v854
        %v1284 = vpop.f32.mrf.mxu0
        %v1285 = vadd.f32 %v1116, %v1284
        %v1286 = vpop.f32.mrf.mxu0
        %v1287 = vadd.f32 %v1118, %v1286
        %1288 = vmatmul.bf16.gmra.mxu0 %v856
        %v1289 = vpop.f32.mrf.mxu0
        %v1290 = vadd.f32 %v1121, %v1289
        %v1291 = vpop.f32.mrf.mxu0
        %v1292 = vadd.f32 %v1123, %v1291
        %1293 = vmatmul.bf16.gmra.mxu0 %v858
        %v1294 = vpop.f32.mrf.mxu0
        %v1295 = vadd.f32 %v1126, %v1294
        %v1296 = vpop.f32.mrf.mxu0
        %v1297 = vadd.f32 %v1128, %v1296
        %1298 = vmatmul.bf16.gmra.mxu0 %v860
        %v1299 = vpop.f32.mrf.mxu0
        %v1300 = vadd.f32 %v1131, %v1299
        %v1301 = vpop.f32.mrf.mxu0
        %v1302 = vadd.f32 %v1133, %v1301
        %1303 = vmatmul.bf16.gmra.mxu0 %v862
        %v1304 = vpop.f32.mrf.mxu0
        %v1305 = vadd.f32 %v1136, %v1304
        %v1306 = vpop.f32.mrf.mxu0
        %v1307 = vadd.f32 %v1138, %v1306
        %1308 = vmatmul.bf16.gmra.mxu0 %v864
        %v1309 = vpop.f32.mrf.mxu0
        %v1310 = vadd.f32 %v1141, %v1309
        %v1311 = vpop.f32.mrf.mxu0
        %v1312 = vadd.f32 %v1143, %v1311
        %1313 = vmatmul.bf16.gmra.mxu0 %v866
        %v1314 = vpop.f32.mrf.mxu0
        %v1315 = vadd.f32 %v1146, %v1314
        %v1316 = vpop.f32.mrf.mxu0
        %v1317 = vadd.f32 %v1148, %v1316
        %1318 = vmatmul.bf16.gmra.mxu0 %v868
        %v1319 = vpop.f32.mrf.mxu0
        %v1320 = vadd.f32 %v1151, %v1319
        %v1321 = vpop.f32.mrf.mxu0
        %v1322 = vadd.f32 %v1153, %v1321
        %1323 = vmatmul.bf16.gmra.mxu0 %v870
        %v1324 = vpop.f32.mrf.mxu0
        %v1325 = vadd.f32 %v1156, %v1324
        %v1326 = vpop.f32.mrf.mxu0
        %v1327 = vadd.f32 %v1158, %v1326
        %1328 = vmatmul.bf16.gmra.mxu0 %v872
        %v1329 = vpop.f32.mrf.mxu0
        %v1330 = vadd.f32 %v1161, %v1329
        %v1331 = vpop.f32.mrf.mxu0
        %v1332 = vadd.f32 %v1163, %v1331
        %1333 = vmatmul.bf16.gmra.mxu0 %v874
        %v1334 = vpop.f32.mrf.mxu0
        %v1335 = vadd.f32 %v1166, %v1334
        %v1336 = vpop.f32.mrf.mxu0
        %v1337 = vadd.f32 %v1168, %v1336
        %1338 = vmatmul.bf16.gmra.mxu0 %v876
        %v1339 = vpop.f32.mrf.mxu0
        %v1340 = vadd.f32 %v1171, %v1339
        %v1341 = vpop.f32.mrf.mxu0
        %v1342 = vadd.f32 %v1173, %v1341
        %1343 = vmatmul.bf16.gmra.mxu0 %v878
        %v1344 = vpop.f32.mrf.mxu0
        %v1345 = vadd.f32 %v1176, %v1344
        %v1346 = vpop.f32.mrf.mxu0
        %v1347 = vadd.f32 %v1178, %v1346
        %1348 = vdwg.mxu0
        %v1349 = vmax.f32 %v1190, 0.0
        %v1350 = vmax.f32 %v1192, 0.0
        %v1351 = vmax.f32 %v1195, 0.0
        %v1352 = vmax.f32 %v1197, 0.0
        %v1353 = vmax.f32 %v1200, 0.0
        %v1354 = vmax.f32 %v1202, 0.0
        %v1355 = vmax.f32 %v1205, 0.0
        %v1356 = vmax.f32 %v1207, 0.0
        %v1357 = vmax.f32 %v1210, 0.0
        %v1358 = vmax.f32 %v1212, 0.0
        %v1359 = vmax.f32 %v1215, 0.0
        %v1360 = vmax.f32 %v1217, 0.0
        %v1361 = vmax.f32 %v1220, 0.0
        %v1362 = vmax.f32 %v1222, 0.0
        %v1363 = vmax.f32 %v1225, 0.0
        %v1364 = vmax.f32 %v1227, 0.0
        %v1365 = vmax.f32 %v1230, 0.0
        %v1366 = vmax.f32 %v1232, 0.0
        %v1367 = vmax.f32 %v1235, 0.0
        %v1368 = vmax.f32 %v1237, 0.0
        %v1369 = vmax.f32 %v1240, 0.0
        %v1370 = vmax.f32 %v1242, 0.0
        %v1371 = vmax.f32 %v1245, 0.0
        %v1372 = vmax.f32 %v1247, 0.0
        %v1373 = vmax.f32 %v1250, 0.0
        %v1374 = vmax.f32 %v1252, 0.0
        %v1375 = vmax.f32 %v1255, 0.0
        %v1376 = vmax.f32 %v1257, 0.0
        %v1377 = vmax.f32 %v1260, 0.0
        %v1378 = vmax.f32 %v1262, 0.0
        %v1379 = vmax.f32 %v1265, 0.0
        %v1380 = vmax.f32 %v1267, 0.0
        %v1381 = vmax.f32 %v1270, 0.0
        %v1382 = vmax.f32 %v1272, 0.0
        %v1383 = vmax.f32 %v1275, 0.0
        %v1384 = vmax.f32 %v1277, 0.0
        %v1385 = vmax.f32 %v1280, 0.0
        %v1386 = vmax.f32 %v1282, 0.0
        %v1387 = vmax.f32 %v1285, 0.0
        %v1388 = vmax.f32 %v1287, 0.0
        %v1389 = vmax.f32 %v1290, 0.0
        %v1390 = vmax.f32 %v1292, 0.0
        %v1391 = vmax.f32 %v1295, 0.0
        %v1392 = vmax.f32 %v1297, 0.0
        %v1393 = vmax.f32 %v1300, 0.0
        %v1394 = vmax.f32 %v1302, 0.0
        %v1395 = vmax.f32 %v1305, 0.0
        %v1396 = vmax.f32 %v1307, 0.0
        %v1397 = vmax.f32 %v1310, 0.0
        %v1398 = vmax.f32 %v1312, 0.0
        %v1399 = vmax.f32 %v1315, 0.0
        %v1400 = vmax.f32 %v1317, 0.0
        %v1401 = vmax.f32 %v1320, 0.0
        %v1402 = vmax.f32 %v1322, 0.0
        %v1403 = vmax.f32 %v1325, 0.0
        %v1404 = vmax.f32 %v1327, 0.0
        %v1405 = vmax.f32 %v1330, 0.0
        %v1406 = vmax.f32 %v1332, 0.0
        %v1407 = vmax.f32 %v1335, 0.0
        %v1408 = vmax.f32 %v1337, 0.0
        %v1409 = vmax.f32 %v1340, 0.0
        %v1410 = vmax.f32 %v1342, 0.0
        %v1411 = vmax.f32 %v1345, 0.0
        %v1412 = vmax.f32 %v1347, 0.0
        %v1413 = vsel %vm623, 1, 0
        %v1414 = vsel %vm624, 1, 0
        %v1415 = vsel %vm625, 1, 0
        %v1416 = vsel %vm626, 1, 0
        %v1417 = vsel %vm627, 1, 0
        %v1418 = vsel %vm628, 1, 0
        %v1419 = vsel %vm629, 1, 0
        %v1420 = vsel %vm630, 1, 0
        %v1421 = vsel %vm631, 1, 0
        %v1422 = vsel %vm632, 1, 0
        %v1423 = vsel %vm633, 1, 0
        %v1424 = vsel %vm634, 1, 0
        %v1425 = vsel %vm635, 1, 0
        %v1426 = vsel %vm636, 1, 0
        %v1427 = vsel %vm637, 1, 0
        %v1428 = vsel %vm638, 1, 0
        %v1429 = vsel %vm639, 1, 0
        %v1430 = vsel %vm640, 1, 0
        %v1431 = vsel %vm641, 1, 0
        %v1432 = vsel %vm642, 1, 0
        %v1433 = vsel %vm643, 1, 0
        %v1434 = vsel %vm644, 1, 0
        %v1435 = vsel %vm645, 1, 0
        %v1436 = vsel %vm646, 1, 0
        %v1437 = vsel %vm647, 1, 0
        %v1438 = vsel %vm648, 1, 0
        %v1439 = vsel %vm649, 1, 0
        %v1440 = vsel %vm650, 1, 0
        %v1441 = vsel %vm651, 1, 0
        %v1442 = vsel %vm652, 1, 0
        %v1443 = vsel %vm653, 1, 0
        %v1444 = vsel %vm654, 1, 0
        %v1445 = vsel %vm655, 1, 0
        %v1446 = vsel %vm656, 1, 0
        %v1447 = vsel %vm657, 1, 0
        %v1448 = vsel %vm658, 1, 0
        %v1449 = vsel %vm659, 1, 0
        %v1450 = vsel %vm660, 1, 0
        %v1451 = vsel %vm661, 1, 0
        %v1452 = vsel %vm662, 1, 0
        %v1453 = vsel %vm663, 1, 0
        %v1454 = vsel %vm664, 1, 0
        %v1455 = vsel %vm665, 1, 0
        %v1456 = vsel %vm666, 1, 0
        %v1457 = vsel %vm667, 1, 0
        %v1458 = vsel %vm668, 1, 0
        %v1459 = vsel %vm669, 1, 0
        %v1460 = vsel %vm670, 1, 0
        %v1461 = vsel %vm671, 1, 0
        %v1462 = vsel %vm672, 1, 0
        %v1463 = vsel %vm673, 1, 0
        %v1464 = vsel %vm674, 1, 0
        %v1465 = vsel %vm675, 1, 0
        %v1466 = vsel %vm676, 1, 0
        %v1467 = vsel %vm677, 1, 0
        %v1468 = vsel %vm678, 1, 0
        %v1469 = vsel %vm679, 1, 0
        %v1470 = vsel %vm680, 1, 0
        %v1471 = vsel %vm681, 1, 0
        %v1472 = vsel %vm682, 1, 0
        %v1473 = vsel %vm683, 1, 0
        %v1474 = vsel %vm684, 1, 0
        %v1475 = vsel %vm685, 1, 0
        %v1476 = vsel %vm686, 1, 0
        %vm1477 = vcmp.eq.s32.totalorder %v1413, 1
        %vm1478 = vcmp.eq.s32.totalorder %v1414, 1
        %vm1479 = vcmp.eq.s32.totalorder %v1415, 1
        %vm1480 = vcmp.eq.s32.totalorder %v1416, 1
        %vm1481 = vcmp.eq.s32.totalorder %v1417, 1
        %vm1482 = vcmp.eq.s32.totalorder %v1418, 1
        %vm1483 = vcmp.eq.s32.totalorder %v1419, 1
        %vm1484 = vcmp.eq.s32.totalorder %v1420, 1
        %vm1485 = vcmp.eq.s32.totalorder %v1421, 1
        %vm1486 = vcmp.eq.s32.totalorder %v1422, 1
        %vm1487 = vcmp.eq.s32.totalorder %v1423, 1
        %vm1488 = vcmp.eq.s32.totalorder %v1424, 1
        %vm1489 = vcmp.eq.s32.totalorder %v1425, 1
        %vm1490 = vcmp.eq.s32.totalorder %v1426, 1
        %vm1491 = vcmp.eq.s32.totalorder %v1427, 1
        %vm1492 = vcmp.eq.s32.totalorder %v1428, 1
        %vm1493 = vcmp.eq.s32.totalorder %v1429, 1
        %vm1494 = vcmp.eq.s32.totalorder %v1430, 1
        %vm1495 = vcmp.eq.s32.totalorder %v1431, 1
        %vm1496 = vcmp.eq.s32.totalorder %v1432, 1
        %vm1497 = vcmp.eq.s32.totalorder %v1433, 1
        %vm1498 = vcmp.eq.s32.totalorder %v1434, 1
        %vm1499 = vcmp.eq.s32.totalorder %v1435, 1
        %vm1500 = vcmp.eq.s32.totalorder %v1436, 1
        %vm1501 = vcmp.eq.s32.totalorder %v1437, 1
        %vm1502 = vcmp.eq.s32.totalorder %v1438, 1
        %vm1503 = vcmp.eq.s32.totalorder %v1439, 1
        %vm1504 = vcmp.eq.s32.totalorder %v1440, 1
        %vm1505 = vcmp.eq.s32.totalorder %v1441, 1
        %vm1506 = vcmp.eq.s32.totalorder %v1442, 1
        %vm1507 = vcmp.eq.s32.totalorder %v1443, 1
        %vm1508 = vcmp.eq.s32.totalorder %v1444, 1
        %vm1509 = vcmp.eq.s32.totalorder %v1445, 1
        %vm1510 = vcmp.eq.s32.totalorder %v1446, 1
        %vm1511 = vcmp.eq.s32.totalorder %v1447, 1
        %vm1512 = vcmp.eq.s32.totalorder %v1448, 1
        %vm1513 = vcmp.eq.s32.totalorder %v1449, 1
        %vm1514 = vcmp.eq.s32.totalorder %v1450, 1
        %vm1515 = vcmp.eq.s32.totalorder %v1451, 1
        %vm1516 = vcmp.eq.s32.totalorder %v1452, 1
        %vm1517 = vcmp.eq.s32.totalorder %v1453, 1
        %vm1518 = vcmp.eq.s32.totalorder %v1454, 1
        %vm1519 = vcmp.eq.s32.totalorder %v1455, 1
        %vm1520 = vcmp.eq.s32.totalorder %v1456, 1
        %vm1521 = vcmp.eq.s32.totalorder %v1457, 1
        %vm1522 = vcmp.eq.s32.totalorder %v1458, 1
        %vm1523 = vcmp.eq.s32.totalorder %v1459, 1
        %vm1524 = vcmp.eq.s32.totalorder %v1460, 1
        %vm1525 = vcmp.eq.s32.totalorder %v1461, 1
        %vm1526 = vcmp.eq.s32.totalorder %v1462, 1
        %vm1527 = vcmp.eq.s32.totalorder %v1463, 1
        %vm1528 = vcmp.eq.s32.totalorder %v1464, 1
        %vm1529 = vcmp.eq.s32.totalorder %v1465, 1
        %vm1530 = vcmp.eq.s32.totalorder %v1466, 1
        %vm1531 = vcmp.eq.s32.totalorder %v1467, 1
        %vm1532 = vcmp.eq.s32.totalorder %v1468, 1
        %vm1533 = vcmp.eq.s32.totalorder %v1469, 1
        %vm1534 = vcmp.eq.s32.totalorder %v1470, 1
        %vm1535 = vcmp.eq.s32.totalorder %v1471, 1
        %vm1536 = vcmp.eq.s32.totalorder %v1472, 1
        %vm1537 = vcmp.eq.s32.totalorder %v1473, 1
        %vm1538 = vcmp.eq.s32.totalorder %v1474, 1
        %vm1539 = vcmp.eq.s32.totalorder %v1475, 1
        %vm1540 = vcmp.eq.s32.totalorder %v1476, 1
        %v1541 = vsel %vm1477, %v1349, 0.0
        %v1542 = vsel %vm1478, %v1350, 0.0
        %v1543 = vsel %vm1479, %v1351, 0.0
        %v1544 = vsel %vm1480, %v1352, 0.0
        %v1545 = vsel %vm1481, %v1353, 0.0
        %v1546 = vsel %vm1482, %v1354, 0.0
        %v1547 = vsel %vm1483, %v1355, 0.0
        %v1548 = vsel %vm1484, %v1356, 0.0
        %v1549 = vsel %vm1485, %v1357, 0.0
        %v1550 = vsel %vm1486, %v1358, 0.0
        %v1551 = vsel %vm1487, %v1359, 0.0
        %v1552 = vsel %vm1488, %v1360, 0.0
        %v1553 = vsel %vm1489, %v1361, 0.0
        %v1554 = vsel %vm1490, %v1362, 0.0
        %v1555 = vsel %vm1491, %v1363, 0.0
        %v1556 = vsel %vm1492, %v1364, 0.0
        %v1557 = vsel %vm1493, %v1365, 0.0
        %v1558 = vsel %vm1494, %v1366, 0.0
        %v1559 = vsel %vm1495, %v1367, 0.0
        %v1560 = vsel %vm1496, %v1368, 0.0
        %v1561 = vsel %vm1497, %v1369, 0.0
        %v1562 = vsel %vm1498, %v1370, 0.0
        %v1563 = vsel %vm1499, %v1371, 0.0
        %v1564 = vsel %vm1500, %v1372, 0.0
        %v1565 = vsel %vm1501, %v1373, 0.0
        %v1566 = vsel %vm1502, %v1374, 0.0
        %v1567 = vsel %vm1503, %v1375, 0.0
        %v1568 = vsel %vm1504, %v1376, 0.0
        %v1569 = vsel %vm1505, %v1377, 0.0
        %v1570 = vsel %vm1506, %v1378, 0.0
        %v1571 = vsel %vm1507, %v1379, 0.0
        %v1572 = vsel %vm1508, %v1380, 0.0
        %v1573 = vsel %vm1509, %v1381, 0.0
        %v1574 = vsel %vm1510, %v1382, 0.0
        %v1575 = vsel %vm1511, %v1383, 0.0
        %v1576 = vsel %vm1512, %v1384, 0.0
        %v1577 = vsel %vm1513, %v1385, 0.0
        %v1578 = vsel %vm1514, %v1386, 0.0
        %v1579 = vsel %vm1515, %v1387, 0.0
        %v1580 = vsel %vm1516, %v1388, 0.0
        %v1581 = vsel %vm1517, %v1389, 0.0
        %v1582 = vsel %vm1518, %v1390, 0.0
        %v1583 = vsel %vm1519, %v1391, 0.0
        %v1584 = vsel %vm1520, %v1392, 0.0
        %v1585 = vsel %vm1521, %v1393, 0.0
        %v1586 = vsel %vm1522, %v1394, 0.0
        %v1587 = vsel %vm1523, %v1395, 0.0
        %v1588 = vsel %vm1524, %v1396, 0.0
        %v1589 = vsel %vm1525, %v1397, 0.0
        %v1590 = vsel %vm1526, %v1398, 0.0
        %v1591 = vsel %vm1527, %v1399, 0.0
        %v1592 = vsel %vm1528, %v1400, 0.0
        %v1593 = vsel %vm1529, %v1401, 0.0
        %v1594 = vsel %vm1530, %v1402, 0.0
        %v1595 = vsel %vm1531, %v1403, 0.0
        %v1596 = vsel %vm1532, %v1404, 0.0
        %v1597 = vsel %vm1533, %v1405, 0.0
        %v1598 = vsel %vm1534, %v1406, 0.0
        %v1599 = vsel %vm1535, %v1407, 0.0
        %v1600 = vsel %vm1536, %v1408, 0.0
        %v1601 = vsel %vm1537, %v1409, 0.0
        %v1602 = vsel %vm1538, %v1410, 0.0
        %v1603 = vsel %vm1539, %v1411, 0.0
        %v1604 = vsel %vm1540, %v1412, 0.0
        %v1605 = vpack.c.bf16 %v1542, %v1541
        %v1606 = vpack.c.bf16 %v1544, %v1543
        %v1607 = vpack.c.bf16 %v1546, %v1545
        %v1608 = vpack.c.bf16 %v1548, %v1547
        %v1609 = vpack.c.bf16 %v1550, %v1549
        %v1610 = vpack.c.bf16 %v1552, %v1551
        %v1611 = vpack.c.bf16 %v1554, %v1553
        %v1612 = vpack.c.bf16 %v1556, %v1555
        %v1613 = vpack.c.bf16 %v1558, %v1557
        %v1614 = vpack.c.bf16 %v1560, %v1559
        %v1615 = vpack.c.bf16 %v1562, %v1561
        %v1616 = vpack.c.bf16 %v1564, %v1563
        %v1617 = vpack.c.bf16 %v1566, %v1565
        %v1618 = vpack.c.bf16 %v1568, %v1567
        %v1619 = vpack.c.bf16 %v1570, %v1569
        %v1620 = vpack.c.bf16 %v1572, %v1571
        %v1621 = vpack.c.bf16 %v1574, %v1573
        %v1622 = vpack.c.bf16 %v1576, %v1575
        %v1623 = vpack.c.bf16 %v1578, %v1577
        %v1624 = vpack.c.bf16 %v1580, %v1579
        %v1625 = vpack.c.bf16 %v1582, %v1581
        %v1626 = vpack.c.bf16 %v1584, %v1583
        %v1627 = vpack.c.bf16 %v1586, %v1585
        %v1628 = vpack.c.bf16 %v1588, %v1587
        %v1629 = vpack.c.bf16 %v1590, %v1589
        %v1630 = vpack.c.bf16 %v1592, %v1591
        %v1631 = vpack.c.bf16 %v1594, %v1593
        %v1632 = vpack.c.bf16 %v1596, %v1595
        %v1633 = vpack.c.bf16 %v1598, %v1597
        %v1634 = vpack.c.bf16 %v1600, %v1599
        %v1635 = vpack.c.bf16 %v1602, %v1601
        %v1636 = vpack.c.bf16 %v1604, %v1603
        %v1637 = vld [vmem:[#allocation7] sm:$0xf]
        %v1638 = vld [vmem:[#allocation7 + $0x4] sm:$0xf]
        %v1639 = vld [vmem:[#allocation7 + $0x8] sm:$0xf]
        %v1640 = vld [vmem:[#allocation7 + $0xc] sm:$0xf]
        %v1641 = vld [vmem:[#allocation7 + $0x10] sm:$0xf]
        %v1642 = vld [vmem:[#allocation7 + $0x14] sm:$0xf]
        %v1643 = vld [vmem:[#allocation7 + $0x18] sm:$0xf]
        %v1644 = vld [vmem:[#allocation7 + $0x1c] sm:$0xf]
        %v1645 = vld [vmem:[#allocation7 + $0x20] sm:$0xf]
        %v1646 = vld [vmem:[#allocation7 + $0x24] sm:$0xf]
        %v1647 = vld [vmem:[#allocation7 + $0x28] sm:$0xf]
        %v1648 = vld [vmem:[#allocation7 + $0x2c] sm:$0xf]
        %v1649 = vld [vmem:[#allocation7 + $0x30] sm:$0xf]
        %v1650 = vld [vmem:[#allocation7 + $0x34] sm:$0xf]
        %v1651 = vld [vmem:[#allocation7 + $0x38] sm:$0xf]
        %v1652 = vld [vmem:[#allocation7 + $0x3c] sm:$0xf]
        %v1653 = vld [vmem:[%s4] sm:$0x1]
        %v1655 = vperm.slane %v1653, 0
        %v1673 = vunpack.c.l.b16 %v1637
        %v1674 = vunpack.c.l.b16 %v1638
        %v1675 = vunpack.c.l.b16 %v1639
        %v1676 = vunpack.c.l.b16 %v1640
        %v1677 = vunpack.c.l.b16 %v1641
        %v1678 = vunpack.c.l.b16 %v1642
        %v1679 = vunpack.c.l.b16 %v1643
        %v1680 = vunpack.c.l.b16 %v1644
        %v1681 = vunpack.c.l.b16 %v1645
        %v1682 = vunpack.c.l.b16 %v1646
        %v1683 = vunpack.c.l.b16 %v1647
        %v1684 = vunpack.c.l.b16 %v1648
        %v1685 = vunpack.c.l.b16 %v1649
        %v1686 = vunpack.c.l.b16 %v1650
        %v1687 = vunpack.c.l.b16 %v1651
        %v1688 = vunpack.c.l.b16 %v1652
        %v1689 = vpack.c.b16 %v1674, %v1673
        %v1690 = vpack.c.b16 %v1676, %v1675
        %v1691 = vpack.c.b16 %v1678, %v1677
        %v1692 = vpack.c.b16 %v1680, %v1679
        %v1693 = vpack.c.b16 %v1682, %v1681
        %v1694 = vpack.c.b16 %v1684, %v1683
        %v1695 = vpack.c.b16 %v1686, %v1685
        %v1696 = vpack.c.b16 %v1688, %v1687
        %1705 = vmatpush.bf16.msra.mxu0 %v1696
        %1706 = vmatpush.bf16.msra.mxu0 %v1695
        %1707 = vmatpush.bf16.msra.mxu0 %v1694
        %1708 = vmatpush.bf16.msra.mxu0 %v1693
        %1709 = vmatpush.bf16.msra.mxu0 %v1692
        %1710 = vmatpush.bf16.msra.mxu0 %v1691
        %1711 = vmatpush.bf16.msra.mxu0 %v1690
        %1712 = vmatpush.bf16.msra.mxu0 %v1689
        %1713 = vmatmul.bf16.gmra.mxu0 %v1605
        %v1714 = vpop.f32.mrf.mxu0
        %v1715 = vadd.f32 %v1655, %v1714
        %v1716 = vpop.f32.mrf.mxu0
        %v1717 = vadd.f32 %v1655, %v1716
        %1718 = vmatmul.bf16.gmra.mxu0 %v1606
        %v1719 = vpop.f32.mrf.mxu0
        %v1720 = vadd.f32 %v1655, %v1719
        %v1721 = vpop.f32.mrf.mxu0
        %v1722 = vadd.f32 %v1655, %v1721
        %1723 = vmatmul.bf16.gmra.mxu0 %v1607
        %v1724 = vpop.f32.mrf.mxu0
        %v1725 = vadd.f32 %v1655, %v1724
        %v1726 = vpop.f32.mrf.mxu0
        %v1727 = vadd.f32 %v1655, %v1726
        %1728 = vmatmul.bf16.gmra.mxu0 %v1608
        %v1729 = vpop.f32.mrf.mxu0
        %v1730 = vadd.f32 %v1655, %v1729
        %v1731 = vpop.f32.mrf.mxu0
        %v1732 = vadd.f32 %v1655, %v1731
        %1733 = vmatmul.bf16.gmra.mxu0 %v1609
        %v1734 = vpop.f32.mrf.mxu0
        %v1735 = vadd.f32 %v1655, %v1734
        %v1736 = vpop.f32.mrf.mxu0
        %v1737 = vadd.f32 %v1655, %v1736
        %1738 = vmatmul.bf16.gmra.mxu0 %v1610
        %v1739 = vpop.f32.mrf.mxu0
        %v1740 = vadd.f32 %v1655, %v1739
        %v1741 = vpop.f32.mrf.mxu0
        %v1742 = vadd.f32 %v1655, %v1741
        %1743 = vmatmul.bf16.gmra.mxu0 %v1611
        %v1744 = vpop.f32.mrf.mxu0
        %v1745 = vadd.f32 %v1655, %v1744
        %v1746 = vpop.f32.mrf.mxu0
        %v1747 = vadd.f32 %v1655, %v1746
        %1748 = vmatmul.bf16.gmra.mxu0 %v1612
        %v1749 = vpop.f32.mrf.mxu0
        %v1750 = vadd.f32 %v1655, %v1749
        %v1751 = vpop.f32.mrf.mxu0
        %v1752 = vadd.f32 %v1655, %v1751
        %1753 = vmatmul.bf16.gmra.mxu0 %v1613
        %v1754 = vpop.f32.mrf.mxu0
        %v1755 = vadd.f32 %v1655, %v1754
        %v1756 = vpop.f32.mrf.mxu0
        %v1757 = vadd.f32 %v1655, %v1756
        %1758 = vmatmul.bf16.gmra.mxu0 %v1614
        %v1759 = vpop.f32.mrf.mxu0
        %v1760 = vadd.f32 %v1655, %v1759
        %v1761 = vpop.f32.mrf.mxu0
        %v1762 = vadd.f32 %v1655, %v1761
        %1763 = vmatmul.bf16.gmra.mxu0 %v1615
        %v1764 = vpop.f32.mrf.mxu0
        %v1765 = vadd.f32 %v1655, %v1764
        %v1766 = vpop.f32.mrf.mxu0
        %v1767 = vadd.f32 %v1655, %v1766
        %1768 = vmatmul.bf16.gmra.mxu0 %v1616
        %v1769 = vpop.f32.mrf.mxu0
        %v1770 = vadd.f32 %v1655, %v1769
        %v1771 = vpop.f32.mrf.mxu0
        %v1772 = vadd.f32 %v1655, %v1771
        %1773 = vmatmul.bf16.gmra.mxu0 %v1617
        %v1774 = vpop.f32.mrf.mxu0
        %v1775 = vadd.f32 %v1655, %v1774
        %v1776 = vpop.f32.mrf.mxu0
        %v1777 = vadd.f32 %v1655, %v1776
        %1778 = vmatmul.bf16.gmra.mxu0 %v1618
        %v1779 = vpop.f32.mrf.mxu0
        %v1780 = vadd.f32 %v1655, %v1779
        %v1781 = vpop.f32.mrf.mxu0
        %v1782 = vadd.f32 %v1655, %v1781
        %1783 = vmatmul.bf16.gmra.mxu0 %v1619
        %v1784 = vpop.f32.mrf.mxu0
        %v1785 = vadd.f32 %v1655, %v1784
        %v1786 = vpop.f32.mrf.mxu0
        %v1787 = vadd.f32 %v1655, %v1786
        %1788 = vmatmul.bf16.gmra.mxu0 %v1620
        %v1789 = vpop.f32.mrf.mxu0
        %v1790 = vadd.f32 %v1655, %v1789
        %v1791 = vpop.f32.mrf.mxu0
        %v1792 = vadd.f32 %v1655, %v1791
        %1793 = vmatmul.bf16.gmra.mxu0 %v1621
        %v1794 = vpop.f32.mrf.mxu0
        %v1795 = vadd.f32 %v1655, %v1794
        %v1796 = vpop.f32.mrf.mxu0
        %v1797 = vadd.f32 %v1655, %v1796
        %1798 = vmatmul.bf16.gmra.mxu0 %v1622
        %v1799 = vpop.f32.mrf.mxu0
        %v1800 = vadd.f32 %v1655, %v1799
        %v1801 = vpop.f32.mrf.mxu0
        %v1802 = vadd.f32 %v1655, %v1801
        %1803 = vmatmul.bf16.gmra.mxu0 %v1623
        %v1804 = vpop.f32.mrf.mxu0
        %v1805 = vadd.f32 %v1655, %v1804
        %v1806 = vpop.f32.mrf.mxu0
        %v1807 = vadd.f32 %v1655, %v1806
        %1808 = vmatmul.bf16.gmra.mxu0 %v1624
        %v1809 = vpop.f32.mrf.mxu0
        %v1810 = vadd.f32 %v1655, %v1809
        %v1811 = vpop.f32.mrf.mxu0
        %v1812 = vadd.f32 %v1655, %v1811
        %1813 = vmatmul.bf16.gmra.mxu0 %v1625
        %v1814 = vpop.f32.mrf.mxu0
        %v1815 = vadd.f32 %v1655, %v1814
        %v1816 = vpop.f32.mrf.mxu0
        %v1817 = vadd.f32 %v1655, %v1816
        %1818 = vmatmul.bf16.gmra.mxu0 %v1626
        %v1819 = vpop.f32.mrf.mxu0
        %v1820 = vadd.f32 %v1655, %v1819
        %v1821 = vpop.f32.mrf.mxu0
        %v1822 = vadd.f32 %v1655, %v1821
        %1823 = vmatmul.bf16.gmra.mxu0 %v1627
        %v1824 = vpop.f32.mrf.mxu0
        %v1825 = vadd.f32 %v1655, %v1824
        %v1826 = vpop.f32.mrf.mxu0
        %v1827 = vadd.f32 %v1655, %v1826
        %1828 = vmatmul.bf16.gmra.mxu0 %v1628
        %v1829 = vpop.f32.mrf.mxu0
        %v1830 = vadd.f32 %v1655, %v1829
        %v1831 = vpop.f32.mrf.mxu0
        %v1832 = vadd.f32 %v1655, %v1831
        %1833 = vmatmul.bf16.gmra.mxu0 %v1629
        %v1834 = vpop.f32.mrf.mxu0
        %v1835 = vadd.f32 %v1655, %v1834
        %v1836 = vpop.f32.mrf.mxu0
        %v1837 = vadd.f32 %v1655, %v1836
        %1838 = vmatmul.bf16.gmra.mxu0 %v1630
        %v1839 = vpop.f32.mrf.mxu0
        %v1840 = vadd.f32 %v1655, %v1839
        %v1841 = vpop.f32.mrf.mxu0
        %v1842 = vadd.f32 %v1655, %v1841
        %1843 = vmatmul.bf16.gmra.mxu0 %v1631
        %v1844 = vpop.f32.mrf.mxu0
        %v1845 = vadd.f32 %v1655, %v1844
        %v1846 = vpop.f32.mrf.mxu0
        %v1847 = vadd.f32 %v1655, %v1846
        %1848 = vmatmul.bf16.gmra.mxu0 %v1632
        %v1849 = vpop.f32.mrf.mxu0
        %v1850 = vadd.f32 %v1655, %v1849
        %v1851 = vpop.f32.mrf.mxu0
        %v1852 = vadd.f32 %v1655, %v1851
        %1853 = vmatmul.bf16.gmra.mxu0 %v1633
        %v1854 = vpop.f32.mrf.mxu0
        %v1855 = vadd.f32 %v1655, %v1854
        %v1856 = vpop.f32.mrf.mxu0
        %v1857 = vadd.f32 %v1655, %v1856
        %1858 = vmatmul.bf16.gmra.mxu0 %v1634
        %v1859 = vpop.f32.mrf.mxu0
        %v1860 = vadd.f32 %v1655, %v1859
        %v1861 = vpop.f32.mrf.mxu0
        %v1862 = vadd.f32 %v1655, %v1861
        %1863 = vmatmul.bf16.gmra.mxu0 %v1635
        %v1864 = vpop.f32.mrf.mxu0
        %v1865 = vadd.f32 %v1655, %v1864
        %v1866 = vpop.f32.mrf.mxu0
        %v1867 = vadd.f32 %v1655, %v1866
        %1868 = vmatmul.bf16.gmra.mxu0 %v1636
        %v1869 = vpop.f32.mrf.mxu0
        %v1870 = vadd.f32 %v1655, %v1869
        %v1871 = vpop.f32.mrf.mxu0
        %v1872 = vadd.f32 %v1655, %v1871
        %1873 = vdwg.mxu0
        %v1874 = vtanh.pop %v1715
        %v1875 = vtanh.pop %v1717
        %v1876 = vtanh.pop %v1720
        %v1877 = vtanh.pop %v1722
        %v1878 = vtanh.pop %v1725
        %v1879 = vtanh.pop %v1727
        %v1880 = vtanh.pop %v1730
        %v1881 = vtanh.pop %v1732
        %v1882 = vtanh.pop %v1735
        %v1883 = vtanh.pop %v1737
        %v1884 = vtanh.pop %v1740
        %v1885 = vtanh.pop %v1742
        %v1886 = vtanh.pop %v1745
        %v1887 = vtanh.pop %v1747
        %v1888 = vtanh.pop %v1750
        %v1889 = vtanh.pop %v1752
        %v1890 = vtanh.pop %v1755
        %v1891 = vtanh.pop %v1757
        %v1892 = vtanh.pop %v1760
        %v1893 = vtanh.pop %v1762
        %v1894 = vtanh.pop %v1765
        %v1895 = vtanh.pop %v1767
        %v1896 = vtanh.pop %v1770
        %v1897 = vtanh.pop %v1772
        %v1898 = vtanh.pop %v1775
        %v1899 = vtanh.pop %v1777
        %v1900 = vtanh.pop %v1780
        %v1901 = vtanh.pop %v1782
        %v1902 = vtanh.pop %v1785
        %v1903 = vtanh.pop %v1787
        %v1904 = vtanh.pop %v1790
        %v1905 = vtanh.pop %v1792
        %v1906 = vtanh.pop %v1795
        %v1907 = vtanh.pop %v1797
        %v1908 = vtanh.pop %v1800
        %v1909 = vtanh.pop %v1802
        %v1910 = vtanh.pop %v1805
        %v1911 = vtanh.pop %v1807
        %v1912 = vtanh.pop %v1810
        %v1913 = vtanh.pop %v1812
        %v1914 = vtanh.pop %v1815
        %v1915 = vtanh.pop %v1817
        %v1916 = vtanh.pop %v1820
        %v1917 = vtanh.pop %v1822
        %v1918 = vtanh.pop %v1825
        %v1919 = vtanh.pop %v1827
        %v1920 = vtanh.pop %v1830
        %v1921 = vtanh.pop %v1832
        %v1922 = vtanh.pop %v1835
        %v1923 = vtanh.pop %v1837
        %v1924 = vtanh.pop %v1840
        %v1925 = vtanh.pop %v1842
        %v1926 = vtanh.pop %v1845
        %v1927 = vtanh.pop %v1847
        %v1928 = vtanh.pop %v1850
        %v1929 = vtanh.pop %v1852
        %v1930 = vtanh.pop %v1855
        %v1931 = vtanh.pop %v1857
        %v1932 = vtanh.pop %v1860
        %v1933 = vtanh.pop %v1862
        %v1934 = vtanh.pop %v1865
        %v1935 = vtanh.pop %v1867
        %v1936 = vtanh.pop %v1870
        %v1937 = vtanh.pop %v1872
        %v1938 = vxor.u32 %v1715, 2147483648
        %v1939 = vxor.u32 %v1717, 2147483648
        %v1940 = vxor.u32 %v1720, 2147483648
        %v1941 = vxor.u32 %v1722, 2147483648
        %v1942 = vxor.u32 %v1725, 2147483648
        %v1943 = vxor.u32 %v1727, 2147483648
        %v1944 = vxor.u32 %v1730, 2147483648
        %v1945 = vxor.u32 %v1732, 2147483648
        %v1946 = vxor.u32 %v1735, 2147483648
        %v1947 = vxor.u32 %v1737, 2147483648
        %v1948 = vxor.u32 %v1740, 2147483648
        %v1949 = vxor.u32 %v1742, 2147483648
        %v1950 = vxor.u32 %v1745, 2147483648
        %v1951 = vxor.u32 %v1747, 2147483648
        %v1952 = vxor.u32 %v1750, 2147483648
        %v1953 = vxor.u32 %v1752, 2147483648
        %v1954 = vxor.u32 %v1755, 2147483648
        %v1955 = vxor.u32 %v1757, 2147483648
        %v1956 = vxor.u32 %v1760, 2147483648
        %v1957 = vxor.u32 %v1762, 2147483648
        %v1958 = vxor.u32 %v1765, 2147483648
        %v1959 = vxor.u32 %v1767, 2147483648
        %v1960 = vxor.u32 %v1770, 2147483648
        %v1961 = vxor.u32 %v1772, 2147483648
        %v1962 = vxor.u32 %v1775, 2147483648
        %v1963 = vxor.u32 %v1777, 2147483648
        %v1964 = vxor.u32 %v1780, 2147483648
        %v1965 = vxor.u32 %v1782, 2147483648
        %v1966 = vxor.u32 %v1785, 2147483648
        %v1967 = vxor.u32 %v1787, 2147483648
        %v1968 = vxor.u32 %v1790, 2147483648
        %v1969 = vxor.u32 %v1792, 2147483648
        %v1970 = vxor.u32 %v1795, 2147483648
        %v1971 = vxor.u32 %v1797, 2147483648
        %v1972 = vxor.u32 %v1800, 2147483648
        %v1973 = vxor.u32 %v1802, 2147483648
        %v1974 = vxor.u32 %v1805, 2147483648
        %v1975 = vxor.u32 %v1807, 2147483648
        %v1976 = vxor.u32 %v1810, 2147483648
        %v1977 = vxor.u32 %v1812, 2147483648
        %v1978 = vxor.u32 %v1815, 2147483648
        %v1979 = vxor.u32 %v1817, 2147483648
        %v1980 = vxor.u32 %v1820, 2147483648
        %v1981 = vxor.u32 %v1822, 2147483648
        %v1982 = vxor.u32 %v1825, 2147483648
        %v1983 = vxor.u32 %v1827, 2147483648
        %v1984 = vxor.u32 %v1830, 2147483648
        %v1985 = vxor.u32 %v1832, 2147483648
        %v1986 = vxor.u32 %v1835, 2147483648
        %v1987 = vxor.u32 %v1837, 2147483648
        %v1988 = vxor.u32 %v1840, 2147483648
        %v1989 = vxor.u32 %v1842, 2147483648
        %v1990 = vxor.u32 %v1845, 2147483648
        %v1991 = vxor.u32 %v1847, 2147483648
        %v1992 = vxor.u32 %v1850, 2147483648
        %v1993 = vxor.u32 %v1852, 2147483648
        %v1994 = vxor.u32 %v1855, 2147483648
        %v1995 = vxor.u32 %v1857, 2147483648
        %v1996 = vxor.u32 %v1860, 2147483648
        %v1997 = vxor.u32 %v1862, 2147483648
        %v1998 = vxor.u32 %v1865, 2147483648
        %v1999 = vxor.u32 %v1867, 2147483648
        %v2000 = vxor.u32 %v1870, 2147483648
        %v2001 = vxor.u32 %v1872, 2147483648
        %v2002 = vmul.f32 %v1938, 1.442695
        %v2003 = vpow.pop %v2002
        %v2004 = vmul.f32 %v1939, 1.442695
        %v2005 = vpow.pop %v2004
        %v2006 = vmul.f32 %v1940, 1.442695
        %v2007 = vpow.pop %v2006
        %v2008 = vmul.f32 %v1941, 1.442695
        %v2009 = vpow.pop %v2008
        %v2010 = vmul.f32 %v1942, 1.442695
        %v2011 = vpow.pop %v2010
        %v2012 = vmul.f32 %v1943, 1.442695
        %v2013 = vpow.pop %v2012
        %v2014 = vmul.f32 %v1944, 1.442695
        %v2015 = vpow.pop %v2014
        %v2016 = vmul.f32 %v1945, 1.442695
        %v2017 = vpow.pop %v2016
        %v2018 = vmul.f32 %v1946, 1.442695
        %v2019 = vpow.pop %v2018
        %v2020 = vmul.f32 %v1947, 1.442695
        %v2021 = vpow.pop %v2020
        %v2022 = vmul.f32 %v1948, 1.442695
        %v2023 = vpow.pop %v2022
        %v2024 = vmul.f32 %v1949, 1.442695
        %v2025 = vpow.pop %v2024
        %v2026 = vmul.f32 %v1950, 1.442695
        %v2027 = vpow.pop %v2026
        %v2028 = vmul.f32 %v1951, 1.442695
        %v2029 = vpow.pop %v2028
        %v2030 = vmul.f32 %v1952, 1.442695
        %v2031 = vpow.pop %v2030
        %v2032 = vmul.f32 %v1953, 1.442695
        %v2033 = vpow.pop %v2032
        %v2034 = vmul.f32 %v1954, 1.442695
        %v2035 = vpow.pop %v2034
        %v2036 = vmul.f32 %v1955, 1.442695
        %v2037 = vpow.pop %v2036
        %v2038 = vmul.f32 %v1956, 1.442695
        %v2039 = vpow.pop %v2038
        %v2040 = vmul.f32 %v1957, 1.442695
        %v2041 = vpow.pop %v2040
        %v2042 = vmul.f32 %v1958, 1.442695
        %v2043 = vpow.pop %v2042
        %v2044 = vmul.f32 %v1959, 1.442695
        %v2045 = vpow.pop %v2044
        %v2046 = vmul.f32 %v1960, 1.442695
        %v2047 = vpow.pop %v2046
        %v2048 = vmul.f32 %v1961, 1.442695
        %v2049 = vpow.pop %v2048
        %v2050 = vmul.f32 %v1962, 1.442695
        %v2051 = vpow.pop %v2050
        %v2052 = vmul.f32 %v1963, 1.442695
        %v2053 = vpow.pop %v2052
        %v2054 = vmul.f32 %v1964, 1.442695
        %v2055 = vpow.pop %v2054
        %v2056 = vmul.f32 %v1965, 1.442695
        %v2057 = vpow.pop %v2056
        %v2058 = vmul.f32 %v1966, 1.442695
        %v2059 = vpow.pop %v2058
        %v2060 = vmul.f32 %v1967, 1.442695
        %v2061 = vpow.pop %v2060
        %v2062 = vmul.f32 %v1968, 1.442695
        %v2063 = vpow.pop %v2062
        %v2064 = vmul.f32 %v1969, 1.442695
        %v2065 = vpow.pop %v2064
        %v2066 = vmul.f32 %v1970, 1.442695
        %v2067 = vpow.pop %v2066
        %v2068 = vmul.f32 %v1971, 1.442695
        %v2069 = vpow.pop %v2068
        %v2070 = vmul.f32 %v1972, 1.442695
        %v2071 = vpow.pop %v2070
        %v2072 = vmul.f32 %v1973, 1.442695
        %v2073 = vpow.pop %v2072
        %v2074 = vmul.f32 %v1974, 1.442695
        %v2075 = vpow.pop %v2074
        %v2076 = vmul.f32 %v1975, 1.442695
        %v2077 = vpow.pop %v2076
        %v2078 = vmul.f32 %v1976, 1.442695
        %v2079 = vpow.pop %v2078
        %v2080 = vmul.f32 %v1977, 1.442695
        %v2081 = vpow.pop %v2080
        %v2082 = vmul.f32 %v1978, 1.442695
        %v2083 = vpow.pop %v2082
        %v2084 = vmul.f32 %v1979, 1.442695
        %v2085 = vpow.pop %v2084
        %v2086 = vmul.f32 %v1980, 1.442695
        %v2087 = vpow.pop %v2086
        %v2088 = vmul.f32 %v1981, 1.442695
        %v2089 = vpow.pop %v2088
        %v2090 = vmul.f32 %v1982, 1.442695
        %v2091 = vpow.pop %v2090
        %v2092 = vmul.f32 %v1983, 1.442695
        %v2093 = vpow.pop %v2092
        %v2094 = vmul.f32 %v1984, 1.442695
        %v2095 = vpow.pop %v2094
        %v2096 = vmul.f32 %v1985, 1.442695
        %v2097 = vpow.pop %v2096
        %v2098 = vmul.f32 %v1986, 1.442695
        %v2099 = vpow.pop %v2098
        %v2100 = vmul.f32 %v1987, 1.442695
        %v2101 = vpow.pop %v2100
        %v2102 = vmul.f32 %v1988, 1.442695
        %v2103 = vpow.pop %v2102
        %v2104 = vmul.f32 %v1989, 1.442695
        %v2105 = vpow.pop %v2104
        %v2106 = vmul.f32 %v1990, 1.442695
        %v2107 = vpow.pop %v2106
        %v2108 = vmul.f32 %v1991, 1.442695
        %v2109 = vpow.pop %v2108
        %v2110 = vmul.f32 %v1992, 1.442695
        %v2111 = vpow.pop %v2110
        %v2112 = vmul.f32 %v1993, 1.442695
        %v2113 = vpow.pop %v2112
        %v2114 = vmul.f32 %v1994, 1.442695
        %v2115 = vpow.pop %v2114
        %v2116 = vmul.f32 %v1995, 1.442695
        %v2117 = vpow.pop %v2116
        %v2118 = vmul.f32 %v1996, 1.442695
        %v2119 = vpow.pop %v2118
        %v2120 = vmul.f32 %v1997, 1.442695
        %v2121 = vpow.pop %v2120
        %v2122 = vmul.f32 %v1998, 1.442695
        %v2123 = vpow.pop %v2122
        %v2124 = vmul.f32 %v1999, 1.442695
        %v2125 = vpow.pop %v2124
        %v2126 = vmul.f32 %v2000, 1.442695
        %v2127 = vpow.pop %v2126
        %v2128 = vmul.f32 %v2001, 1.442695
        %v2129 = vpow.pop %v2128
        %v2130 = vadd.f32 %v2003, 1.0
        %v2131 = vadd.f32 %v2005, 1.0
        %v2132 = vadd.f32 %v2007, 1.0
        %v2133 = vadd.f32 %v2009, 1.0
        %v2134 = vadd.f32 %v2011, 1.0
        %v2135 = vadd.f32 %v2013, 1.0
        %v2136 = vadd.f32 %v2015, 1.0
        %v2137 = vadd.f32 %v2017, 1.0
        %v2138 = vadd.f32 %v2019, 1.0
        %v2139 = vadd.f32 %v2021, 1.0
        %v2140 = vadd.f32 %v2023, 1.0
        %v2141 = vadd.f32 %v2025, 1.0
        %v2142 = vadd.f32 %v2027, 1.0
        %v2143 = vadd.f32 %v2029, 1.0
        %v2144 = vadd.f32 %v2031, 1.0
        %v2145 = vadd.f32 %v2033, 1.0
        %v2146 = vadd.f32 %v2035, 1.0
        %v2147 = vadd.f32 %v2037, 1.0
        %v2148 = vadd.f32 %v2039, 1.0
        %v2149 = vadd.f32 %v2041, 1.0
        %v2150 = vadd.f32 %v2043, 1.0
        %v2151 = vadd.f32 %v2045, 1.0
        %v2152 = vadd.f32 %v2047, 1.0
        %v2153 = vadd.f32 %v2049, 1.0
        %v2154 = vadd.f32 %v2051, 1.0
        %v2155 = vadd.f32 %v2053, 1.0
        %v2156 = vadd.f32 %v2055, 1.0
        %v2157 = vadd.f32 %v2057, 1.0
        %v2158 = vadd.f32 %v2059, 1.0
        %v2159 = vadd.f32 %v2061, 1.0
        %v2160 = vadd.f32 %v2063, 1.0
        %v2161 = vadd.f32 %v2065, 1.0
        %v2162 = vadd.f32 %v2067, 1.0
        %v2163 = vadd.f32 %v2069, 1.0
        %v2164 = vadd.f32 %v2071, 1.0
        %v2165 = vadd.f32 %v2073, 1.0
        %v2166 = vadd.f32 %v2075, 1.0
        %v2167 = vadd.f32 %v2077, 1.0
        %v2168 = vadd.f32 %v2079, 1.0
        %v2169 = vadd.f32 %v2081, 1.0
        %v2170 = vadd.f32 %v2083, 1.0
        %v2171 = vadd.f32 %v2085, 1.0
        %v2172 = vadd.f32 %v2087, 1.0
        %v2173 = vadd.f32 %v2089, 1.0
        %v2174 = vadd.f32 %v2091, 1.0
        %v2175 = vadd.f32 %v2093, 1.0
        %v2176 = vadd.f32 %v2095, 1.0
        %v2177 = vadd.f32 %v2097, 1.0
        %v2178 = vadd.f32 %v2099, 1.0
        %v2179 = vadd.f32 %v2101, 1.0
        %v2180 = vadd.f32 %v2103, 1.0
        %v2181 = vadd.f32 %v2105, 1.0
        %v2182 = vadd.f32 %v2107, 1.0
        %v2183 = vadd.f32 %v2109, 1.0
        %v2184 = vadd.f32 %v2111, 1.0
        %v2185 = vadd.f32 %v2113, 1.0
        %v2186 = vadd.f32 %v2115, 1.0
        %v2187 = vadd.f32 %v2117, 1.0
        %v2188 = vadd.f32 %v2119, 1.0
        %v2189 = vadd.f32 %v2121, 1.0
        %v2190 = vadd.f32 %v2123, 1.0
        %v2191 = vadd.f32 %v2125, 1.0
        %v2192 = vadd.f32 %v2127, 1.0
        %v2193 = vadd.f32 %v2129, 1.0
        %v2194 = vrcp.pop %v2130
        %v2195 = vmul.f32 %v2130, %v2194
        %v2196 = vsub.f32 1.0, %v2195
        %v2197 = vmul.f32 %v2194, %v2196
        %v2198 = vadd.f32 %v2194, %v2197
        %vm2199 = vweird.f32 %v2130
        %vm2200 = vweird.f32 %v2194
        %vm2201 = vmor %vm2199, %vm2200
        %v2202 = vsel %vm2201, %v2194, %v2198
        %v2203 = vand.u32 2147483647, %v2130
        %vm2204 = vcmp.eq.f32.partialorder %v2203, 8.507059e+37
        %v2205 = vand.u32 %v2130, 2147483648
        %v2206 = vor.u32 1.1754944e-38, %v2205
        %v2207 = vsel %vm2204, %v2206, %v2202
        %v2208 = vmul.f32 1.0, %v2207
        %v2209 = vrcp.pop %v2131
        %v2210 = vmul.f32 %v2131, %v2209
        %v2211 = vsub.f32 1.0, %v2210
        %v2212 = vmul.f32 %v2209, %v2211
        %v2213 = vadd.f32 %v2209, %v2212
        %vm2214 = vweird.f32 %v2131
        %vm2215 = vweird.f32 %v2209
        %vm2216 = vmor %vm2214, %vm2215
        %v2217 = vsel %vm2216, %v2209, %v2213
        %v2218 = vand.u32 2147483647, %v2131
        %vm2219 = vcmp.eq.f32.partialorder %v2218, 8.507059e+37
        %v2220 = vand.u32 %v2131, 2147483648
        %v2221 = vor.u32 1.1754944e-38, %v2220
        %v2222 = vsel %vm2219, %v2221, %v2217
        %v2223 = vmul.f32 1.0, %v2222
        %v2224 = vrcp.pop %v2132
        %v2225 = vmul.f32 %v2132, %v2224
        %v2226 = vsub.f32 1.0, %v2225
        %v2227 = vmul.f32 %v2224, %v2226
        %v2228 = vadd.f32 %v2224, %v2227
        %vm2229 = vweird.f32 %v2132
        %vm2230 = vweird.f32 %v2224
        %vm2231 = vmor %vm2229, %vm2230
        %v2232 = vsel %vm2231, %v2224, %v2228
        %v2233 = vand.u32 2147483647, %v2132
        %vm2234 = vcmp.eq.f32.partialorder %v2233, 8.507059e+37
        %v2235 = vand.u32 %v2132, 2147483648
        %v2236 = vor.u32 1.1754944e-38, %v2235
        %v2237 = vsel %vm2234, %v2236, %v2232
        %v2238 = vmul.f32 1.0, %v2237
        %v2239 = vrcp.pop %v2133
        %v2240 = vmul.f32 %v2133, %v2239
        %v2241 = vsub.f32 1.0, %v2240
        %v2242 = vmul.f32 %v2239, %v2241
        %v2243 = vadd.f32 %v2239, %v2242
        %vm2244 = vweird.f32 %v2133
        %vm2245 = vweird.f32 %v2239
        %vm2246 = vmor %vm2244, %vm2245
        %v2247 = vsel %vm2246, %v2239, %v2243
        %v2248 = vand.u32 2147483647, %v2133
        %vm2249 = vcmp.eq.f32.partialorder %v2248, 8.507059e+37
        %v2250 = vand.u32 %v2133, 2147483648
        %v2251 = vor.u32 1.1754944e-38, %v2250
        %v2252 = vsel %vm2249, %v2251, %v2247
        %v2253 = vmul.f32 1.0, %v2252
        %v2254 = vrcp.pop %v2134
        %v2255 = vmul.f32 %v2134, %v2254
        %v2256 = vsub.f32 1.0, %v2255
        %v2257 = vmul.f32 %v2254, %v2256
        %v2258 = vadd.f32 %v2254, %v2257
        %vm2259 = vweird.f32 %v2134
        %vm2260 = vweird.f32 %v2254
        %vm2261 = vmor %vm2259, %vm2260
        %v2262 = vsel %vm2261, %v2254, %v2258
        %v2263 = vand.u32 2147483647, %v2134
        %vm2264 = vcmp.eq.f32.partialorder %v2263, 8.507059e+37
        %v2265 = vand.u32 %v2134, 2147483648
        %v2266 = vor.u32 1.1754944e-38, %v2265
        %v2267 = vsel %vm2264, %v2266, %v2262
        %v2268 = vmul.f32 1.0, %v2267
        %v2269 = vrcp.pop %v2135
        %v2270 = vmul.f32 %v2135, %v2269
        %v2271 = vsub.f32 1.0, %v2270
        %v2272 = vmul.f32 %v2269, %v2271
        %v2273 = vadd.f32 %v2269, %v2272
        %vm2274 = vweird.f32 %v2135
        %vm2275 = vweird.f32 %v2269
        %vm2276 = vmor %vm2274, %vm2275
        %v2277 = vsel %vm2276, %v2269, %v2273
        %v2278 = vand.u32 2147483647, %v2135
        %vm2279 = vcmp.eq.f32.partialorder %v2278, 8.507059e+37
        %v2280 = vand.u32 %v2135, 2147483648
        %v2281 = vor.u32 1.1754944e-38, %v2280
        %v2282 = vsel %vm2279, %v2281, %v2277
        %v2283 = vmul.f32 1.0, %v2282
        %v2284 = vrcp.pop %v2136
        %v2285 = vmul.f32 %v2136, %v2284
        %v2286 = vsub.f32 1.0, %v2285
        %v2287 = vmul.f32 %v2284, %v2286
        %v2288 = vadd.f32 %v2284, %v2287
        %vm2289 = vweird.f32 %v2136
        %vm2290 = vweird.f32 %v2284
        %vm2291 = vmor %vm2289, %vm2290
        %v2292 = vsel %vm2291, %v2284, %v2288
        %v2293 = vand.u32 2147483647, %v2136
        %vm2294 = vcmp.eq.f32.partialorder %v2293, 8.507059e+37
        %v2295 = vand.u32 %v2136, 2147483648
        %v2296 = vor.u32 1.1754944e-38, %v2295
        %v2297 = vsel %vm2294, %v2296, %v2292
        %v2298 = vmul.f32 1.0, %v2297
        %v2299 = vrcp.pop %v2137
        %v2300 = vmul.f32 %v2137, %v2299
        %v2301 = vsub.f32 1.0, %v2300
        %v2302 = vmul.f32 %v2299, %v2301
        %v2303 = vadd.f32 %v2299, %v2302
        %vm2304 = vweird.f32 %v2137
        %vm2305 = vweird.f32 %v2299
        %vm2306 = vmor %vm2304, %vm2305
        %v2307 = vsel %vm2306, %v2299, %v2303
        %v2308 = vand.u32 2147483647, %v2137
        %vm2309 = vcmp.eq.f32.partialorder %v2308, 8.507059e+37
        %v2310 = vand.u32 %v2137, 2147483648
        %v2311 = vor.u32 1.1754944e-38, %v2310
        %v2312 = vsel %vm2309, %v2311, %v2307
        %v2313 = vmul.f32 1.0, %v2312
        %v2314 = vrcp.pop %v2138
        %v2315 = vmul.f32 %v2138, %v2314
        %v2316 = vsub.f32 1.0, %v2315
        %v2317 = vmul.f32 %v2314, %v2316
        %v2318 = vadd.f32 %v2314, %v2317
        %vm2319 = vweird.f32 %v2138
        %vm2320 = vweird.f32 %v2314
        %vm2321 = vmor %vm2319, %vm2320
        %v2322 = vsel %vm2321, %v2314, %v2318
        %v2323 = vand.u32 2147483647, %v2138
        %vm2324 = vcmp.eq.f32.partialorder %v2323, 8.507059e+37
        %v2325 = vand.u32 %v2138, 2147483648
        %v2326 = vor.u32 1.1754944e-38, %v2325
        %v2327 = vsel %vm2324, %v2326, %v2322
        %v2328 = vmul.f32 1.0, %v2327
        %v2329 = vrcp.pop %v2139
        %v2330 = vmul.f32 %v2139, %v2329
        %v2331 = vsub.f32 1.0, %v2330
        %v2332 = vmul.f32 %v2329, %v2331
        %v2333 = vadd.f32 %v2329, %v2332
        %vm2334 = vweird.f32 %v2139
        %vm2335 = vweird.f32 %v2329
        %vm2336 = vmor %vm2334, %vm2335
        %v2337 = vsel %vm2336, %v2329, %v2333
        %v2338 = vand.u32 2147483647, %v2139
        %vm2339 = vcmp.eq.f32.partialorder %v2338, 8.507059e+37
        %v2340 = vand.u32 %v2139, 2147483648
        %v2341 = vor.u32 1.1754944e-38, %v2340
        %v2342 = vsel %vm2339, %v2341, %v2337
        %v2343 = vmul.f32 1.0, %v2342
        %v2344 = vrcp.pop %v2140
        %v2345 = vmul.f32 %v2140, %v2344
        %v2346 = vsub.f32 1.0, %v2345
        %v2347 = vmul.f32 %v2344, %v2346
        %v2348 = vadd.f32 %v2344, %v2347
        %vm2349 = vweird.f32 %v2140
        %vm2350 = vweird.f32 %v2344
        %vm2351 = vmor %vm2349, %vm2350
        %v2352 = vsel %vm2351, %v2344, %v2348
        %v2353 = vand.u32 2147483647, %v2140
        %vm2354 = vcmp.eq.f32.partialorder %v2353, 8.507059e+37
        %v2355 = vand.u32 %v2140, 2147483648
        %v2356 = vor.u32 1.1754944e-38, %v2355
        %v2357 = vsel %vm2354, %v2356, %v2352
        %v2358 = vmul.f32 1.0, %v2357
        %v2359 = vrcp.pop %v2141
        %v2360 = vmul.f32 %v2141, %v2359
        %v2361 = vsub.f32 1.0, %v2360
        %v2362 = vmul.f32 %v2359, %v2361
        %v2363 = vadd.f32 %v2359, %v2362
        %vm2364 = vweird.f32 %v2141
        %vm2365 = vweird.f32 %v2359
        %vm2366 = vmor %vm2364, %vm2365
        %v2367 = vsel %vm2366, %v2359, %v2363
        %v2368 = vand.u32 2147483647, %v2141
        %vm2369 = vcmp.eq.f32.partialorder %v2368, 8.507059e+37
        %v2370 = vand.u32 %v2141, 2147483648
        %v2371 = vor.u32 1.1754944e-38, %v2370
        %v2372 = vsel %vm2369, %v2371, %v2367
        %v2373 = vmul.f32 1.0, %v2372
        %v2374 = vrcp.pop %v2142
        %v2375 = vmul.f32 %v2142, %v2374
        %v2376 = vsub.f32 1.0, %v2375
        %v2377 = vmul.f32 %v2374, %v2376
        %v2378 = vadd.f32 %v2374, %v2377
        %vm2379 = vweird.f32 %v2142
        %vm2380 = vweird.f32 %v2374
        %vm2381 = vmor %vm2379, %vm2380
        %v2382 = vsel %vm2381, %v2374, %v2378
        %v2383 = vand.u32 2147483647, %v2142
        %vm2384 = vcmp.eq.f32.partialorder %v2383, 8.507059e+37
        %v2385 = vand.u32 %v2142, 2147483648
        %v2386 = vor.u32 1.1754944e-38, %v2385
        %v2387 = vsel %vm2384, %v2386, %v2382
        %v2388 = vmul.f32 1.0, %v2387
        %v2389 = vrcp.pop %v2143
        %v2390 = vmul.f32 %v2143, %v2389
        %v2391 = vsub.f32 1.0, %v2390
        %v2392 = vmul.f32 %v2389, %v2391
        %v2393 = vadd.f32 %v2389, %v2392
        %vm2394 = vweird.f32 %v2143
        %vm2395 = vweird.f32 %v2389
        %vm2396 = vmor %vm2394, %vm2395
        %v2397 = vsel %vm2396, %v2389, %v2393
        %v2398 = vand.u32 2147483647, %v2143
        %vm2399 = vcmp.eq.f32.partialorder %v2398, 8.507059e+37
        %v2400 = vand.u32 %v2143, 2147483648
        %v2401 = vor.u32 1.1754944e-38, %v2400
        %v2402 = vsel %vm2399, %v2401, %v2397
        %v2403 = vmul.f32 1.0, %v2402
        %v2404 = vrcp.pop %v2144
        %v2405 = vmul.f32 %v2144, %v2404
        %v2406 = vsub.f32 1.0, %v2405
        %v2407 = vmul.f32 %v2404, %v2406
        %v2408 = vadd.f32 %v2404, %v2407
        %vm2409 = vweird.f32 %v2144
        %vm2410 = vweird.f32 %v2404
        %vm2411 = vmor %vm2409, %vm2410
        %v2412 = vsel %vm2411, %v2404, %v2408
        %v2413 = vand.u32 2147483647, %v2144
        %vm2414 = vcmp.eq.f32.partialorder %v2413, 8.507059e+37
        %v2415 = vand.u32 %v2144, 2147483648
        %v2416 = vor.u32 1.1754944e-38, %v2415
        %v2417 = vsel %vm2414, %v2416, %v2412
        %v2418 = vmul.f32 1.0, %v2417
        %v2419 = vrcp.pop %v2145
        %v2420 = vmul.f32 %v2145, %v2419
        %v2421 = vsub.f32 1.0, %v2420
        %v2422 = vmul.f32 %v2419, %v2421
        %v2423 = vadd.f32 %v2419, %v2422
        %vm2424 = vweird.f32 %v2145
        %vm2425 = vweird.f32 %v2419
        %vm2426 = vmor %vm2424, %vm2425
        %v2427 = vsel %vm2426, %v2419, %v2423
        %v2428 = vand.u32 2147483647, %v2145
        %vm2429 = vcmp.eq.f32.partialorder %v2428, 8.507059e+37
        %v2430 = vand.u32 %v2145, 2147483648
        %v2431 = vor.u32 1.1754944e-38, %v2430
        %v2432 = vsel %vm2429, %v2431, %v2427
        %v2433 = vmul.f32 1.0, %v2432
        %v2434 = vrcp.pop %v2146
        %v2435 = vmul.f32 %v2146, %v2434
        %v2436 = vsub.f32 1.0, %v2435
        %v2437 = vmul.f32 %v2434, %v2436
        %v2438 = vadd.f32 %v2434, %v2437
        %vm2439 = vweird.f32 %v2146
        %vm2440 = vweird.f32 %v2434
        %vm2441 = vmor %vm2439, %vm2440
        %v2442 = vsel %vm2441, %v2434, %v2438
        %v2443 = vand.u32 2147483647, %v2146
        %vm2444 = vcmp.eq.f32.partialorder %v2443, 8.507059e+37
        %v2445 = vand.u32 %v2146, 2147483648
        %v2446 = vor.u32 1.1754944e-38, %v2445
        %v2447 = vsel %vm2444, %v2446, %v2442
        %v2448 = vmul.f32 1.0, %v2447
        %v2449 = vrcp.pop %v2147
        %v2450 = vmul.f32 %v2147, %v2449
        %v2451 = vsub.f32 1.0, %v2450
        %v2452 = vmul.f32 %v2449, %v2451
        %v2453 = vadd.f32 %v2449, %v2452
        %vm2454 = vweird.f32 %v2147
        %vm2455 = vweird.f32 %v2449
        %vm2456 = vmor %vm2454, %vm2455
        %v2457 = vsel %vm2456, %v2449, %v2453
        %v2458 = vand.u32 2147483647, %v2147
        %vm2459 = vcmp.eq.f32.partialorder %v2458, 8.507059e+37
        %v2460 = vand.u32 %v2147, 2147483648
        %v2461 = vor.u32 1.1754944e-38, %v2460
        %v2462 = vsel %vm2459, %v2461, %v2457
        %v2463 = vmul.f32 1.0, %v2462
        %v2464 = vrcp.pop %v2148
        %v2465 = vmul.f32 %v2148, %v2464
        %v2466 = vsub.f32 1.0, %v2465
        %v2467 = vmul.f32 %v2464, %v2466
        %v2468 = vadd.f32 %v2464, %v2467
        %vm2469 = vweird.f32 %v2148
        %vm2470 = vweird.f32 %v2464
        %vm2471 = vmor %vm2469, %vm2470
        %v2472 = vsel %vm2471, %v2464, %v2468
        %v2473 = vand.u32 2147483647, %v2148
        %vm2474 = vcmp.eq.f32.partialorder %v2473, 8.507059e+37
        %v2475 = vand.u32 %v2148, 2147483648
        %v2476 = vor.u32 1.1754944e-38, %v2475
        %v2477 = vsel %vm2474, %v2476, %v2472
        %v2478 = vmul.f32 1.0, %v2477
        %v2479 = vrcp.pop %v2149
        %v2480 = vmul.f32 %v2149, %v2479
        %v2481 = vsub.f32 1.0, %v2480
        %v2482 = vmul.f32 %v2479, %v2481
        %v2483 = vadd.f32 %v2479, %v2482
        %vm2484 = vweird.f32 %v2149
        %vm2485 = vweird.f32 %v2479
        %vm2486 = vmor %vm2484, %vm2485
        %v2487 = vsel %vm2486, %v2479, %v2483
        %v2488 = vand.u32 2147483647, %v2149
        %vm2489 = vcmp.eq.f32.partialorder %v2488, 8.507059e+37
        %v2490 = vand.u32 %v2149, 2147483648
        %v2491 = vor.u32 1.1754944e-38, %v2490
        %v2492 = vsel %vm2489, %v2491, %v2487
        %v2493 = vmul.f32 1.0, %v2492
        %v2494 = vrcp.pop %v2150
        %v2495 = vmul.f32 %v2150, %v2494
        %v2496 = vsub.f32 1.0, %v2495
        %v2497 = vmul.f32 %v2494, %v2496
        %v2498 = vadd.f32 %v2494, %v2497
        %vm2499 = vweird.f32 %v2150
        %vm2500 = vweird.f32 %v2494
        %vm2501 = vmor %vm2499, %vm2500
        %v2502 = vsel %vm2501, %v2494, %v2498
        %v2503 = vand.u32 2147483647, %v2150
        %vm2504 = vcmp.eq.f32.partialorder %v2503, 8.507059e+37
        %v2505 = vand.u32 %v2150, 2147483648
        %v2506 = vor.u32 1.1754944e-38, %v2505
        %v2507 = vsel %vm2504, %v2506, %v2502
        %v2508 = vmul.f32 1.0, %v2507
        %v2509 = vrcp.pop %v2151
        %v2510 = vmul.f32 %v2151, %v2509
        %v2511 = vsub.f32 1.0, %v2510
        %v2512 = vmul.f32 %v2509, %v2511
        %v2513 = vadd.f32 %v2509, %v2512
        %vm2514 = vweird.f32 %v2151
        %vm2515 = vweird.f32 %v2509
        %vm2516 = vmor %vm2514, %vm2515
        %v2517 = vsel %vm2516, %v2509, %v2513
        %v2518 = vand.u32 2147483647, %v2151
        %vm2519 = vcmp.eq.f32.partialorder %v2518, 8.507059e+37
        %v2520 = vand.u32 %v2151, 2147483648
        %v2521 = vor.u32 1.1754944e-38, %v2520
        %v2522 = vsel %vm2519, %v2521, %v2517
        %v2523 = vmul.f32 1.0, %v2522
        %v2524 = vrcp.pop %v2152
        %v2525 = vmul.f32 %v2152, %v2524
        %v2526 = vsub.f32 1.0, %v2525
        %v2527 = vmul.f32 %v2524, %v2526
        %v2528 = vadd.f32 %v2524, %v2527
        %vm2529 = vweird.f32 %v2152
        %vm2530 = vweird.f32 %v2524
        %vm2531 = vmor %vm2529, %vm2530
        %v2532 = vsel %vm2531, %v2524, %v2528
        %v2533 = vand.u32 2147483647, %v2152
        %vm2534 = vcmp.eq.f32.partialorder %v2533, 8.507059e+37
        %v2535 = vand.u32 %v2152, 2147483648
        %v2536 = vor.u32 1.1754944e-38, %v2535
        %v2537 = vsel %vm2534, %v2536, %v2532
        %v2538 = vmul.f32 1.0, %v2537
        %v2539 = vrcp.pop %v2153
        %v2540 = vmul.f32 %v2153, %v2539
        %v2541 = vsub.f32 1.0, %v2540
        %v2542 = vmul.f32 %v2539, %v2541
        %v2543 = vadd.f32 %v2539, %v2542
        %vm2544 = vweird.f32 %v2153
        %vm2545 = vweird.f32 %v2539
        %vm2546 = vmor %vm2544, %vm2545
        %v2547 = vsel %vm2546, %v2539, %v2543
        %v2548 = vand.u32 2147483647, %v2153
        %vm2549 = vcmp.eq.f32.partialorder %v2548, 8.507059e+37
        %v2550 = vand.u32 %v2153, 2147483648
        %v2551 = vor.u32 1.1754944e-38, %v2550
        %v2552 = vsel %vm2549, %v2551, %v2547
        %v2553 = vmul.f32 1.0, %v2552
        %v2554 = vrcp.pop %v2154
        %v2555 = vmul.f32 %v2154, %v2554
        %v2556 = vsub.f32 1.0, %v2555
        %v2557 = vmul.f32 %v2554, %v2556
        %v2558 = vadd.f32 %v2554, %v2557
        %vm2559 = vweird.f32 %v2154
        %vm2560 = vweird.f32 %v2554
        %vm2561 = vmor %vm2559, %vm2560
        %v2562 = vsel %vm2561, %v2554, %v2558
        %v2563 = vand.u32 2147483647, %v2154
        %vm2564 = vcmp.eq.f32.partialorder %v2563, 8.507059e+37
        %v2565 = vand.u32 %v2154, 2147483648
        %v2566 = vor.u32 1.1754944e-38, %v2565
        %v2567 = vsel %vm2564, %v2566, %v2562
        %v2568 = vmul.f32 1.0, %v2567
        %v2569 = vrcp.pop %v2155
        %v2570 = vmul.f32 %v2155, %v2569
        %v2571 = vsub.f32 1.0, %v2570
        %v2572 = vmul.f32 %v2569, %v2571
        %v2573 = vadd.f32 %v2569, %v2572
        %vm2574 = vweird.f32 %v2155
        %vm2575 = vweird.f32 %v2569
        %vm2576 = vmor %vm2574, %vm2575
        %v2577 = vsel %vm2576, %v2569, %v2573
        %v2578 = vand.u32 2147483647, %v2155
        %vm2579 = vcmp.eq.f32.partialorder %v2578, 8.507059e+37
        %v2580 = vand.u32 %v2155, 2147483648
        %v2581 = vor.u32 1.1754944e-38, %v2580
        %v2582 = vsel %vm2579, %v2581, %v2577
        %v2583 = vmul.f32 1.0, %v2582
        %v2584 = vrcp.pop %v2156
        %v2585 = vmul.f32 %v2156, %v2584
        %v2586 = vsub.f32 1.0, %v2585
        %v2587 = vmul.f32 %v2584, %v2586
        %v2588 = vadd.f32 %v2584, %v2587
        %vm2589 = vweird.f32 %v2156
        %vm2590 = vweird.f32 %v2584
        %vm2591 = vmor %vm2589, %vm2590
        %v2592 = vsel %vm2591, %v2584, %v2588
        %v2593 = vand.u32 2147483647, %v2156
        %vm2594 = vcmp.eq.f32.partialorder %v2593, 8.507059e+37
        %v2595 = vand.u32 %v2156, 2147483648
        %v2596 = vor.u32 1.1754944e-38, %v2595
        %v2597 = vsel %vm2594, %v2596, %v2592
        %v2598 = vmul.f32 1.0, %v2597
        %v2599 = vrcp.pop %v2157
        %v2600 = vmul.f32 %v2157, %v2599
        %v2601 = vsub.f32 1.0, %v2600
        %v2602 = vmul.f32 %v2599, %v2601
        %v2603 = vadd.f32 %v2599, %v2602
        %vm2604 = vweird.f32 %v2157
        %vm2605 = vweird.f32 %v2599
        %vm2606 = vmor %vm2604, %vm2605
        %v2607 = vsel %vm2606, %v2599, %v2603
        %v2608 = vand.u32 2147483647, %v2157
        %vm2609 = vcmp.eq.f32.partialorder %v2608, 8.507059e+37
        %v2610 = vand.u32 %v2157, 2147483648
        %v2611 = vor.u32 1.1754944e-38, %v2610
        %v2612 = vsel %vm2609, %v2611, %v2607
        %v2613 = vmul.f32 1.0, %v2612
        %v2614 = vrcp.pop %v2158
        %v2615 = vmul.f32 %v2158, %v2614
        %v2616 = vsub.f32 1.0, %v2615
        %v2617 = vmul.f32 %v2614, %v2616
        %v2618 = vadd.f32 %v2614, %v2617
        %vm2619 = vweird.f32 %v2158
        %vm2620 = vweird.f32 %v2614
        %vm2621 = vmor %vm2619, %vm2620
        %v2622 = vsel %vm2621, %v2614, %v2618
        %v2623 = vand.u32 2147483647, %v2158
        %vm2624 = vcmp.eq.f32.partialorder %v2623, 8.507059e+37
        %v2625 = vand.u32 %v2158, 2147483648
        %v2626 = vor.u32 1.1754944e-38, %v2625
        %v2627 = vsel %vm2624, %v2626, %v2622
        %v2628 = vmul.f32 1.0, %v2627
        %v2629 = vrcp.pop %v2159
        %v2630 = vmul.f32 %v2159, %v2629
        %v2631 = vsub.f32 1.0, %v2630
        %v2632 = vmul.f32 %v2629, %v2631
        %v2633 = vadd.f32 %v2629, %v2632
        %vm2634 = vweird.f32 %v2159
        %vm2635 = vweird.f32 %v2629
        %vm2636 = vmor %vm2634, %vm2635
        %v2637 = vsel %vm2636, %v2629, %v2633
        %v2638 = vand.u32 2147483647, %v2159
        %vm2639 = vcmp.eq.f32.partialorder %v2638, 8.507059e+37
        %v2640 = vand.u32 %v2159, 2147483648
        %v2641 = vor.u32 1.1754944e-38, %v2640
        %v2642 = vsel %vm2639, %v2641, %v2637
        %v2643 = vmul.f32 1.0, %v2642
        %v2644 = vrcp.pop %v2160
        %v2645 = vmul.f32 %v2160, %v2644
        %v2646 = vsub.f32 1.0, %v2645
        %v2647 = vmul.f32 %v2644, %v2646
        %v2648 = vadd.f32 %v2644, %v2647
        %vm2649 = vweird.f32 %v2160
        %vm2650 = vweird.f32 %v2644
        %vm2651 = vmor %vm2649, %vm2650
        %v2652 = vsel %vm2651, %v2644, %v2648
        %v2653 = vand.u32 2147483647, %v2160
        %vm2654 = vcmp.eq.f32.partialorder %v2653, 8.507059e+37
        %v2655 = vand.u32 %v2160, 2147483648
        %v2656 = vor.u32 1.1754944e-38, %v2655
        %v2657 = vsel %vm2654, %v2656, %v2652
        %v2658 = vmul.f32 1.0, %v2657
        %v2659 = vrcp.pop %v2161
        %v2660 = vmul.f32 %v2161, %v2659
        %v2661 = vsub.f32 1.0, %v2660
        %v2662 = vmul.f32 %v2659, %v2661
        %v2663 = vadd.f32 %v2659, %v2662
        %vm2664 = vweird.f32 %v2161
        %vm2665 = vweird.f32 %v2659
        %vm2666 = vmor %vm2664, %vm2665
        %v2667 = vsel %vm2666, %v2659, %v2663
        %v2668 = vand.u32 2147483647, %v2161
        %vm2669 = vcmp.eq.f32.partialorder %v2668, 8.507059e+37
        %v2670 = vand.u32 %v2161, 2147483648
        %v2671 = vor.u32 1.1754944e-38, %v2670
        %v2672 = vsel %vm2669, %v2671, %v2667
        %v2673 = vmul.f32 1.0, %v2672
        %v2674 = vrcp.pop %v2162
        %v2675 = vmul.f32 %v2162, %v2674
        %v2676 = vsub.f32 1.0, %v2675
        %v2677 = vmul.f32 %v2674, %v2676
        %v2678 = vadd.f32 %v2674, %v2677
        %vm2679 = vweird.f32 %v2162
        %vm2680 = vweird.f32 %v2674
        %vm2681 = vmor %vm2679, %vm2680
        %v2682 = vsel %vm2681, %v2674, %v2678
        %v2683 = vand.u32 2147483647, %v2162
        %vm2684 = vcmp.eq.f32.partialorder %v2683, 8.507059e+37
        %v2685 = vand.u32 %v2162, 2147483648
        %v2686 = vor.u32 1.1754944e-38, %v2685
        %v2687 = vsel %vm2684, %v2686, %v2682
        %v2688 = vmul.f32 1.0, %v2687
        %v2689 = vrcp.pop %v2163
        %v2690 = vmul.f32 %v2163, %v2689
        %v2691 = vsub.f32 1.0, %v2690
        %v2692 = vmul.f32 %v2689, %v2691
        %v2693 = vadd.f32 %v2689, %v2692
        %vm2694 = vweird.f32 %v2163
        %vm2695 = vweird.f32 %v2689
        %vm2696 = vmor %vm2694, %vm2695
        %v2697 = vsel %vm2696, %v2689, %v2693
        %v2698 = vand.u32 2147483647, %v2163
        %vm2699 = vcmp.eq.f32.partialorder %v2698, 8.507059e+37
        %v2700 = vand.u32 %v2163, 2147483648
        %v2701 = vor.u32 1.1754944e-38, %v2700
        %v2702 = vsel %vm2699, %v2701, %v2697
        %v2703 = vmul.f32 1.0, %v2702
        %v2704 = vrcp.pop %v2164
        %v2705 = vmul.f32 %v2164, %v2704
        %v2706 = vsub.f32 1.0, %v2705
        %v2707 = vmul.f32 %v2704, %v2706
        %v2708 = vadd.f32 %v2704, %v2707
        %vm2709 = vweird.f32 %v2164
        %vm2710 = vweird.f32 %v2704
        %vm2711 = vmor %vm2709, %vm2710
        %v2712 = vsel %vm2711, %v2704, %v2708
        %v2713 = vand.u32 2147483647, %v2164
        %vm2714 = vcmp.eq.f32.partialorder %v2713, 8.507059e+37
        %v2715 = vand.u32 %v2164, 2147483648
        %v2716 = vor.u32 1.1754944e-38, %v2715
        %v2717 = vsel %vm2714, %v2716, %v2712
        %v2718 = vmul.f32 1.0, %v2717
        %v2719 = vrcp.pop %v2165
        %v2720 = vmul.f32 %v2165, %v2719
        %v2721 = vsub.f32 1.0, %v2720
        %v2722 = vmul.f32 %v2719, %v2721
        %v2723 = vadd.f32 %v2719, %v2722
        %vm2724 = vweird.f32 %v2165
        %vm2725 = vweird.f32 %v2719
        %vm2726 = vmor %vm2724, %vm2725
        %v2727 = vsel %vm2726, %v2719, %v2723
        %v2728 = vand.u32 2147483647, %v2165
        %vm2729 = vcmp.eq.f32.partialorder %v2728, 8.507059e+37
        %v2730 = vand.u32 %v2165, 2147483648
        %v2731 = vor.u32 1.1754944e-38, %v2730
        %v2732 = vsel %vm2729, %v2731, %v2727
        %v2733 = vmul.f32 1.0, %v2732
        %v2734 = vrcp.pop %v2166
        %v2735 = vmul.f32 %v2166, %v2734
        %v2736 = vsub.f32 1.0, %v2735
        %v2737 = vmul.f32 %v2734, %v2736
        %v2738 = vadd.f32 %v2734, %v2737
        %vm2739 = vweird.f32 %v2166
        %vm2740 = vweird.f32 %v2734
        %vm2741 = vmor %vm2739, %vm2740
        %v2742 = vsel %vm2741, %v2734, %v2738
        %v2743 = vand.u32 2147483647, %v2166
        %vm2744 = vcmp.eq.f32.partialorder %v2743, 8.507059e+37
        %v2745 = vand.u32 %v2166, 2147483648
        %v2746 = vor.u32 1.1754944e-38, %v2745
        %v2747 = vsel %vm2744, %v2746, %v2742
        %v2748 = vmul.f32 1.0, %v2747
        %v2749 = vrcp.pop %v2167
        %v2750 = vmul.f32 %v2167, %v2749
        %v2751 = vsub.f32 1.0, %v2750
        %v2752 = vmul.f32 %v2749, %v2751
        %v2753 = vadd.f32 %v2749, %v2752
        %vm2754 = vweird.f32 %v2167
        %vm2755 = vweird.f32 %v2749
        %vm2756 = vmor %vm2754, %vm2755
        %v2757 = vsel %vm2756, %v2749, %v2753
        %v2758 = vand.u32 2147483647, %v2167
        %vm2759 = vcmp.eq.f32.partialorder %v2758, 8.507059e+37
        %v2760 = vand.u32 %v2167, 2147483648
        %v2761 = vor.u32 1.1754944e-38, %v2760
        %v2762 = vsel %vm2759, %v2761, %v2757
        %v2763 = vmul.f32 1.0, %v2762
        %v2764 = vrcp.pop %v2168
        %v2765 = vmul.f32 %v2168, %v2764
        %v2766 = vsub.f32 1.0, %v2765
        %v2767 = vmul.f32 %v2764, %v2766
        %v2768 = vadd.f32 %v2764, %v2767
        %vm2769 = vweird.f32 %v2168
        %vm2770 = vweird.f32 %v2764
        %vm2771 = vmor %vm2769, %vm2770
        %v2772 = vsel %vm2771, %v2764, %v2768
        %v2773 = vand.u32 2147483647, %v2168
        %vm2774 = vcmp.eq.f32.partialorder %v2773, 8.507059e+37
        %v2775 = vand.u32 %v2168, 2147483648
        %v2776 = vor.u32 1.1754944e-38, %v2775
        %v2777 = vsel %vm2774, %v2776, %v2772
        %v2778 = vmul.f32 1.0, %v2777
        %v2779 = vrcp.pop %v2169
        %v2780 = vmul.f32 %v2169, %v2779
        %v2781 = vsub.f32 1.0, %v2780
        %v2782 = vmul.f32 %v2779, %v2781
        %v2783 = vadd.f32 %v2779, %v2782
        %vm2784 = vweird.f32 %v2169
        %vm2785 = vweird.f32 %v2779
        %vm2786 = vmor %vm2784, %vm2785
        %v2787 = vsel %vm2786, %v2779, %v2783
        %v2788 = vand.u32 2147483647, %v2169
        %vm2789 = vcmp.eq.f32.partialorder %v2788, 8.507059e+37
        %v2790 = vand.u32 %v2169, 2147483648
        %v2791 = vor.u32 1.1754944e-38, %v2790
        %v2792 = vsel %vm2789, %v2791, %v2787
        %v2793 = vmul.f32 1.0, %v2792
        %v2794 = vrcp.pop %v2170
        %v2795 = vmul.f32 %v2170, %v2794
        %v2796 = vsub.f32 1.0, %v2795
        %v2797 = vmul.f32 %v2794, %v2796
        %v2798 = vadd.f32 %v2794, %v2797
        %vm2799 = vweird.f32 %v2170
        %vm2800 = vweird.f32 %v2794
        %vm2801 = vmor %vm2799, %vm2800
        %v2802 = vsel %vm2801, %v2794, %v2798
        %v2803 = vand.u32 2147483647, %v2170
        %vm2804 = vcmp.eq.f32.partialorder %v2803, 8.507059e+37
        %v2805 = vand.u32 %v2170, 2147483648
        %v2806 = vor.u32 1.1754944e-38, %v2805
        %v2807 = vsel %vm2804, %v2806, %v2802
        %v2808 = vmul.f32 1.0, %v2807
        %v2809 = vrcp.pop %v2171
        %v2810 = vmul.f32 %v2171, %v2809
        %v2811 = vsub.f32 1.0, %v2810
        %v2812 = vmul.f32 %v2809, %v2811
        %v2813 = vadd.f32 %v2809, %v2812
        %vm2814 = vweird.f32 %v2171
        %vm2815 = vweird.f32 %v2809
        %vm2816 = vmor %vm2814, %vm2815
        %v2817 = vsel %vm2816, %v2809, %v2813
        %v2818 = vand.u32 2147483647, %v2171
        %vm2819 = vcmp.eq.f32.partialorder %v2818, 8.507059e+37
        %v2820 = vand.u32 %v2171, 2147483648
        %v2821 = vor.u32 1.1754944e-38, %v2820
        %v2822 = vsel %vm2819, %v2821, %v2817
        %v2823 = vmul.f32 1.0, %v2822
        %v2824 = vrcp.pop %v2172
        %v2825 = vmul.f32 %v2172, %v2824
        %v2826 = vsub.f32 1.0, %v2825
        %v2827 = vmul.f32 %v2824, %v2826
        %v2828 = vadd.f32 %v2824, %v2827
        %vm2829 = vweird.f32 %v2172
        %vm2830 = vweird.f32 %v2824
        %vm2831 = vmor %vm2829, %vm2830
        %v2832 = vsel %vm2831, %v2824, %v2828
        %v2833 = vand.u32 2147483647, %v2172
        %vm2834 = vcmp.eq.f32.partialorder %v2833, 8.507059e+37
        %v2835 = vand.u32 %v2172, 2147483648
        %v2836 = vor.u32 1.1754944e-38, %v2835
        %v2837 = vsel %vm2834, %v2836, %v2832
        %v2838 = vmul.f32 1.0, %v2837
        %v2839 = vrcp.pop %v2173
        %v2840 = vmul.f32 %v2173, %v2839
        %v2841 = vsub.f32 1.0, %v2840
        %v2842 = vmul.f32 %v2839, %v2841
        %v2843 = vadd.f32 %v2839, %v2842
        %vm2844 = vweird.f32 %v2173
        %vm2845 = vweird.f32 %v2839
        %vm2846 = vmor %vm2844, %vm2845
        %v2847 = vsel %vm2846, %v2839, %v2843
        %v2848 = vand.u32 2147483647, %v2173
        %vm2849 = vcmp.eq.f32.partialorder %v2848, 8.507059e+37
        %v2850 = vand.u32 %v2173, 2147483648
        %v2851 = vor.u32 1.1754944e-38, %v2850
        %v2852 = vsel %vm2849, %v2851, %v2847
        %v2853 = vmul.f32 1.0, %v2852
        %v2854 = vrcp.pop %v2174
        %v2855 = vmul.f32 %v2174, %v2854
        %v2856 = vsub.f32 1.0, %v2855
        %v2857 = vmul.f32 %v2854, %v2856
        %v2858 = vadd.f32 %v2854, %v2857
        %vm2859 = vweird.f32 %v2174
        %vm2860 = vweird.f32 %v2854
        %vm2861 = vmor %vm2859, %vm2860
        %v2862 = vsel %vm2861, %v2854, %v2858
        %v2863 = vand.u32 2147483647, %v2174
        %vm2864 = vcmp.eq.f32.partialorder %v2863, 8.507059e+37
        %v2865 = vand.u32 %v2174, 2147483648
        %v2866 = vor.u32 1.1754944e-38, %v2865
        %v2867 = vsel %vm2864, %v2866, %v2862
        %v2868 = vmul.f32 1.0, %v2867
        %v2869 = vrcp.pop %v2175
        %v2870 = vmul.f32 %v2175, %v2869
        %v2871 = vsub.f32 1.0, %v2870
        %v2872 = vmul.f32 %v2869, %v2871
        %v2873 = vadd.f32 %v2869, %v2872
        %vm2874 = vweird.f32 %v2175
        %vm2875 = vweird.f32 %v2869
        %vm2876 = vmor %vm2874, %vm2875
        %v2877 = vsel %vm2876, %v2869, %v2873
        %v2878 = vand.u32 2147483647, %v2175
        %vm2879 = vcmp.eq.f32.partialorder %v2878, 8.507059e+37
        %v2880 = vand.u32 %v2175, 2147483648
        %v2881 = vor.u32 1.1754944e-38, %v2880
        %v2882 = vsel %vm2879, %v2881, %v2877
        %v2883 = vmul.f32 1.0, %v2882
        %v2884 = vrcp.pop %v2176
        %v2885 = vmul.f32 %v2176, %v2884
        %v2886 = vsub.f32 1.0, %v2885
        %v2887 = vmul.f32 %v2884, %v2886
        %v2888 = vadd.f32 %v2884, %v2887
        %vm2889 = vweird.f32 %v2176
        %vm2890 = vweird.f32 %v2884
        %vm2891 = vmor %vm2889, %vm2890
        %v2892 = vsel %vm2891, %v2884, %v2888
        %v2893 = vand.u32 2147483647, %v2176
        %vm2894 = vcmp.eq.f32.partialorder %v2893, 8.507059e+37
        %v2895 = vand.u32 %v2176, 2147483648
        %v2896 = vor.u32 1.1754944e-38, %v2895
        %v2897 = vsel %vm2894, %v2896, %v2892
        %v2898 = vmul.f32 1.0, %v2897
        %v2899 = vrcp.pop %v2177
        %v2900 = vmul.f32 %v2177, %v2899
        %v2901 = vsub.f32 1.0, %v2900
        %v2902 = vmul.f32 %v2899, %v2901
        %v2903 = vadd.f32 %v2899, %v2902
        %vm2904 = vweird.f32 %v2177
        %vm2905 = vweird.f32 %v2899
        %vm2906 = vmor %vm2904, %vm2905
        %v2907 = vsel %vm2906, %v2899, %v2903
        %v2908 = vand.u32 2147483647, %v2177
        %vm2909 = vcmp.eq.f32.partialorder %v2908, 8.507059e+37
        %v2910 = vand.u32 %v2177, 2147483648
        %v2911 = vor.u32 1.1754944e-38, %v2910
        %v2912 = vsel %vm2909, %v2911, %v2907
        %v2913 = vmul.f32 1.0, %v2912
        %v2914 = vrcp.pop %v2178
        %v2915 = vmul.f32 %v2178, %v2914
        %v2916 = vsub.f32 1.0, %v2915
        %v2917 = vmul.f32 %v2914, %v2916
        %v2918 = vadd.f32 %v2914, %v2917
        %vm2919 = vweird.f32 %v2178
        %vm2920 = vweird.f32 %v2914
        %vm2921 = vmor %vm2919, %vm2920
        %v2922 = vsel %vm2921, %v2914, %v2918
        %v2923 = vand.u32 2147483647, %v2178
        %vm2924 = vcmp.eq.f32.partialorder %v2923, 8.507059e+37
        %v2925 = vand.u32 %v2178, 2147483648
        %v2926 = vor.u32 1.1754944e-38, %v2925
        %v2927 = vsel %vm2924, %v2926, %v2922
        %v2928 = vmul.f32 1.0, %v2927
        %v2929 = vrcp.pop %v2179
        %v2930 = vmul.f32 %v2179, %v2929
        %v2931 = vsub.f32 1.0, %v2930
        %v2932 = vmul.f32 %v2929, %v2931
        %v2933 = vadd.f32 %v2929, %v2932
        %vm2934 = vweird.f32 %v2179
        %vm2935 = vweird.f32 %v2929
        %vm2936 = vmor %vm2934, %vm2935
        %v2937 = vsel %vm2936, %v2929, %v2933
        %v2938 = vand.u32 2147483647, %v2179
        %vm2939 = vcmp.eq.f32.partialorder %v2938, 8.507059e+37
        %v2940 = vand.u32 %v2179, 2147483648
        %v2941 = vor.u32 1.1754944e-38, %v2940
        %v2942 = vsel %vm2939, %v2941, %v2937
        %v2943 = vmul.f32 1.0, %v2942
        %v2944 = vrcp.pop %v2180
        %v2945 = vmul.f32 %v2180, %v2944
        %v2946 = vsub.f32 1.0, %v2945
        %v2947 = vmul.f32 %v2944, %v2946
        %v2948 = vadd.f32 %v2944, %v2947
        %vm2949 = vweird.f32 %v2180
        %vm2950 = vweird.f32 %v2944
        %vm2951 = vmor %vm2949, %vm2950
        %v2952 = vsel %vm2951, %v2944, %v2948
        %v2953 = vand.u32 2147483647, %v2180
        %vm2954 = vcmp.eq.f32.partialorder %v2953, 8.507059e+37
        %v2955 = vand.u32 %v2180, 2147483648
        %v2956 = vor.u32 1.1754944e-38, %v2955
        %v2957 = vsel %vm2954, %v2956, %v2952
        %v2958 = vmul.f32 1.0, %v2957
        %v2959 = vrcp.pop %v2181
        %v2960 = vmul.f32 %v2181, %v2959
        %v2961 = vsub.f32 1.0, %v2960
        %v2962 = vmul.f32 %v2959, %v2961
        %v2963 = vadd.f32 %v2959, %v2962
        %vm2964 = vweird.f32 %v2181
        %vm2965 = vweird.f32 %v2959
        %vm2966 = vmor %vm2964, %vm2965
        %v2967 = vsel %vm2966, %v2959, %v2963
        %v2968 = vand.u32 2147483647, %v2181
        %vm2969 = vcmp.eq.f32.partialorder %v2968, 8.507059e+37
        %v2970 = vand.u32 %v2181, 2147483648
        %v2971 = vor.u32 1.1754944e-38, %v2970
        %v2972 = vsel %vm2969, %v2971, %v2967
        %v2973 = vmul.f32 1.0, %v2972
        %v2974 = vrcp.pop %v2182
        %v2975 = vmul.f32 %v2182, %v2974
        %v2976 = vsub.f32 1.0, %v2975
        %v2977 = vmul.f32 %v2974, %v2976
        %v2978 = vadd.f32 %v2974, %v2977
        %vm2979 = vweird.f32 %v2182
        %vm2980 = vweird.f32 %v2974
        %vm2981 = vmor %vm2979, %vm2980
        %v2982 = vsel %vm2981, %v2974, %v2978
        %v2983 = vand.u32 2147483647, %v2182
        %vm2984 = vcmp.eq.f32.partialorder %v2983, 8.507059e+37
        %v2985 = vand.u32 %v2182, 2147483648
        %v2986 = vor.u32 1.1754944e-38, %v2985
        %v2987 = vsel %vm2984, %v2986, %v2982
        %v2988 = vmul.f32 1.0, %v2987
        %v2989 = vrcp.pop %v2183
        %v2990 = vmul.f32 %v2183, %v2989
        %v2991 = vsub.f32 1.0, %v2990
        %v2992 = vmul.f32 %v2989, %v2991
        %v2993 = vadd.f32 %v2989, %v2992
        %vm2994 = vweird.f32 %v2183
        %vm2995 = vweird.f32 %v2989
        %vm2996 = vmor %vm2994, %vm2995
        %v2997 = vsel %vm2996, %v2989, %v2993
        %v2998 = vand.u32 2147483647, %v2183
        %vm2999 = vcmp.eq.f32.partialorder %v2998, 8.507059e+37
        %v3000 = vand.u32 %v2183, 2147483648
        %v3001 = vor.u32 1.1754944e-38, %v3000
        %v3002 = vsel %vm2999, %v3001, %v2997
        %v3003 = vmul.f32 1.0, %v3002
        %v3004 = vrcp.pop %v2184
        %v3005 = vmul.f32 %v2184, %v3004
        %v3006 = vsub.f32 1.0, %v3005
        %v3007 = vmul.f32 %v3004, %v3006
        %v3008 = vadd.f32 %v3004, %v3007
        %vm3009 = vweird.f32 %v2184
        %vm3010 = vweird.f32 %v3004
        %vm3011 = vmor %vm3009, %vm3010
        %v3012 = vsel %vm3011, %v3004, %v3008
        %v3013 = vand.u32 2147483647, %v2184
        %vm3014 = vcmp.eq.f32.partialorder %v3013, 8.507059e+37
        %v3015 = vand.u32 %v2184, 2147483648
        %v3016 = vor.u32 1.1754944e-38, %v3015
        %v3017 = vsel %vm3014, %v3016, %v3012
        %v3018 = vmul.f32 1.0, %v3017
        %v3019 = vrcp.pop %v2185
        %v3020 = vmul.f32 %v2185, %v3019
        %v3021 = vsub.f32 1.0, %v3020
        %v3022 = vmul.f32 %v3019, %v3021
        %v3023 = vadd.f32 %v3019, %v3022
        %vm3024 = vweird.f32 %v2185
        %vm3025 = vweird.f32 %v3019
        %vm3026 = vmor %vm3024, %vm3025
        %v3027 = vsel %vm3026, %v3019, %v3023
        %v3028 = vand.u32 2147483647, %v2185
        %vm3029 = vcmp.eq.f32.partialorder %v3028, 8.507059e+37
        %v3030 = vand.u32 %v2185, 2147483648
        %v3031 = vor.u32 1.1754944e-38, %v3030
        %v3032 = vsel %vm3029, %v3031, %v3027
        %v3033 = vmul.f32 1.0, %v3032
        %v3034 = vrcp.pop %v2186
        %v3035 = vmul.f32 %v2186, %v3034
        %v3036 = vsub.f32 1.0, %v3035
        %v3037 = vmul.f32 %v3034, %v3036
        %v3038 = vadd.f32 %v3034, %v3037
        %vm3039 = vweird.f32 %v2186
        %vm3040 = vweird.f32 %v3034
        %vm3041 = vmor %vm3039, %vm3040
        %v3042 = vsel %vm3041, %v3034, %v3038
        %v3043 = vand.u32 2147483647, %v2186
        %vm3044 = vcmp.eq.f32.partialorder %v3043, 8.507059e+37
        %v3045 = vand.u32 %v2186, 2147483648
        %v3046 = vor.u32 1.1754944e-38, %v3045
        %v3047 = vsel %vm3044, %v3046, %v3042
        %v3048 = vmul.f32 1.0, %v3047
        %v3049 = vrcp.pop %v2187
        %v3050 = vmul.f32 %v2187, %v3049
        %v3051 = vsub.f32 1.0, %v3050
        %v3052 = vmul.f32 %v3049, %v3051
        %v3053 = vadd.f32 %v3049, %v3052
        %vm3054 = vweird.f32 %v2187
        %vm3055 = vweird.f32 %v3049
        %vm3056 = vmor %vm3054, %vm3055
        %v3057 = vsel %vm3056, %v3049, %v3053
        %v3058 = vand.u32 2147483647, %v2187
        %vm3059 = vcmp.eq.f32.partialorder %v3058, 8.507059e+37
        %v3060 = vand.u32 %v2187, 2147483648
        %v3061 = vor.u32 1.1754944e-38, %v3060
        %v3062 = vsel %vm3059, %v3061, %v3057
        %v3063 = vmul.f32 1.0, %v3062
        %v3064 = vrcp.pop %v2188
        %v3065 = vmul.f32 %v2188, %v3064
        %v3066 = vsub.f32 1.0, %v3065
        %v3067 = vmul.f32 %v3064, %v3066
        %v3068 = vadd.f32 %v3064, %v3067
        %vm3069 = vweird.f32 %v2188
        %vm3070 = vweird.f32 %v3064
        %vm3071 = vmor %vm3069, %vm3070
        %v3072 = vsel %vm3071, %v3064, %v3068
        %v3073 = vand.u32 2147483647, %v2188
        %vm3074 = vcmp.eq.f32.partialorder %v3073, 8.507059e+37
        %v3075 = vand.u32 %v2188, 2147483648
        %v3076 = vor.u32 1.1754944e-38, %v3075
        %v3077 = vsel %vm3074, %v3076, %v3072
        %v3078 = vmul.f32 1.0, %v3077
        %v3079 = vrcp.pop %v2189
        %v3080 = vmul.f32 %v2189, %v3079
        %v3081 = vsub.f32 1.0, %v3080
        %v3082 = vmul.f32 %v3079, %v3081
        %v3083 = vadd.f32 %v3079, %v3082
        %vm3084 = vweird.f32 %v2189
        %vm3085 = vweird.f32 %v3079
        %vm3086 = vmor %vm3084, %vm3085
        %v3087 = vsel %vm3086, %v3079, %v3083
        %v3088 = vand.u32 2147483647, %v2189
        %vm3089 = vcmp.eq.f32.partialorder %v3088, 8.507059e+37
        %v3090 = vand.u32 %v2189, 2147483648
        %v3091 = vor.u32 1.1754944e-38, %v3090
        %v3092 = vsel %vm3089, %v3091, %v3087
        %v3093 = vmul.f32 1.0, %v3092
        %v3094 = vrcp.pop %v2190
        %v3095 = vmul.f32 %v2190, %v3094
        %v3096 = vsub.f32 1.0, %v3095
        %v3097 = vmul.f32 %v3094, %v3096
        %v3098 = vadd.f32 %v3094, %v3097
        %vm3099 = vweird.f32 %v2190
        %vm3100 = vweird.f32 %v3094
        %vm3101 = vmor %vm3099, %vm3100
        %v3102 = vsel %vm3101, %v3094, %v3098
        %v3103 = vand.u32 2147483647, %v2190
        %vm3104 = vcmp.eq.f32.partialorder %v3103, 8.507059e+37
        %v3105 = vand.u32 %v2190, 2147483648
        %v3106 = vor.u32 1.1754944e-38, %v3105
        %v3107 = vsel %vm3104, %v3106, %v3102
        %v3108 = vmul.f32 1.0, %v3107
        %v3109 = vrcp.pop %v2191
        %v3110 = vmul.f32 %v2191, %v3109
        %v3111 = vsub.f32 1.0, %v3110
        %v3112 = vmul.f32 %v3109, %v3111
        %v3113 = vadd.f32 %v3109, %v3112
        %vm3114 = vweird.f32 %v2191
        %vm3115 = vweird.f32 %v3109
        %vm3116 = vmor %vm3114, %vm3115
        %v3117 = vsel %vm3116, %v3109, %v3113
        %v3118 = vand.u32 2147483647, %v2191
        %vm3119 = vcmp.eq.f32.partialorder %v3118, 8.507059e+37
        %v3120 = vand.u32 %v2191, 2147483648
        %v3121 = vor.u32 1.1754944e-38, %v3120
        %v3122 = vsel %vm3119, %v3121, %v3117
        %v3123 = vmul.f32 1.0, %v3122
        %v3124 = vrcp.pop %v2192
        %v3125 = vmul.f32 %v2192, %v3124
        %v3126 = vsub.f32 1.0, %v3125
        %v3127 = vmul.f32 %v3124, %v3126
        %v3128 = vadd.f32 %v3124, %v3127
        %vm3129 = vweird.f32 %v2192
        %vm3130 = vweird.f32 %v3124
        %vm3131 = vmor %vm3129, %vm3130
        %v3132 = vsel %vm3131, %v3124, %v3128
        %v3133 = vand.u32 2147483647, %v2192
        %vm3134 = vcmp.eq.f32.partialorder %v3133, 8.507059e+37
        %v3135 = vand.u32 %v2192, 2147483648
        %v3136 = vor.u32 1.1754944e-38, %v3135
        %v3137 = vsel %vm3134, %v3136, %v3132
        %v3138 = vmul.f32 1.0, %v3137
        %v3139 = vrcp.pop %v2193
        %v3140 = vmul.f32 %v2193, %v3139
        %v3141 = vsub.f32 1.0, %v3140
        %v3142 = vmul.f32 %v3139, %v3141
        %v3143 = vadd.f32 %v3139, %v3142
        %vm3144 = vweird.f32 %v2193
        %vm3145 = vweird.f32 %v3139
        %vm3146 = vmor %vm3144, %vm3145
        %v3147 = vsel %vm3146, %v3139, %v3143
        %v3148 = vand.u32 2147483647, %v2193
        %vm3149 = vcmp.eq.f32.partialorder %v3148, 8.507059e+37
        %v3150 = vand.u32 %v2193, 2147483648
        %v3151 = vor.u32 1.1754944e-38, %v3150
        %v3152 = vsel %vm3149, %v3151, %v3147
        %v3153 = vmul.f32 1.0, %v3152
        %3218 = vrot.lane.b32.xlu0 %v2208, 64
        %v3219 = vpop.permute.xlu0 %3218
        %3220 = vrot.lane.b32.xlu0 %v2223, 64
        %v3221 = vpop.permute.xlu0 %3220
        %3222 = vrot.lane.b32.xlu0 %v2238, 64
        %v3223 = vpop.permute.xlu0 %3222
        %3224 = vrot.lane.b32.xlu0 %v2253, 64
        %v3225 = vpop.permute.xlu0 %3224
        %3226 = vrot.lane.b32.xlu0 %v2268, 64
        %v3227 = vpop.permute.xlu0 %3226
        %3228 = vrot.lane.b32.xlu0 %v2283, 64
        %v3229 = vpop.permute.xlu0 %3228
        %3230 = vrot.lane.b32.xlu0 %v2298, 64
        %v3231 = vpop.permute.xlu0 %3230
        %3232 = vrot.lane.b32.xlu0 %v2313, 64
        %v3233 = vpop.permute.xlu0 %3232
        %3234 = vrot.lane.b32.xlu0 %v2328, 64
        %v3235 = vpop.permute.xlu0 %3234
        %3236 = vrot.lane.b32.xlu0 %v2343, 64
        %v3237 = vpop.permute.xlu0 %3236
        %3238 = vrot.lane.b32.xlu0 %v2358, 64
        %v3239 = vpop.permute.xlu0 %3238
        %3240 = vrot.lane.b32.xlu0 %v2373, 64
        %v3241 = vpop.permute.xlu0 %3240
        %3242 = vrot.lane.b32.xlu0 %v2388, 64
        %v3243 = vpop.permute.xlu0 %3242
        %3244 = vrot.lane.b32.xlu0 %v2403, 64
        %v3245 = vpop.permute.xlu0 %3244
        %3246 = vrot.lane.b32.xlu0 %v2418, 64
        %v3247 = vpop.permute.xlu0 %3246
        %3248 = vrot.lane.b32.xlu0 %v2433, 64
        %v3249 = vpop.permute.xlu0 %3248
        %3250 = vrot.lane.b32.xlu0 %v2448, 64
        %v3251 = vpop.permute.xlu0 %3250
        %3252 = vrot.lane.b32.xlu0 %v2463, 64
        %v3253 = vpop.permute.xlu0 %3252
        %3254 = vrot.lane.b32.xlu0 %v2478, 64
        %v3255 = vpop.permute.xlu0 %3254
        %3256 = vrot.lane.b32.xlu0 %v2493, 64
        %v3257 = vpop.permute.xlu0 %3256
        %3258 = vrot.lane.b32.xlu0 %v2508, 64
        %v3259 = vpop.permute.xlu0 %3258
        %3260 = vrot.lane.b32.xlu0 %v2523, 64
        %v3261 = vpop.permute.xlu0 %3260
        %3262 = vrot.lane.b32.xlu0 %v2538, 64
        %v3263 = vpop.permute.xlu0 %3262
        %3264 = vrot.lane.b32.xlu0 %v2553, 64
        %v3265 = vpop.permute.xlu0 %3264
        %3266 = vrot.lane.b32.xlu0 %v2568, 64
        %v3267 = vpop.permute.xlu0 %3266
        %3268 = vrot.lane.b32.xlu0 %v2583, 64
        %v3269 = vpop.permute.xlu0 %3268
        %3270 = vrot.lane.b32.xlu0 %v2598, 64
        %v3271 = vpop.permute.xlu0 %3270
        %3272 = vrot.lane.b32.xlu0 %v2613, 64
        %v3273 = vpop.permute.xlu0 %3272
        %3274 = vrot.lane.b32.xlu0 %v2628, 64
        %v3275 = vpop.permute.xlu0 %3274
        %3276 = vrot.lane.b32.xlu0 %v2643, 64
        %v3277 = vpop.permute.xlu0 %3276
        %3278 = vrot.lane.b32.xlu0 %v2658, 64
        %v3279 = vpop.permute.xlu0 %3278
        %3280 = vrot.lane.b32.xlu0 %v2673, 64
        %v3281 = vpop.permute.xlu0 %3280
        %3282 = vrot.lane.b32.xlu0 %v2688, 64
        %v3283 = vpop.permute.xlu0 %3282
        %3284 = vrot.lane.b32.xlu0 %v2703, 64
        %v3285 = vpop.permute.xlu0 %3284
        %3286 = vrot.lane.b32.xlu0 %v2718, 64
        %v3287 = vpop.permute.xlu0 %3286
        %3288 = vrot.lane.b32.xlu0 %v2733, 64
        %v3289 = vpop.permute.xlu0 %3288
        %3290 = vrot.lane.b32.xlu0 %v2748, 64
        %v3291 = vpop.permute.xlu0 %3290
        %3292 = vrot.lane.b32.xlu0 %v2763, 64
        %v3293 = vpop.permute.xlu0 %3292
        %3294 = vrot.lane.b32.xlu0 %v2778, 64
        %v3295 = vpop.permute.xlu0 %3294
        %3296 = vrot.lane.b32.xlu0 %v2793, 64
        %v3297 = vpop.permute.xlu0 %3296
        %3298 = vrot.lane.b32.xlu0 %v2808, 64
        %v3299 = vpop.permute.xlu0 %3298
        %3300 = vrot.lane.b32.xlu0 %v2823, 64
        %v3301 = vpop.permute.xlu0 %3300
        %3302 = vrot.lane.b32.xlu0 %v2838, 64
        %v3303 = vpop.permute.xlu0 %3302
        %3304 = vrot.lane.b32.xlu0 %v2853, 64
        %v3305 = vpop.permute.xlu0 %3304
        %3306 = vrot.lane.b32.xlu0 %v2868, 64
        %v3307 = vpop.permute.xlu0 %3306
        %3308 = vrot.lane.b32.xlu0 %v2883, 64
        %v3309 = vpop.permute.xlu0 %3308
        %3310 = vrot.lane.b32.xlu0 %v2898, 64
        %v3311 = vpop.permute.xlu0 %3310
        %3312 = vrot.lane.b32.xlu0 %v2913, 64
        %v3313 = vpop.permute.xlu0 %3312
        %3314 = vrot.lane.b32.xlu0 %v2928, 64
        %v3315 = vpop.permute.xlu0 %3314
        %3316 = vrot.lane.b32.xlu0 %v2943, 64
        %v3317 = vpop.permute.xlu0 %3316
        %3318 = vrot.lane.b32.xlu0 %v2958, 64
        %v3319 = vpop.permute.xlu0 %3318
        %3320 = vrot.lane.b32.xlu0 %v2973, 64
        %v3321 = vpop.permute.xlu0 %3320
        %3322 = vrot.lane.b32.xlu0 %v2988, 64
        %v3323 = vpop.permute.xlu0 %3322
        %3324 = vrot.lane.b32.xlu0 %v3003, 64
        %v3325 = vpop.permute.xlu0 %3324
        %3326 = vrot.lane.b32.xlu0 %v3018, 64
        %v3327 = vpop.permute.xlu0 %3326
        %3328 = vrot.lane.b32.xlu0 %v3033, 64
        %v3329 = vpop.permute.xlu0 %3328
        %3330 = vrot.lane.b32.xlu0 %v3048, 64
        %v3331 = vpop.permute.xlu0 %3330
        %3332 = vrot.lane.b32.xlu0 %v3063, 64
        %v3333 = vpop.permute.xlu0 %3332
        %3334 = vrot.lane.b32.xlu0 %v3078, 64
        %v3335 = vpop.permute.xlu0 %3334
        %3336 = vrot.lane.b32.xlu0 %v3093, 64
        %v3337 = vpop.permute.xlu0 %3336
        %3338 = vrot.lane.b32.xlu0 %v3108, 64
        %v3339 = vpop.permute.xlu0 %3338
        %3340 = vrot.lane.b32.xlu0 %v3123, 64
        %v3341 = vpop.permute.xlu0 %3340
        %3342 = vrot.lane.b32.xlu0 %v3138, 64
        %v3343 = vpop.permute.xlu0 %3342
        %3344 = vrot.lane.b32.xlu0 %v3153, 64
        %v3345 = vpop.permute.xlu0 %3344
        %v3410 = vmul.f32 %v1874, %v3219
        %v3411 = vmul.f32 %v1875, %v3221
        %v3412 = vmul.f32 %v1876, %v3223
        %v3413 = vmul.f32 %v1877, %v3225
        %v3414 = vmul.f32 %v1878, %v3227
        %v3415 = vmul.f32 %v1879, %v3229
        %v3416 = vmul.f32 %v1880, %v3231
        %v3417 = vmul.f32 %v1881, %v3233
        %v3418 = vmul.f32 %v1882, %v3235
        %v3419 = vmul.f32 %v1883, %v3237
        %v3420 = vmul.f32 %v1884, %v3239
        %v3421 = vmul.f32 %v1885, %v3241
        %v3422 = vmul.f32 %v1886, %v3243
        %v3423 = vmul.f32 %v1887, %v3245
        %v3424 = vmul.f32 %v1888, %v3247
        %v3425 = vmul.f32 %v1889, %v3249
        %v3426 = vmul.f32 %v1890, %v3251
        %v3427 = vmul.f32 %v1891, %v3253
        %v3428 = vmul.f32 %v1892, %v3255
        %v3429 = vmul.f32 %v1893, %v3257
        %v3430 = vmul.f32 %v1894, %v3259
        %v3431 = vmul.f32 %v1895, %v3261
        %v3432 = vmul.f32 %v1896, %v3263
        %v3433 = vmul.f32 %v1897, %v3265
        %v3434 = vmul.f32 %v1898, %v3267
        %v3435 = vmul.f32 %v1899, %v3269
        %v3436 = vmul.f32 %v1900, %v3271
        %v3437 = vmul.f32 %v1901, %v3273
        %v3438 = vmul.f32 %v1902, %v3275
        %v3439 = vmul.f32 %v1903, %v3277
        %v3440 = vmul.f32 %v1904, %v3279
        %v3441 = vmul.f32 %v1905, %v3281
        %v3442 = vmul.f32 %v1906, %v3283
        %v3443 = vmul.f32 %v1907, %v3285
        %v3444 = vmul.f32 %v1908, %v3287
        %v3445 = vmul.f32 %v1909, %v3289
        %v3446 = vmul.f32 %v1910, %v3291
        %v3447 = vmul.f32 %v1911, %v3293
        %v3448 = vmul.f32 %v1912, %v3295
        %v3449 = vmul.f32 %v1913, %v3297
        %v3450 = vmul.f32 %v1914, %v3299
        %v3451 = vmul.f32 %v1915, %v3301
        %v3452 = vmul.f32 %v1916, %v3303
        %v3453 = vmul.f32 %v1917, %v3305
        %v3454 = vmul.f32 %v1918, %v3307
        %v3455 = vmul.f32 %v1919, %v3309
        %v3456 = vmul.f32 %v1920, %v3311
        %v3457 = vmul.f32 %v1921, %v3313
        %v3458 = vmul.f32 %v1922, %v3315
        %v3459 = vmul.f32 %v1923, %v3317
        %v3460 = vmul.f32 %v1924, %v3319
        %v3461 = vmul.f32 %v1925, %v3321
        %v3462 = vmul.f32 %v1926, %v3323
        %v3463 = vmul.f32 %v1927, %v3325
        %v3464 = vmul.f32 %v1928, %v3327
        %v3465 = vmul.f32 %v1929, %v3329
        %v3466 = vmul.f32 %v1930, %v3331
        %v3467 = vmul.f32 %v1931, %v3333
        %v3468 = vmul.f32 %v1932, %v3335
        %v3469 = vmul.f32 %v1933, %v3337
        %v3470 = vmul.f32 %v1934, %v3339
        %v3471 = vmul.f32 %v1935, %v3341
        %v3472 = vmul.f32 %v1936, %v3343
        %v3473 = vmul.f32 %v1937, %v3345
        %v3474 = vpack.c.bf16 %v3411, %v3410
        %v3475 = vpack.c.bf16 %v3413, %v3412
        %v3476 = vpack.c.bf16 %v3415, %v3414
        %v3477 = vpack.c.bf16 %v3417, %v3416
        %v3478 = vpack.c.bf16 %v3419, %v3418
        %v3479 = vpack.c.bf16 %v3421, %v3420
        %v3480 = vpack.c.bf16 %v3423, %v3422
        %v3481 = vpack.c.bf16 %v3425, %v3424
        %v3482 = vpack.c.bf16 %v3427, %v3426
        %v3483 = vpack.c.bf16 %v3429, %v3428
        %v3484 = vpack.c.bf16 %v3431, %v3430
        %v3485 = vpack.c.bf16 %v3433, %v3432
        %v3486 = vpack.c.bf16 %v3435, %v3434
        %v3487 = vpack.c.bf16 %v3437, %v3436
        %v3488 = vpack.c.bf16 %v3439, %v3438
        %v3489 = vpack.c.bf16 %v3441, %v3440
        %v3490 = vpack.c.bf16 %v3443, %v3442
        %v3491 = vpack.c.bf16 %v3445, %v3444
        %v3492 = vpack.c.bf16 %v3447, %v3446
        %v3493 = vpack.c.bf16 %v3449, %v3448
        %v3494 = vpack.c.bf16 %v3451, %v3450
        %v3495 = vpack.c.bf16 %v3453, %v3452
        %v3496 = vpack.c.bf16 %v3455, %v3454
        %v3497 = vpack.c.bf16 %v3457, %v3456
        %v3498 = vpack.c.bf16 %v3459, %v3458
        %v3499 = vpack.c.bf16 %v3461, %v3460
        %v3500 = vpack.c.bf16 %v3463, %v3462
        %v3501 = vpack.c.bf16 %v3465, %v3464
        %v3502 = vpack.c.bf16 %v3467, %v3466
        %v3503 = vpack.c.bf16 %v3469, %v3468
        %v3504 = vpack.c.bf16 %v3471, %v3470
        %v3505 = vpack.c.bf16 %v3473, %v3472
        %v3506 = vld [vmem:[%s5] sm:$0x1]
        %v3507 = vld [vmem:[%s6] sm:$0x3]
        %3509 = vset.pattern.permute.xlu0 0
        %3510 = vperm.xlu0 %3509, %v3507
        %v3511 = vpop.permute.xlu0 %3510
        %vm3513 = vcmask 523264
        %v3515 = vsel %vm3513, %v3506, 0
        %v3518 = vsel %vm3513, %v3474, 0
        %v3521 = vsel %vm3513, %v3475, 0
        %v3524 = vsel %vm3513, %v3476, 0
        %v3527 = vsel %vm3513, %v3477, 0
        %v3530 = vsel %vm3513, %v3478, 0
        %v3533 = vsel %vm3513, %v3479, 0
        %v3536 = vsel %vm3513, %v3480, 0
        %v3539 = vsel %vm3513, %v3481, 0
        %v3542 = vsel %vm3513, %v3482, 0
        %v3545 = vsel %vm3513, %v3483, 0
        %v3548 = vsel %vm3513, %v3484, 0
        %v3551 = vsel %vm3513, %v3485, 0
        %v3554 = vsel %vm3513, %v3486, 0
        %v3557 = vsel %vm3513, %v3487, 0
        %v3560 = vsel %vm3513, %v3488, 0
        %v3563 = vsel %vm3513, %v3489, 0
        %v3566 = vsel %vm3513, %v3490, 0
        %v3569 = vsel %vm3513, %v3491, 0
        %v3572 = vsel %vm3513, %v3492, 0
        %v3575 = vsel %vm3513, %v3493, 0
        %v3578 = vsel %vm3513, %v3494, 0
        %v3581 = vsel %vm3513, %v3495, 0
        %v3584 = vsel %vm3513, %v3496, 0
        %v3587 = vsel %vm3513, %v3497, 0
        %v3590 = vsel %vm3513, %v3498, 0
        %v3593 = vsel %vm3513, %v3499, 0
        %v3596 = vsel %vm3513, %v3500, 0
        %v3599 = vsel %vm3513, %v3501, 0
        %v3602 = vsel %vm3513, %v3502, 0
        %v3605 = vsel %vm3513, %v3503, 0
        %v3608 = vsel %vm3513, %v3504, 0
        %v3611 = vsel %vm3513, %v3505, 0
        %3613 = vmatpush.bf16.xpose.msra.mxu0 %v3539
        %3614 = vmatpush.bf16.xpose.msra.mxu0 %v3536
        %3615 = vmatpush.bf16.xpose.msra.mxu0 %v3533
        %3616 = vmatpush.bf16.xpose.msra.mxu0 %v3530
        %3617 = vmatpush.bf16.xpose.msra.mxu0 %v3527
        %3618 = vmatpush.bf16.xpose.msra.mxu0 %v3524
        %3619 = vmatpush.bf16.xpose.msra.mxu0 %v3521
        %3620 = vmatpush.bf16.xpose.msra.mxu0 %v3518
        %3621 = vmatmul.bf16.gmra.mxu0 %v3515
        %v3622 = vpop.f32.mrf.mxu0
        %v3623 = vadd.f32 %v3511, %v3622
        %v3624 = vpop.f32.mrf.mxu0
        %3625 = vdwg.mxu0
        %3626 = vmatpush.bf16.xpose.msra.mxu0 %v3563
        %3627 = vmatpush.bf16.xpose.msra.mxu0 %v3560
        %3628 = vmatpush.bf16.xpose.msra.mxu0 %v3557
        %3629 = vmatpush.bf16.xpose.msra.mxu0 %v3554
        %3630 = vmatpush.bf16.xpose.msra.mxu0 %v3551
        %3631 = vmatpush.bf16.xpose.msra.mxu0 %v3548
        %3632 = vmatpush.bf16.xpose.msra.mxu0 %v3545
        %3633 = vmatpush.bf16.xpose.msra.mxu0 %v3542
        %3634 = vmatmul.bf16.gmra.mxu0 %v3515
        %v3635 = vpop.f32.mrf.mxu0
        %v3636 = vadd.f32 %v3511, %v3635
        %v3637 = vpop.f32.mrf.mxu0
        %3638 = vdwg.mxu0
        %3639 = vmatpush.bf16.xpose.msra.mxu0 %v3587
        %3640 = vmatpush.bf16.xpose.msra.mxu0 %v3584
        %3641 = vmatpush.bf16.xpose.msra.mxu0 %v3581
        %3642 = vmatpush.bf16.xpose.msra.mxu0 %v3578
        %3643 = vmatpush.bf16.xpose.msra.mxu0 %v3575
        %3644 = vmatpush.bf16.xpose.msra.mxu0 %v3572
        %3645 = vmatpush.bf16.xpose.msra.mxu0 %v3569
        %3646 = vmatpush.bf16.xpose.msra.mxu0 %v3566
        %3647 = vmatmul.bf16.gmra.mxu0 %v3515
        %v3648 = vpop.f32.mrf.mxu0
        %v3649 = vadd.f32 %v3511, %v3648
        %v3650 = vpop.f32.mrf.mxu0
        %3651 = vdwg.mxu0
        %3652 = vmatpush.bf16.xpose.msra.mxu0 %v3611
        %3653 = vmatpush.bf16.xpose.msra.mxu0 %v3608
        %3654 = vmatpush.bf16.xpose.msra.mxu0 %v3605
        %3655 = vmatpush.bf16.xpose.msra.mxu0 %v3602
        %3656 = vmatpush.bf16.xpose.msra.mxu0 %v3599
        %3657 = vmatpush.bf16.xpose.msra.mxu0 %v3596
        %3658 = vmatpush.bf16.xpose.msra.mxu0 %v3593
        %3659 = vmatpush.bf16.xpose.msra.mxu0 %v3590
        %3660 = vmatmul.bf16.gmra.mxu0 %v3515
        %v3661 = vpop.f32.mrf.mxu0
        %v3662 = vadd.f32 %v3511, %v3661
        %v3663 = vpop.f32.mrf.mxu0
        %3664 = vdwg.mxu0
        %v3669 = vrot.slane %v3636, 6
        %v3670 = vrot.slane %v3649, 4
        %v3671 = vrot.slane %v3662, 2
        %vm3672 = vcmask 1041408
        %v3673 = vsel %vm3672, %v3623, %v3669
        %vm3674 = vcmask 1045508
        %v3675 = vsel %vm3674, %v3670, %v3671
        %vm3676 = vcmask 1043456
        %v3677 = vsel %vm3676, %v3673, %v3675
        %3679 = vst [vmem:[%s446] sm:$0xff] %v3677
        %v3680 = vlaneseq
        %v3681 = vand.u32 %v3680, 127
        %v3682 = vadd.s32 %v3681, 128
        %v3683 = vadd.s32 %v3681, 256
        %v3684 = vadd.s32 %v3681, 384
        %v3685 = vadd.s32 %v558, %v3681
        %v3686 = vadd.s32 %v558, %v3682
        %v3687 = vadd.s32 %v558, %v3683
        %v3688 = vadd.s32 %v558, %v3684
        %vm3689 = vcmp.lt.s32.totalorder %v3685, 300
        %vm3690 = vcmp.lt.s32.totalorder %v3686, 300
        %vm3691 = vcmp.lt.s32.totalorder %v3687, 300
        %vm3692 = vcmp.lt.s32.totalorder %v3688, 300
        %v3693 = vld [vmem:[%s478] sm:$0x3]
        %v3694 = vsel %vm3689, %v3623, -inf
        %v3695 = vsel %vm3690, %v3636, -inf
        %v3696 = vsel %vm3691, %v3649, -inf
        %v3697 = vsel %vm3692, %v3662, -inf
        %v3698 = vsel %vm3672, %v3694, -inf
        %v3699 = vsel %vm3672, %v3695, -inf
        %v3700 = vsel %vm3672, %v3696, -inf
        %v3701 = vsel %vm3672, %v3697, -inf
        %v3702 = vmax.f32 %v3698, %v3699
        %v3703 = vmax.f32 %v3700, %v3701
        %v3704 = vmax.f32 %v3702, %v3703
        %3705 = vmax.xlane.f32.xlu0 %v3704
        %v3706 = vpop.xlane.xlu0 %3705
        %v3707 = vmax.f32 %v3693, %v3706
        %vm3708 = vcmp.gt.f32.partialorder %v3707, -inf
        %v3709 = vsub.f32 %v3693, %v3707
        %v3710 = vmul.f32 %v3709, 1.442695
        %v3711 = vpow.pop %v3710
        %v3712 = vsel %vm3708, %v3711, 0.0
        %3714 = vset.pattern.permute.xlu0 0
        %3715 = vperm.xlu0 %3714, %v3707
        %v3716 = vpop.permute.xlu0 %3715
        %v3718 = vsub.f32 %v3623, %v3716
        %v3719 = vsub.f32 %v3636, %v3716
        %v3720 = vsub.f32 %v3649, %v3716
        %v3721 = vsub.f32 %v3662, %v3716
        %v3722 = vmul.f32 %v3718, 1.442695
        %v3723 = vpow.pop %v3722
        %v3724 = vmul.f32 %v3719, 1.442695
        %v3725 = vpow.pop %v3724
        %v3726 = vmul.f32 %v3720, 1.442695
        %v3727 = vpow.pop %v3726
        %v3728 = vmul.f32 %v3721, 1.442695
        %v3729 = vpow.pop %v3728
        %v3730 = vsel %vm3689, %v3723, 0.0
        %v3731 = vsel %vm3690, %v3725, 0.0
        %v3732 = vsel %vm3691, %v3727, 0.0
        %v3733 = vsel %vm3692, %v3729, 0.0
        %v3734 = vld [vmem:[%s482] sm:$0x3]
        %v3735 = vmul.f32 %v3712, %v3734
        %v3736 = vsel %vm3672, %v3730, 0.0
        %v3737 = vsel %vm3672, %v3731, 0.0
        %v3738 = vadd.f32 %v3736, %v3737
        %v3739 = vsel %vm3672, %v3732, 0.0
        %v3740 = vadd.f32 %v3738, %v3739
        %v3741 = vsel %vm3672, %v3733, 0.0
        %v3742 = vadd.f32 %v3740, %v3741
        %3743 = vadd.xlane.f32.xlu0 %v3742
        %v3744 = vpop.xlane.xlu0 %3743
        %v3745 = vadd.f32 %v3735, %v3744
        %vm3746 = vcmask 1024
        %3747 = vst.msk [vmem:[%s482] sm:$0x3] %vm3746, %v3745
        %v3748 = vld [vmem:[%s465] sm:$0x3]
        %3750 = vset.pattern.permute.xlu0 0
        %3751 = vperm.xlu0 %3750, %v3712
        %v3752 = vpop.permute.xlu0 %3751
        %v3754 = vmul.f32 %v3752, %v3748
        %3755 = vmatpush.msra.mxu0 %v1556
        %3756 = vmatpush.msra.mxu0 %v1555
        %3757 = vmatpush.msra.mxu0 %v1554
        %3758 = vmatpush.msra.mxu0 %v1553
        %3759 = vmatpush.msra.mxu0 %v1552
        %3760 = vmatpush.msra.mxu0 %v1551
        %3761 = vmatpush.msra.mxu0 %v1550
        %3762 = vmatpush.msra.mxu0 %v1549
        %3763 = vmatpush.msra.mxu0 %v1548
        %3764 = vmatpush.msra.mxu0 %v1547
        %3765 = vmatpush.msra.mxu0 %v1546
        %3766 = vmatpush.msra.mxu0 %v1545
        %3767 = vmatpush.msra.mxu0 %v1544
        %3768 = vmatpush.msra.mxu0 %v1543
        %3769 = vmatpush.msra.mxu0 %v1542
        %3770 = vmatpush.msra.mxu0 %v1541
        %3771 = vmatmul.f32.gmra.mxu0 %v3730
        %v3772 = vpop.f32.mrf.mxu0
        %v3773 = vadd.f32 0.0, %v3772
        %3774 = vdwg.mxu0
        %3775 = vmatpush.msra.mxu0 %v1572
        %3776 = vmatpush.msra.mxu0 %v1571
        %3777 = vmatpush.msra.mxu0 %v1570
        %3778 = vmatpush.msra.mxu0 %v1569
        %3779 = vmatpush.msra.mxu0 %v1568
        %3780 = vmatpush.msra.mxu0 %v1567
        %3781 = vmatpush.msra.mxu0 %v1566
        %3782 = vmatpush.msra.mxu0 %v1565
        %3783 = vmatpush.msra.mxu0 %v1564
        %3784 = vmatpush.msra.mxu0 %v1563
        %3785 = vmatpush.msra.mxu0 %v1562
        %3786 = vmatpush.msra.mxu0 %v1561
        %3787 = vmatpush.msra.mxu0 %v1560
        %3788 = vmatpush.msra.mxu0 %v1559
        %3789 = vmatpush.msra.mxu0 %v1558
        %3790 = vmatpush.msra.mxu0 %v1557
        %3791 = vmatmul.f32.gmra.mxu0 %v3731
        %v3792 = vpop.f32.mrf.mxu0
        %v3793 = vadd.f32 %v3773, %v3792
        %3794 = vdwg.mxu0
        %3795 = vmatpush.msra.mxu0 %v1588
        %3796 = vmatpush.msra.mxu0 %v1587
        %3797 = vmatpush.msra.mxu0 %v1586
        %3798 = vmatpush.msra.mxu0 %v1585
        %3799 = vmatpush.msra.mxu0 %v1584
        %3800 = vmatpush.msra.mxu0 %v1583
        %3801 = vmatpush.msra.mxu0 %v1582
        %3802 = vmatpush.msra.mxu0 %v1581
        %3803 = vmatpush.msra.mxu0 %v1580
        %3804 = vmatpush.msra.mxu0 %v1579
        %3805 = vmatpush.msra.mxu0 %v1578
        %3806 = vmatpush.msra.mxu0 %v1577
        %3807 = vmatpush.msra.mxu0 %v1576
        %3808 = vmatpush.msra.mxu0 %v1575
        %3809 = vmatpush.msra.mxu0 %v1574
        %3810 = vmatpush.msra.mxu0 %v1573
        %3811 = vmatmul.f32.gmra.mxu0 %v3732
        %v3812 = vpop.f32.mrf.mxu0
        %v3813 = vadd.f32 %v3793, %v3812
        %3814 = vdwg.mxu0
        %3815 = vmatpush.msra.mxu0 %v1604
        %3816 = vmatpush.msra.mxu0 %v1603
        %3817 = vmatpush.msra.mxu0 %v1602
        %3818 = vmatpush.msra.mxu0 %v1601
        %3819 = vmatpush.msra.mxu0 %v1600
        %3820 = vmatpush.msra.mxu0 %v1599
        %3821 = vmatpush.msra.mxu0 %v1598
        %3822 = vmatpush.msra.mxu0 %v1597
        %3823 = vmatpush.msra.mxu0 %v1596
        %3824 = vmatpush.msra.mxu0 %v1595
        %3825 = vmatpush.msra.mxu0 %v1594
        %3826 = vmatpush.msra.mxu0 %v1593
        %3827 = vmatpush.msra.mxu0 %v1592
        %3828 = vmatpush.msra.mxu0 %v1591
        %3829 = vmatpush.msra.mxu0 %v1590
        %3830 = vmatpush.msra.mxu0 %v1589
        %3831 = vmatmul.f32.gmra.mxu0 %v3733
        %v3832 = vpop.f32.mrf.mxu0
        %v3833 = vadd.f32 %v3813, %v3832
        %3834 = vdwg.mxu0
        %v3835 = vadd.f32 %v3754, %v3833
        %3836 = vst [vmem:[%s465] sm:$0x3] %v3835
        %3837 = vst.msk [vmem:[%s478] sm:$0x3] %vm3746, %v3707
        %s3838 = sand.u32 %s212, 1
        %s3839 = scalar_lea.sflag [#allocation4], %s3838
        %s3840 = sand.u32 %s212, 1
        %s3841 = smul.addr %s3840, 8
        %s3842 = scalar_lea.vmem [#allocation8], %s3841
        %p3843 = scmp.lt.s32.totalorder %s36, 1
        %s3844 = scalar_select %p3843, %s36, 1
        %s3845 = smul.addr %s3844, 2
        %s3846 = scalar_lea.vmem %s8, %s3845
        %p3847 = scmp.lt.s32.totalorder %s36, 1
        %s3848 = scalar_select %p3847, %s36, 1
        %s3849 = smul.addr %s3848, 2
        %s3850 = scalar_lea.vmem %s9, %s3849
        %s3851 = sand.u32 %s290, 1
        %s3852 = scalar_lea.sflag [#allocation10], %s3851
        %s3853 = sand.u32 %s290, 1
        %s3854 = smul.addr %s3853, 2
        %s3855 = scalar_lea.vmem [#allocation9], %s3854
        // Predicated region
        $region65: #{tpu_custom_call.1} parent=47 // pred_check
          %p3856 = pneg %p222
        $region66: #{tpu_custom_call.1} parent=47 // pred_check_branch
          %3858 = sbr.rel (%p3856) target = $region68
        $region67: #{tpu_custom_call.1} parent=47 // pred_region
          %s3859 = sadd.s32 %s36, %s37
          %s3860 = smul.u32 4, %s3859
          %3862 = vsyncadd %s3839, 0
          %s3863 = smul.addr %s3860, 2
          %s3864 = scalar_lea.hbm %s7, %s3863
          %s3866 = sshll.u32 %s3842, 4
          %s3867 = int_to_ptr.vmem [resolvable:$true] %s3866
          %s3868 = sshll.u32 %s3864, 4
          %s3869 = int_to_ptr.hbm [resolvable:$true] %s3868
          %3871 = dma.vmem_to_hbm [thread:$0]  %s3867, 128, %s3869, %s3839
        $region68: #{tpu_custom_call.1} parent=47 // pred_fallthru
          _
        // Predicated region
        $region69: #{tpu_custom_call.1} parent=47 // pred_check
          %p3872 = pneg %p248
        $region70: #{tpu_custom_call.1} parent=47 // pred_check_branch
          %3874 = sbr.rel (%p3872) target = $region72
        $region71: #{tpu_custom_call.1} parent=47 // pred_region
          _
        $region72: #{tpu_custom_call.1} parent=47 // pred_fallthru
          _
        // Predicated region
        $region73: #{tpu_custom_call.1} parent=47 // pred_check
          %p3875 = pneg %p274
        $region74: #{tpu_custom_call.1} parent=47 // pred_check_branch
          %3877 = sbr.rel (%p3875) target = $region76
        $region75: #{tpu_custom_call.1} parent=47 // pred_region
          _
        $region76: #{tpu_custom_call.1} parent=47 // pred_fallthru
          _
        // Predicated region
        $region77: #{tpu_custom_call.1} parent=47 // pred_check
          %p3878 = pneg %p300
        $region78: #{tpu_custom_call.1} parent=47 // pred_check_branch
          %3880 = sbr.rel (%p3878) target = $region80
        $region79: #{tpu_custom_call.1} parent=47 // pred_region
          %3882 = vsyncadd %s3852, 0
          %s3883 = smul.addr %s36, 2
          %s3884 = scalar_lea.hbm %s10, %s3883
          %s3886 = sshll.u32 %s3855, 4
          %s3887 = int_to_ptr.vmem [resolvable:$true] %s3886
          %s3888 = sshll.u32 %s3884, 4
          %s3889 = int_to_ptr.hbm [resolvable:$true] %s3888
          %3891 = dma.vmem_to_hbm [thread:$0]  %s3887, 32, %s3889, %s3852
        $region80: #{tpu_custom_call.1} parent=47 // pred_fallthru
          _
      $region48: #{tpu_custom_call.1} parent=5 // pred_fallthru
        _
      %p3892 = scmp.le.s32.totalorder 2, %s27
      // Predicated region
      $region81: #{tpu_custom_call.1} parent=5 // pred_check
        %p3893 = pneg %p3892
      $region82: #{tpu_custom_call.1} parent=5 // pred_check_branch
        %3895 = sbr.rel (%p3893) target = $region84
      $region83: #{tpu_custom_call.1} parent=5 // pred_region
        %s3896 = ssub.s32 %s27, 2
        // Predicated region
        $region85: #{tpu_custom_call.1} parent=83 // pred_check
          %p3897 = pneg %p228
        $region86: #{tpu_custom_call.1} parent=83 // pred_check_branch
          %3899 = sbr.rel (%p3897) target = $region88
        $region87: #{tpu_custom_call.1} parent=83 // pred_region
          %s3900 = sand.u32 %s213, 1
          %s3901 = scalar_lea.sflag [#allocation4], %s3900
          %s3902 = sand.u32 %s213, 1
          %s3903 = smul.addr %s3902, 8
          %s3904 = scalar_lea.vmem [#allocation8], %s3903
          %3906 = dma.done %s3901, 128
        $region88: #{tpu_custom_call.1} parent=83 // pred_fallthru
          _
        // Predicated region
        $region89: #{tpu_custom_call.1} parent=83 // pred_check
          %p3907 = pneg %p254
        $region90: #{tpu_custom_call.1} parent=83 // pred_check_branch
          %3909 = sbr.rel (%p3907) target = $region92
        $region91: #{tpu_custom_call.1} parent=83 // pred_region
          %p3910 = scmp.lt.s32.totalorder %s38, 1
          %s3911 = scalar_select %p3910, %s38, 1
          %s3912 = smul.addr %s3911, 2
          %s3913 = scalar_lea.vmem %s8, %s3912
        $region92: #{tpu_custom_call.1} parent=83 // pred_fallthru
          _
        // Predicated region
        $region93: #{tpu_custom_call.1} parent=83 // pred_check
          %p3914 = pneg %p280
        $region94: #{tpu_custom_call.1} parent=83 // pred_check_branch
          %3916 = sbr.rel (%p3914) target = $region96
        $region95: #{tpu_custom_call.1} parent=83 // pred_region
          %p3917 = scmp.lt.s32.totalorder %s38, 1
          %s3918 = scalar_select %p3917, %s38, 1
          %s3919 = smul.addr %s3918, 2
          %s3920 = scalar_lea.vmem %s9, %s3919
        $region96: #{tpu_custom_call.1} parent=83 // pred_fallthru
          _
        // Predicated region
        $region97: #{tpu_custom_call.1} parent=83 // pred_check
          %p3921 = pneg %p306
        $region98: #{tpu_custom_call.1} parent=83 // pred_check_branch
          %3923 = sbr.rel (%p3921) target = $region100
        $region99: #{tpu_custom_call.1} parent=83 // pred_region
          %s3924 = sand.u32 %s291, 1
          %s3925 = scalar_lea.sflag [#allocation10], %s3924
          %s3926 = sand.u32 %s291, 1
          %s3927 = smul.addr %s3926, 2
          %s3928 = scalar_lea.vmem [#allocation9], %s3927
          %3930 = dma.done %s3925, 32
        $region100: #{tpu_custom_call.1} parent=83 // pred_fallthru
          _
      $region84: #{tpu_custom_call.1} parent=5 // pred_fallthru
        _
    $region6: #{tpu_custom_call.1} parent=1 // loop_footer
      %s31 = sadd.s32 1, %s27
    $region7: #{tpu_custom_call.1} parent=1 // loop_footer_branch
      %26 = sbr.rel target = $region3
    $region8: #{tpu_custom_call.1} parent=1 // loop_exit
      _
    %3931 = vsyncpa [#allocation3], 1
    %s3932 = scalar_lea.sflag [#allocation3], 1
    %3933 = vsyncpa %s3932, 1
    %3934 = vsyncpa [#allocation6], 1
    %3935 = vsyncpa [#allocation4], 1
    %s3936 = scalar_lea.sflag [#allocation4], 1
    %3937 = vsyncpa %s3936, 1
    %3938 = vsyncpa [#allocation10], 1
    %s3939 = scalar_lea.sflag [#allocation10], 1
    %3940 = vsyncpa %s3939, 1

</llo_original>
